<compile_context>
chip_gen: v7x
topology: tpu7x:2x2x1
jax: 0.10.0
libtpu: 0.0.40
codegen_flags: <defaults>
</compile_context>

<pallas_src>
import functools

import jax
import jax.numpy as jnp
from jax.experimental import pallas as pl
from jax.experimental.pallas import tpu as pltpu


# ---------------------------------------------------------------------------
# Pallas kernels
# ---------------------------------------------------------------------------

def _gemm_fused_kernel(*refs, relu, has_res):
    """(tm,K) @ (K,tn) on the MXU (bf16 operands, f32 accumulation) with a fused
    bias / residual-add / ReLU epilogue in f32 before the single store."""
    if has_res:
        a_ref, b_ref, bias_ref, res_ref, o_ref = refs
    else:
        a_ref, b_ref, bias_ref, o_ref = refs
        res_ref = None
    y = jnp.dot(a_ref[...], b_ref[...], preferred_element_type=jnp.float32)
    y = y + bias_ref[...]
    if res_ref is not None:
        y = y + res_ref[...]
    if relu:
        y = jnp.maximum(y, 0.0)
    o_ref[...] = y.astype(o_ref.dtype)


def _head_kernel(x_ref, sw_ref, sb_ref, lw_ref, lb_ref, g_ref, beta_ref, o_ref):
    """SpatialLearnedEmbeddings + bottleneck, fused.

    mean(conv1x1(x)) == conv1x1(mean(x)), so reduce over H*W first (lane-dense
    C=128), then two small matmuls + LayerNorm(eps=1e-5) + Tanh, all in f32.
    """
    pooled = jnp.mean(x_ref[...], axis=1)                               # (N, C)
    feat = jnp.dot(pooled, sw_ref[...],
                   preferred_element_type=jnp.float32) + sb_ref[...]    # (N, Fp)
    # TODO(synk): Dropout(0.1) is identity (eval mode).
    h = jnp.dot(feat, lw_ref[...],
                preferred_element_type=jnp.float32) + lb_ref[...]       # (N, D)
    mu = jnp.mean(h, axis=-1, keepdims=True)
    var = jnp.mean((h - mu) ** 2, axis=-1, keepdims=True)
    y = (h - mu) * jax.lax.rsqrt(var + 1e-5)
    o_ref[...] = jnp.tanh(y * g_ref[...] + beta_ref[...])


# ---------------------------------------------------------------------------
# Wrappers
# ---------------------------------------------------------------------------

def _round_up(x, m):
    return ((x + m - 1) // m) * m


def gemm_fused(a, b, bias, res, relu):
    """a:(M,K) bf16 @ b:(K,N) bf16 + bias (+ res) (+ ReLU), f32 out.

    Whole-K single block; tm/tn sized to the real problem so each conv is a
    handful of grid steps at most.
    """
    M, K = a.shape
    K2, Nc = b.shape
    assert K == K2
    tm = min(128, _round_up(M, 16))          # bf16 sublane packing = 16
    tn = min(256, _round_up(Nc, 128))
    tk = _round_up(K, 128)                   # whole K in one block
    Mp, Np, Kp = _round_up(M, tm), _round_up(Nc, tn), tk

    a_p = jnp.pad(a.astype(jnp.bfloat16), ((0, Mp - M), (0, Kp - K)))
    b_p = jnp.pad(b.astype(jnp.bfloat16), ((0, Kp - K), (0, Np - Nc)))
    bias_p = jnp.pad(bias.astype(jnp.float32).reshape(1, Nc),
                     ((0, 0), (0, Np - Nc)))

    inputs = [a_p, b_p, bias_p]
    in_specs = [
        pl.BlockSpec((tm, tk), lambda i, j: (i, 0)),
        pl.BlockSpec((tk, tn), lambda i, j: (0, j)),
        pl.BlockSpec((1, tn), lambda i, j: (0, j)),
    ]
    has_res = res is not None
    if has_res:
        res_p = jnp.pad(res.astype(jnp.float32), ((0, Mp - M), (0, Np - Nc)))
        inputs.append(res_p)
        in_specs.append(pl.BlockSpec((tm, tn), lambda i, j: (i, j)))

    out = pl.pallas_call(
        functools.partial(_gemm_fused_kernel, relu=relu, has_res=has_res),
        out_shape=jax.ShapeDtypeStruct((Mp, Np), jnp.float32),
        grid_spec=pltpu.PrefetchScalarGridSpec(
            num_scalar_prefetch=0,
            grid=(Mp // tm, Np // tn),
            in_specs=in_specs,
            out_specs=pl.BlockSpec((tm, tn), lambda i, j: (i, j)),
        ),
        compiler_params=pltpu.CompilerParams(
            dimension_semantics=("parallel", "parallel")),
    )(*inputs)
    return out[:M, :Nc]


def extract_patches(x, kh, kw, stride, pad):
    """x:(N,H,W,C) -> patches:(N,Ho,Wo,kh*kw*C) ordered (kh, kw, C)."""
    N, H, W, C = x.shape
    xp = jnp.pad(x, ((0, 0), (pad, pad), (pad, pad), (0, 0)))
    Ho = (H + 2 * pad - kh) // stride + 1
    Wo = (W + 2 * pad - kw) // stride + 1
    views = []
    for i in range(kh):
        for j in range(kw):
            views.append(xp[:, i:i + stride * Ho:stride,
                            j:j + stride * Wo:stride, :])
    return jnp.concatenate(views, axis=-1), Ho, Wo


def conv2d(x, w_mat, bias, *, kh, kw, stride, pad, relu, residual=None):
    """NHWC conv (with BN already folded into w_mat/bias) as one fused GEMM.

    w_mat is the pre-transposed (kh*kw*Cin, Cout) bf16 matrix from prepare_params.
    """
    N, H, W, C = x.shape
    cout = w_mat.shape[1]
    patches, Ho, Wo = extract_patches(x.astype(jnp.bfloat16), kh, kw, stride, pad)
    a = patches.reshape(N * Ho * Wo, kh * kw * C)
    res = None if residual is None else residual.reshape(N * Ho * Wo, cout)
    y = gemm_fused(a, w_mat, bias, res, relu)
    return y.reshape(N, Ho, Wo, cout)


def maxpool_3x3_s2(x):
    """MaxPool2d(kernel_size=3, stride=2, padding=1) on NHWC.

    Pure-XLA maximum tree over the 9 strided views (no stacked intermediate;
    purely memory-bound and trivially fused by XLA).
    """
    N, H, W, C = x.shape
    xp = jnp.pad(x, ((0, 0), (1, 1), (1, 1), (0, 0)),
                 constant_values=-jnp.inf)
    Ho = (H + 2 - 3) // 2 + 1
    Wo = (W + 2 - 3) // 2 + 1
    out = None
    for i in range(3):
        for j in range(3):
            v = xp[:, i:i + 2 * Ho:2, j:j + 2 * Wo:2, :]
            out = v if out is None else jnp.maximum(out, v)
    return out


def basic_block(x, p, stride):
    """torchvision BasicBlock with BN folded and residual+ReLU fused into the
    second conv's GEMM epilogue."""
    if "ds_w" in p:
        identity = conv2d(x, p["ds_w"], p["ds_b"],
                          kh=1, kw=1, stride=stride, pad=0, relu=False)
    else:
        identity = x
    out = conv2d(x, p["conv1_w"], p["conv1_b"],
                 kh=3, kw=3, stride=stride, pad=1, relu=True)
    out = conv2d(out, p["conv2_w"], p["conv2_b"],
                 kh=3, kw=3, stride=1, pad=1, relu=True, residual=identity)
    return out


def head(x, fp):
    """SpatialLearnedEmbeddings (1x1 conv + spatial mean) + Linear+LayerNorm+Tanh,
    in a single fused Pallas kernel."""
    N, H, W, C = x.shape
    x2 = x.reshape(N, H * W, C)
    D = fp["linear_b"].shape[1]
    return pl.pallas_call(
        _head_kernel,
        out_shape=jax.ShapeDtypeStruct((N, D), jnp.float32),
    )(x2, fp["spatial_w"], fp["spatial_b"], fp["linear_wT"],
      fp["linear_b"], fp["ln_gamma"], fp["ln_beta"])


@jax.jit
def resnet_encoder_forward(x_nchw, fparams):
    # layout: input NCHW -> NHWC internally (channels on the 128-lane axis).
    x = jnp.transpose(x_nchw, (0, 2, 3, 1)).astype(jnp.float32)
    x = conv2d(x, fparams["conv1_w"], fparams["conv1_b"],
               kh=7, kw=7, stride=2, pad=3, relu=True)      # 7x7/2 + BN + ReLU
    x = maxpool_3x3_s2(x)
    for blk in fparams["layer1"]:
        x = basic_block(x, blk, stride=1)
    x = basic_block(x, fparams["layer2"][0], stride=2)
    x = basic_block(x, fparams["layer2"][1], stride=1)
    return head(x, fparams)


# ---------------------------------------------------------------------------
# Parameter preparation: BN folding + weight pre-transpose (done once, outside
# the jitted forward).
# ---------------------------------------------------------------------------

def prepare_params(params, eps=1e-5):
    def fold(conv_w, bn):
        scale = bn["gamma"] * jax.lax.rsqrt(bn["var"] + eps)      # (Cout,)
        w = conv_w * scale[:, None, None, None]                   # (Cout,Cin,kh,kw)
        bias = bn["beta"] - bn["mean"] * scale
        cout = w.shape[0]
        w_mat = jnp.transpose(w, (2, 3, 1, 0)).reshape(-1, cout)  # (kh*kw*Cin, Cout)
        return w_mat.astype(jnp.bfloat16), bias.astype(jnp.float32)

    def block(p):
        q = {}
        q["conv1_w"], q["conv1_b"] = fold(p["conv1_w"], p["bn1"])
        q["conv2_w"], q["conv2_b"] = fold(p["conv2_w"], p["bn2"])
        if "ds_w" in p:
            q["ds_w"], q["ds_b"] = fold(p["ds_w"], p["ds_bn"])
        return q

    fp = {}
    fp["conv1_w"], fp["conv1_b"] = fold(params["conv1_w"], params["bn1"])
    fp["layer1"] = [block(b) for b in params["layer1"]]
    fp["layer2"] = [block(b) for b in params["layer2"]]

    # Head: keep f32 (tiny); zero-pad F (=8) to 128 so every in-kernel matmul is
    # lane-dense. The padded columns/rows are exact zeros -> no semantic change.
    F, C = params["spatial_w"].shape[0], params["spatial_w"].shape[1]
    D = params["linear_w"].shape[0]
    Fp = _round_up(F, 128)
    sw = params["spatial_w"].reshape(F, C).T.astype(jnp.float32)          # (C, F)
    fp["spatial_w"] = jnp.pad(sw, ((0, 0), (0, Fp - F)))                  # (C, Fp)
    fp["spatial_b"] = jnp.pad(
        params["spatial_b"].reshape(1, F).astype(jnp.float32),
        ((0, 0), (0, Fp - F)))                                            # (1, Fp)
    fp["linear_wT"] = jnp.pad(params["linear_w"].T.astype(jnp.float32),
                              ((0, Fp - F), (0, 0)))                      # (Fp, D)
    fp["linear_b"] = params["linear_b"].reshape(1, D).astype(jnp.float32)
    fp["ln_gamma"] = params["ln_gamma"].reshape(1, D).astype(jnp.float32)
    fp["ln_beta"] = params["ln_beta"].reshape(1, D).astype(jnp.float32)
    return fp


# ---------------------------------------------------------------------------
# Deterministic synthetic parameters (shapes follow resnet18 layer1/layer2)
# ---------------------------------------------------------------------------

def init_params(key, num_spatial_blocks=8, bottleneck_dim=256):
    keys = iter(jax.random.split(key, 128))

    def conv_w(cout, cin, k):
        fan = cin * k * k
        return jax.random.normal(next(keys), (cout, cin, k, k),
                                 jnp.float32) / jnp.sqrt(float(fan))

    def bn(c):
        return {
            "gamma": 1.0 + 0.05 * jax.random.normal(next(keys), (c,), jnp.float32),
            "beta": 0.05 * jax.random.normal(next(keys), (c,), jnp.float32),
            "mean": 0.05 * jax.random.normal(next(keys), (c,), jnp.float32),
            "var": 1.0 + 0.05 * jnp.abs(
                jax.random.normal(next(keys), (c,), jnp.float32)),
        }

    def block(cin, cout, downsample):
        p = {"conv1_w": conv_w(cout, cin, 3), "bn1": bn(cout),
             "conv2_w": conv_w(cout, cout, 3), "bn2": bn(cout)}
        if downsample:
            p["ds_w"] = conv_w(cout, cin, 1)
            p["ds_bn"] = bn(cout)
        return p

    return {
        "conv1_w": conv_w(64, 3, 7),
        "bn1": bn(64),
        "layer1": [block(64, 64, False), block(64, 64, False)],
        "layer2": [block(64, 128, True), block(128, 128, False)],
        "spatial_w": conv_w(num_spatial_blocks, 128, 1),
        "spatial_b": 0.05 * jax.random.normal(next(keys),
                                              (num_spatial_blocks,), jnp.float32),
        "linear_w": jax.random.normal(next(keys),
                                      (bottleneck_dim, num_spatial_blocks),
                                      jnp.float32) / jnp.sqrt(float(num_spatial_blocks)),
        "linear_b": 0.05 * jax.random.normal(next(keys),
                                             (bottleneck_dim,), jnp.float32),
        "ln_gamma": jnp.ones((bottleneck_dim,), jnp.float32),
        "ln_beta": jnp.zeros((bottleneck_dim,), jnp.float32),
    }


if __name__ == "__main__":
    key = jax.random.PRNGKey(0)
    pkey, xkey = jax.random.split(key)
    params = init_params(pkey)
    fparams = prepare_params(params)     # BN fold + weight prep, once, outside jit
    # Small input consistent with the module: NCHW, 3 channels, 32x32 spatial.
    x = jax.random.normal(xkey, (2, 3, 32, 32), jnp.float32)
    out = resnet_encoder_forward(x, fparams)
    jax.block_until_ready(out)
    assert out.shape == (2, 256), out.shape
    assert bool(jnp.all(jnp.isfinite(out)))
    print("KERNEL_OK")
</pallas_src>

<mosaic_0001>
module attributes {stable_mosaic.version = 11 : i64} {
  func.func @_gemm_fused_kernel(%arg0: i32, %arg1: i32, %arg2: memref<128x256xbf16, #tpu.memory_space<vmem>>, %arg3: memref<256x128xbf16, #tpu.memory_space<vmem>>, %arg4: memref<1x128xf32, #tpu.memory_space<vmem>>, %arg5: memref<128x128xf32, #tpu.memory_space<vmem>>) attributes {dimension_semantics = [#tpu.dimension_semantics<parallel>, #tpu.dimension_semantics<parallel>], iteration_bounds = array<i64: 4, 1>, scalar_prefetch = 0 : i64, scratch_operands = 0 : i64, tpu.core_type = #tpu.core_type<tc>, window_params = [{transform_indices = @transform_0, window_bounds = array<i64: 128, 256>}, {transform_indices = @transform_1, window_bounds = array<i64: 256, 128>}, {transform_indices = @transform_2, window_bounds = array<i64: 1, 128>}, {transform_indices = @transform_3, window_bounds = array<i64: 128, 128>}]} {
    %c0 = arith.constant 0 : index
    %c0_0 = arith.constant 0 : index
    %0 = vector.load %arg2[%c0, %c0_0] : memref<128x256xbf16, #tpu.memory_space<vmem>>, vector<128x256xbf16>
    %c0_1 = arith.constant 0 : index
    %c0_2 = arith.constant 0 : index
    %1 = vector.load %arg3[%c0_1, %c0_2] : memref<256x128xbf16, #tpu.memory_space<vmem>>, vector<256x128xbf16>
    %cst = arith.constant dense<0.000000e+00> : vector<128x128xf32>
    %2 = tpu.matmul %0, %1, %cst {dimension_numbers = #tpu.dot_dimension_numbers<[1], [0], [0], [1], [0, 0, 1, 1], [], []>} : vector<128x256xbf16>, vector<256x128xbf16>, vector<128x128xf32> -> vector<128x128xf32>
    %c0_3 = arith.constant 0 : index
    %c0_4 = arith.constant 0 : index
    %3 = vector.load %arg4[%c0_3, %c0_4] : memref<1x128xf32, #tpu.memory_space<vmem>>, vector<1x128xf32>
    %4 = vector.broadcast %3 : vector<1x128xf32> to vector<128x128xf32>
    %5 = arith.addf %2, %4 : vector<128x128xf32>
    %cst_5 = arith.constant 0.000000e+00 : f32
    %6 = vector.broadcast %cst_5 : f32 to vector<128x128xf32>
    %7 = arith.maximumf %5, %6 : vector<128x128xf32>
    %c0_6 = arith.constant 0 : index
    %c0_7 = arith.constant 0 : index
    %8 = vector.load %arg5[%c0_6, %c0_7] : memref<128x128xf32, #tpu.memory_space<vmem>>, vector<128x128xf32>
    tpu.vector_store %arg5[%c0_6, %c0_7], %7 {strides = array<i32>} : memref<128x128xf32, #tpu.memory_space<vmem>>, vector<128x128xf32>,
    return
  }
  func.func @transform_0(%arg0: i32, %arg1: i32) -> (i32, i32) {
    %c0_i32 = arith.constant 0 : i32
    %c0_i32_0 = arith.constant 0 : i32
    return %arg0, %c0_i32 : i32, i32
  }
  func.func @transform_1(%arg0: i32, %arg1: i32) -> (i32, i32) {
    %c0_i32 = arith.constant 0 : i32
    %c0_i32_0 = arith.constant 0 : i32
    return %c0_i32, %arg1 : i32, i32
  }
  func.func @transform_2(%arg0: i32, %arg1: i32) -> (i32, i32) {
    %c0_i32 = arith.constant 0 : i32
    %c0_i32_0 = arith.constant 0 : i32
    return %c0_i32, %arg1 : i32, i32
  }
  func.func @transform_3(%arg0: i32, %arg1: i32) -> (i32, i32) {
    %c0_i32 = arith.constant 0 : i32
    return %arg0, %arg1 : i32, i32
  }
}

module attributes {stable_mosaic.version = 11 : i64} {
  func.func @_gemm_fused_kernel(%arg0: i32, %arg1: i32, %arg2: memref<128x640xbf16, #tpu.memory_space<vmem>>, %arg3: memref<640x128xbf16, #tpu.memory_space<vmem>>, %arg4: memref<1x128xf32, #tpu.memory_space<vmem>>, %arg5: memref<128x128xf32, #tpu.memory_space<vmem>>) attributes {dimension_semantics = [#tpu.dimension_semantics<parallel>, #tpu.dimension_semantics<parallel>], iteration_bounds = array<i64: 1, 1>, scalar_prefetch = 0 : i64, scratch_operands = 0 : i64, tpu.core_type = #tpu.core_type<tc>, window_params = [{transform_indices = @transform_0, window_bounds = array<i64: 128, 640>}, {transform_indices = @transform_1, window_bounds = array<i64: 640, 128>}, {transform_indices = @transform_2, window_bounds = array<i64: 1, 128>}, {transform_indices = @transform_3, window_bounds = array<i64: 128, 128>}]} {
    %c0 = arith.constant 0 : index
    %c0_0 = arith.constant 0 : index
    %0 = vector.load %arg2[%c0, %c0_0] : memref<128x640xbf16, #tpu.memory_space<vmem>>, vector<128x640xbf16>
    %c0_1 = arith.constant 0 : index
    %c0_2 = arith.constant 0 : index
    %1 = vector.load %arg3[%c0_1, %c0_2] : memref<640x128xbf16, #tpu.memory_space<vmem>>, vector<640x128xbf16>
    %cst = arith.constant dense<0.000000e+00> : vector<128x128xf32>
    %2 = tpu.matmul %0, %1, %cst {dimension_numbers = #tpu.dot_dimension_numbers<[1], [0], [0], [1], [0, 0, 1, 1], [], []>} : vector<128x640xbf16>, vector<640x128xbf16>, vector<128x128xf32> -> vector<128x128xf32>
    %c0_3 = arith.constant 0 : index
    %c0_4 = arith.constant 0 : index
    %3 = vector.load %arg4[%c0_3, %c0_4] : memref<1x128xf32, #tpu.memory_space<vmem>>, vector<1x128xf32>
    %4 = vector.broadcast %3 : vector<1x128xf32> to vector<128x128xf32>
    %5 = arith.addf %2, %4 : vector<128x128xf32>
    %cst_5 = arith.constant 0.000000e+00 : f32
    %6 = vector.broadcast %cst_5 : f32 to vector<128x128xf32>
    %7 = arith.maximumf %5, %6 : vector<128x128xf32>
    %c0_6 = arith.constant 0 : index
    %c0_7 = arith.constant 0 : index
    %8 = vector.load %arg5[%c0_6, %c0_7] : memref<128x128xf32, #tpu.memory_space<vmem>>, vector<128x128xf32>
    tpu.vector_store %arg5[%c0_6, %c0_7], %7 {strides = array<i32>} : memref<128x128xf32, #tpu.memory_space<vmem>>, vector<128x128xf32>,
    return
  }
  func.func @transform_0(%arg0: i32, %arg1: i32) -> (i32, i32) {
    %c0_i32 = arith.constant 0 : i32
    %c0_i32_0 = arith.constant 0 : i32
    return %arg0, %c0_i32 : i32, i32
  }
  func.func @transform_1(%arg0: i32, %arg1: i32) -> (i32, i32) {
    %c0_i32 = arith.constant 0 : i32
    %c0_i32_0 = arith.constant 0 : i32
    return %c0_i32, %arg1 : i32, i32
  }
  func.func @transform_2(%arg0: i32, %arg1: i32) -> (i32, i32) {
    %c0_i32 = arith.constant 0 : i32
    %c0_i32_0 = arith.constant 0 : i32
    return %c0_i32, %arg1 : i32, i32
  }
  func.func @transform_3(%arg0: i32, %arg1: i32) -> (i32, i32) {
    %c0_i32 = arith.constant 0 : i32
    return %arg0, %arg1 : i32, i32
  }
}

module attributes {stable_mosaic.version = 11 : i64} {
  func.func @_gemm_fused_kernel(%arg0: i32, %arg1: i32, %arg2: memref<128x640xbf16, #tpu.memory_space<vmem>>, %arg3: memref<640x128xbf16, #tpu.memory_space<vmem>>, %arg4: memref<1x128xf32, #tpu.memory_space<vmem>>, %arg5: memref<128x128xf32, #tpu.memory_space<vmem>>, %arg6: memref<128x128xf32, #tpu.memory_space<vmem>>) attributes {dimension_semantics = [#tpu.dimension_semantics<parallel>, #tpu.dimension_semantics<parallel>], iteration_bounds = array<i64: 1, 1>, scalar_prefetch = 0 : i64, scratch_operands = 0 : i64, tpu.core_type = #tpu.core_type<tc>, window_params = [{transform_indices = @transform_0, window_bounds = array<i64: 128, 640>}, {transform_indices = @transform_1, window_bounds = array<i64: 640, 128>}, {transform_indices = @transform_2, window_bounds = array<i64: 1, 128>}, {transform_indices = @transform_3, window_bounds = array<i64: 128, 128>}, {transform_indices = @transform_4, window_bounds = array<i64: 128, 128>}]} {
    %c0 = arith.constant 0 : index
    %c0_0 = arith.constant 0 : index
    %0 = vector.load %arg2[%c0, %c0_0] : memref<128x640xbf16, #tpu.memory_space<vmem>>, vector<128x640xbf16>
    %c0_1 = arith.constant 0 : index
    %c0_2 = arith.constant 0 : index
    %1 = vector.load %arg3[%c0_1, %c0_2] : memref<640x128xbf16, #tpu.memory_space<vmem>>, vector<640x128xbf16>
    %cst = arith.constant dense<0.000000e+00> : vector<128x128xf32>
    %2 = tpu.matmul %0, %1, %cst {dimension_numbers = #tpu.dot_dimension_numbers<[1], [0], [0], [1], [0, 0, 1, 1], [], []>} : vector<128x640xbf16>, vector<640x128xbf16>, vector<128x128xf32> -> vector<128x128xf32>
    %c0_3 = arith.constant 0 : index
    %c0_4 = arith.constant 0 : index
    %3 = vector.load %arg4[%c0_3, %c0_4] : memref<1x128xf32, #tpu.memory_space<vmem>>, vector<1x128xf32>
    %4 = vector.broadcast %3 : vector<1x128xf32> to vector<128x128xf32>
    %5 = arith.addf %2, %4 : vector<128x128xf32>
    %c0_5 = arith.constant 0 : index
    %c0_6 = arith.constant 0 : index
    %6 = vector.load %arg5[%c0_5, %c0_6] : memref<128x128xf32, #tpu.memory_space<vmem>>, vector<128x128xf32>
    %7 = arith.addf %5, %6 : vector<128x128xf32>
    %cst_7 = arith.constant 0.000000e+00 : f32
    %8 = vector.broadcast %cst_7 : f32 to vector<128x128xf32>
    %9 = arith.maximumf %7, %8 : vector<128x128xf32>
    %c0_8 = arith.constant 0 : index
    %c0_9 = arith.constant 0 : index
    %10 = vector.load %arg6[%c0_8, %c0_9] : memref<128x128xf32, #tpu.memory_space<vmem>>, vector<128x128xf32>
    tpu.vector_store %arg6[%c0_8, %c0_9], %9 {strides = array<i32>} : memref<128x128xf32, #tpu.memory_space<vmem>>, vector<128x128xf32>,
    return
  }
  func.func @transform_0(%arg0: i32, %arg1: i32) -> (i32, i32) {
    %c0_i32 = arith.constant 0 : i32
    %c0_i32_0 = arith.constant 0 : i32
    return %arg0, %c0_i32 : i32, i32
  }
  func.func @transform_1(%arg0: i32, %arg1: i32) -> (i32, i32) {
    %c0_i32 = arith.constant 0 : i32
    %c0_i32_0 = arith.constant 0 : i32
    return %c0_i32, %arg1 : i32, i32
  }
  func.func @transform_2(%arg0: i32, %arg1: i32) -> (i32, i32) {
    %c0_i32 = arith.constant 0 : i32
    %c0_i32_0 = arith.constant 0 : i32
    return %c0_i32, %arg1 : i32, i32
  }
  func.func @transform_3(%arg0: i32, %arg1: i32) -> (i32, i32) {
    %c0_i32 = arith.constant 0 : i32
    return %arg0, %arg1 : i32, i32
  }
  func.func @transform_4(%arg0: i32, %arg1: i32) -> (i32, i32) {
    %c0_i32 = arith.constant 0 : i32
    return %arg0, %arg1 : i32, i32
  }
}

module attributes {stable_mosaic.version = 11 : i64} {
  func.func @_gemm_fused_kernel(%arg0: i32, %arg1: i32, %arg2: memref<32x640xbf16, #tpu.memory_space<vmem>>, %arg3: memref<640x128xbf16, #tpu.memory_space<vmem>>, %arg4: memref<1x128xf32, #tpu.memory_space<vmem>>, %arg5: memref<32x128xf32, #tpu.memory_space<vmem>>) attributes {dimension_semantics = [#tpu.dimension_semantics<parallel>, #tpu.dimension_semantics<parallel>], iteration_bounds = array<i64: 1, 1>, scalar_prefetch = 0 : i64, scratch_operands = 0 : i64, tpu.core_type = #tpu.core_type<tc>, window_params = [{transform_indices = @transform_0, window_bounds = array<i64: 32, 640>}, {transform_indices = @transform_1, window_bounds = array<i64: 640, 128>}, {transform_indices = @transform_2, window_bounds = array<i64: 1, 128>}, {transform_indices = @transform_3, window_bounds = array<i64: 32, 128>}]} {
    %c0 = arith.constant 0 : index
    %c0_0 = arith.constant 0 : index
    %0 = vector.load %arg2[%c0, %c0_0] : memref<32x640xbf16, #tpu.memory_space<vmem>>, vector<32x640xbf16>
    %c0_1 = arith.constant 0 : index
    %c0_2 = arith.constant 0 : index
    %1 = vector.load %arg3[%c0_1, %c0_2] : memref<640x128xbf16, #tpu.memory_space<vmem>>, vector<640x128xbf16>
    %cst = arith.constant dense<0.000000e+00> : vector<32x128xf32>
    %2 = tpu.matmul %0, %1, %cst {dimension_numbers = #tpu.dot_dimension_numbers<[1], [0], [0], [1], [0, 0, 1, 1], [], []>} : vector<32x640xbf16>, vector<640x128xbf16>, vector<32x128xf32> -> vector<32x128xf32>
    %c0_3 = arith.constant 0 : index
    %c0_4 = arith.constant 0 : index
    %3 = vector.load %arg4[%c0_3, %c0_4] : memref<1x128xf32, #tpu.memory_space<vmem>>, vector<1x128xf32>
    %4 = vector.broadcast %3 : vector<1x128xf32> to vector<32x128xf32>
    %5 = arith.addf %2, %4 : vector<32x128xf32>
    %cst_5 = arith.constant 0.000000e+00 : f32
    %6 = vector.broadcast %cst_5 : f32 to vector<32x128xf32>
    %7 = arith.maximumf %5, %6 : vector<32x128xf32>
    %c0_6 = arith.constant 0 : index
    %c0_7 = arith.constant 0 : index
    %8 = vector.load %arg5[%c0_6, %c0_7] : memref<32x128xf32, #tpu.memory_space<vmem>>, vector<32x128xf32>
    tpu.vector_store %arg5[%c0_6, %c0_7], %7 {strides = array<i32>} : memref<32x128xf32, #tpu.memory_space<vmem>>, vector<32x128xf32>,
    return
  }
  func.func @transform_0(%arg0: i32, %arg1: i32) -> (i32, i32) {
    %c0_i32 = arith.constant 0 : i32
    %c0_i32_0 = arith.constant 0 : i32
    return %arg0, %c0_i32 : i32, i32
  }
  func.func @transform_1(%arg0: i32, %arg1: i32) -> (i32, i32) {
    %c0_i32 = arith.constant 0 : i32
    %c0_i32_0 = arith.constant 0 : i32
    return %c0_i32, %arg1 : i32, i32
  }
  func.func @transform_2(%arg0: i32, %arg1: i32) -> (i32, i32) {
    %c0_i32 = arith.constant 0 : i32
    %c0_i32_0 = arith.constant 0 : i32
    return %c0_i32, %arg1 : i32, i32
  }
  func.func @transform_3(%arg0: i32, %arg1: i32) -> (i32, i32) {
    %c0_i32 = arith.constant 0 : i32
    return %arg0, %arg1 : i32, i32
  }
}

module attributes {stable_mosaic.version = 11 : i64} {
  func.func @_gemm_fused_kernel(%arg0: i32, %arg1: i32, %arg2: memref<32x1152xbf16, #tpu.memory_space<vmem>>, %arg3: memref<1152x128xbf16, #tpu.memory_space<vmem>>, %arg4: memref<1x128xf32, #tpu.memory_space<vmem>>, %arg5: memref<32x128xf32, #tpu.memory_space<vmem>>) attributes {dimension_semantics = [#tpu.dimension_semantics<parallel>, #tpu.dimension_semantics<parallel>], iteration_bounds = array<i64: 1, 1>, scalar_prefetch = 0 : i64, scratch_operands = 0 : i64, tpu.core_type = #tpu.core_type<tc>, window_params = [{transform_indices = @transform_0, window_bounds = array<i64: 32, 1152>}, {transform_indices = @transform_1, window_bounds = array<i64: 1152, 128>}, {transform_indices = @transform_2, window_bounds = array<i64: 1, 128>}, {transform_indices = @transform_3, window_bounds = array<i64: 32, 128>}]} {
    %c0 = arith.constant 0 : index
    %c0_0 = arith.constant 0 : index
    %0 = vector.load %arg2[%c0, %c0_0] : memref<32x1152xbf16, #tpu.memory_space<vmem>>, vector<32x1152xbf16>
    %c0_1 = arith.constant 0 : index
    %c0_2 = arith.constant 0 : index
    %1 = vector.load %arg3[%c0_1, %c0_2] : memref<1152x128xbf16, #tpu.memory_space<vmem>>, vector<1152x128xbf16>
    %cst = arith.constant dense<0.000000e+00> : vector<32x128xf32>
    %2 = tpu.matmul %0, %1, %cst {dimension_numbers = #tpu.dot_dimension_numbers<[1], [0], [0], [1], [0, 0, 1, 1], [], []>} : vector<32x1152xbf16>, vector<1152x128xbf16>, vector<32x128xf32> -> vector<32x128xf32>
    %c0_3 = arith.constant 0 : index
    %c0_4 = arith.constant 0 : index
    %3 = vector.load %arg4[%c0_3, %c0_4] : memref<1x128xf32, #tpu.memory_space<vmem>>, vector<1x128xf32>
    %4 = vector.broadcast %3 : vector<1x128xf32> to vector<32x128xf32>
    %5 = arith.addf %2, %4 : vector<32x128xf32>
    %cst_5 = arith.constant 0.000000e+00 : f32
    %6 = vector.broadcast %cst_5 : f32 to vector<32x128xf32>
    %7 = arith.maximumf %5, %6 : vector<32x128xf32>
    %c0_6 = arith.constant 0 : index
    %c0_7 = arith.constant 0 : index
    %8 = vector.load %arg5[%c0_6, %c0_7] : memref<32x128xf32, #tpu.memory_space<vmem>>, vector<32x128xf32>
    tpu.vector_store %arg5[%c0_6, %c0_7], %7 {strides = array<i32>} : memref<32x128xf32, #tpu.memory_space<vmem>>, vector<32x128xf32>,
    return
  }
  func.func @transform_0(%arg0: i32, %arg1: i32) -> (i32, i32) {
    %c0_i32 = arith.constant 0 : i32
    %c0_i32_0 = arith.constant 0 : i32
    return %arg0, %c0_i32 : i32, i32
  }
  func.func @transform_1(%arg0: i32, %arg1: i32) -> (i32, i32) {
    %c0_i32 = arith.constant 0 : i32
    %c0_i32_0 = arith.constant 0 : i32
    return %c0_i32, %arg1 : i32, i32
  }
  func.func @transform_2(%arg0: i32, %arg1: i32) -> (i32, i32) {
    %c0_i32 = arith.constant 0 : i32
    %c0_i32_0 = arith.constant 0 : i32
    return %c0_i32, %arg1 : i32, i32
  }
  func.func @transform_3(%arg0: i32, %arg1: i32) -> (i32, i32) {
    %c0_i32 = arith.constant 0 : i32
    return %arg0, %arg1 : i32, i32
  }
}

module attributes {stable_mosaic.version = 11 : i64} {
  func.func @_gemm_fused_kernel(%arg0: i32, %arg1: i32, %arg2: memref<32x128xbf16, #tpu.memory_space<vmem>>, %arg3: memref<128x128xbf16, #tpu.memory_space<vmem>>, %arg4: memref<1x128xf32, #tpu.memory_space<vmem>>, %arg5: memref<32x128xf32, #tpu.memory_space<vmem>>) attributes {dimension_semantics = [#tpu.dimension_semantics<parallel>, #tpu.dimension_semantics<parallel>], iteration_bounds = array<i64: 1, 1>, scalar_prefetch = 0 : i64, scratch_operands = 0 : i64, tpu.core_type = #tpu.core_type<tc>, window_params = [{transform_indices = @transform_0, window_bounds = array<i64: 32, 128>}, {transform_indices = @transform_1, window_bounds = array<i64: 128, 128>}, {transform_indices = @transform_2, window_bounds = array<i64: 1, 128>}, {transform_indices = @transform_3, window_bounds = array<i64: 32, 128>}]} {
    %c0 = arith.constant 0 : index
    %c0_0 = arith.constant 0 : index
    %0 = vector.load %arg2[%c0, %c0_0] : memref<32x128xbf16, #tpu.memory_space<vmem>>, vector<32x128xbf16>
    %c0_1 = arith.constant 0 : index
    %c0_2 = arith.constant 0 : index
    %1 = vector.load %arg3[%c0_1, %c0_2] : memref<128x128xbf16, #tpu.memory_space<vmem>>, vector<128x128xbf16>
    %cst = arith.constant dense<0.000000e+00> : vector<32x128xf32>
    %2 = tpu.matmul %0, %1, %cst {dimension_numbers = #tpu.dot_dimension_numbers<[1], [0], [0], [1], [0, 0, 1, 1], [], []>} : vector<32x128xbf16>, vector<128x128xbf16>, vector<32x128xf32> -> vector<32x128xf32>
    %c0_3 = arith.constant 0 : index
    %c0_4 = arith.constant 0 : index
    %3 = vector.load %arg4[%c0_3, %c0_4] : memref<1x128xf32, #tpu.memory_space<vmem>>, vector<1x128xf32>
    %4 = vector.broadcast %3 : vector<1x128xf32> to vector<32x128xf32>
    %5 = arith.addf %2, %4 : vector<32x128xf32>
    %c0_5 = arith.constant 0 : index
    %c0_6 = arith.constant 0 : index
    %6 = vector.load %arg5[%c0_5, %c0_6] : memref<32x128xf32, #tpu.memory_space<vmem>>, vector<32x128xf32>
    tpu.vector_store %arg5[%c0_5, %c0_6], %5 {strides = array<i32>} : memref<32x128xf32, #tpu.memory_space<vmem>>, vector<32x128xf32>,
    return
  }
  func.func @transform_0(%arg0: i32, %arg1: i32) -> (i32, i32) {
    %c0_i32 = arith.constant 0 : i32
    %c0_i32_0 = arith.constant 0 : i32
    return %arg0, %c0_i32 : i32, i32
  }
  func.func @transform_1(%arg0: i32, %arg1: i32) -> (i32, i32) {
    %c0_i32 = arith.constant 0 : i32
    %c0_i32_0 = arith.constant 0 : i32
    return %c0_i32, %arg1 : i32, i32
  }
  func.func @transform_2(%arg0: i32, %arg1: i32) -> (i32, i32) {
    %c0_i32 = arith.constant 0 : i32
    %c0_i32_0 = arith.constant 0 : i32
    return %c0_i32, %arg1 : i32, i32
  }
  func.func @transform_3(%arg0: i32, %arg1: i32) -> (i32, i32) {
    %c0_i32 = arith.constant 0 : i32
    return %arg0, %arg1 : i32, i32
  }
}

module attributes {stable_mosaic.version = 11 : i64} {
  func.func @_gemm_fused_kernel(%arg0: i32, %arg1: i32, %arg2: memref<32x1152xbf16, #tpu.memory_space<vmem>>, %arg3: memref<1152x128xbf16, #tpu.memory_space<vmem>>, %arg4: memref<1x128xf32, #tpu.memory_space<vmem>>, %arg5: memref<32x128xf32, #tpu.memory_space<vmem>>, %arg6: memref<32x128xf32, #tpu.memory_space<vmem>>) attributes {dimension_semantics = [#tpu.dimension_semantics<parallel>, #tpu.dimension_semantics<parallel>], iteration_bounds = array<i64: 1, 1>, scalar_prefetch = 0 : i64, scratch_operands = 0 : i64, tpu.core_type = #tpu.core_type<tc>, window_params = [{transform_indices = @transform_0, window_bounds = array<i64: 32, 1152>}, {transform_indices = @transform_1, window_bounds = array<i64: 1152, 128>}, {transform_indices = @transform_2, window_bounds = array<i64: 1, 128>}, {transform_indices = @transform_3, window_bounds = array<i64: 32, 128>}, {transform_indices = @transform_4, window_bounds = array<i64: 32, 128>}]} {
    %c0 = arith.constant 0 : index
    %c0_0 = arith.constant 0 : index
    %0 = vector.load %arg2[%c0, %c0_0] : memref<32x1152xbf16, #tpu.memory_space<vmem>>, vector<32x1152xbf16>
    %c0_1 = arith.constant 0 : index
    %c0_2 = arith.constant 0 : index
    %1 = vector.load %arg3[%c0_1, %c0_2] : memref<1152x128xbf16, #tpu.memory_space<vmem>>, vector<1152x128xbf16>
    %cst = arith.constant dense<0.000000e+00> : vector<32x128xf32>
    %2 = tpu.matmul %0, %1, %cst {dimension_numbers = #tpu.dot_dimension_numbers<[1], [0], [0], [1], [0, 0, 1, 1], [], []>} : vector<32x1152xbf16>, vector<1152x128xbf16>, vector<32x128xf32> -> vector<32x128xf32>
    %c0_3 = arith.constant 0 : index
    %c0_4 = arith.constant 0 : index
    %3 = vector.load %arg4[%c0_3, %c0_4] : memref<1x128xf32, #tpu.memory_space<vmem>>, vector<1x128xf32>
    %4 = vector.broadcast %3 : vector<1x128xf32> to vector<32x128xf32>
    %5 = arith.addf %2, %4 : vector<32x128xf32>
    %c0_5 = arith.constant 0 : index
    %c0_6 = arith.constant 0 : index
    %6 = vector.load %arg5[%c0_5, %c0_6] : memref<32x128xf32, #tpu.memory_space<vmem>>, vector<32x128xf32>
    %7 = arith.addf %5, %6 : vector<32x128xf32>
    %cst_7 = arith.constant 0.000000e+00 : f32
    %8 = vector.broadcast %cst_7 : f32 to vector<32x128xf32>
    %9 = arith.maximumf %7, %8 : vector<32x128xf32>
    %c0_8 = arith.constant 0 : index
    %c0_9 = arith.constant 0 : index
    %10 = vector.load %arg6[%c0_8, %c0_9] : memref<32x128xf32, #tpu.memory_space<vmem>>, vector<32x128xf32>
    tpu.vector_store %arg6[%c0_8, %c0_9], %9 {strides = array<i32>} : memref<32x128xf32, #tpu.memory_space<vmem>>, vector<32x128xf32>,
    return
  }
  func.func @transform_0(%arg0: i32, %arg1: i32) -> (i32, i32) {
    %c0_i32 = arith.constant 0 : i32
    %c0_i32_0 = arith.constant 0 : i32
    return %arg0, %c0_i32 : i32, i32
  }
  func.func @transform_1(%arg0: i32, %arg1: i32) -> (i32, i32) {
    %c0_i32 = arith.constant 0 : i32
    %c0_i32_0 = arith.constant 0 : i32
    return %c0_i32, %arg1 : i32, i32
  }
  func.func @transform_2(%arg0: i32, %arg1: i32) -> (i32, i32) {
    %c0_i32 = arith.constant 0 : i32
    %c0_i32_0 = arith.constant 0 : i32
    return %c0_i32, %arg1 : i32, i32
  }
  func.func @transform_3(%arg0: i32, %arg1: i32) -> (i32, i32) {
    %c0_i32 = arith.constant 0 : i32
    return %arg0, %arg1 : i32, i32
  }
  func.func @transform_4(%arg0: i32, %arg1: i32) -> (i32, i32) {
    %c0_i32 = arith.constant 0 : i32
    return %arg0, %arg1 : i32, i32
  }
}

module attributes {stable_mosaic.version = 11 : i64} {
  func.func @_head_kernel(%arg0: memref<2x16x128xf32, #tpu.memory_space<vmem>>, %arg1: memref<128x128xf32, #tpu.memory_space<vmem>>, %arg2: memref<1x128xf32, #tpu.memory_space<vmem>>, %arg3: memref<128x256xf32, #tpu.memory_space<vmem>>, %arg4: memref<1x256xf32, #tpu.memory_space<vmem>>, %arg5: memref<1x256xf32, #tpu.memory_space<vmem>>, %arg6: memref<1x256xf32, #tpu.memory_space<vmem>>, %arg7: memref<2x256xf32, #tpu.memory_space<vmem>>) attributes {dimension_semantics = [], scalar_prefetch = 0 : i64, scratch_operands = 0 : i64, tpu.core_type = #tpu.core_type<tc>} {
    %c0 = arith.constant 0 : index
    %c0_0 = arith.constant 0 : index
    %c0_1 = arith.constant 0 : index
    %0 = vector.load %arg0[%c0, %c0_0, %c0_1] : memref<2x16x128xf32, #tpu.memory_space<vmem>>, vector<2x16x128xf32>
    %cst = arith.constant dense<0.000000e+00> : vector<2x128xf32>
    %1 = vector.multi_reduction <add>, %0, %cst [1] : vector<2x16x128xf32> to vector<2x128xf32>
    %cst_2 = arith.constant 1.600000e+01 : f32
    %2 = vector.broadcast %cst_2 : f32 to vector<2x128xf32>
    %3 = arith.divf %1, %2 : vector<2x128xf32>
    %c0_3 = arith.constant 0 : index
    %c0_4 = arith.constant 0 : index
    %4 = vector.load %arg1[%c0_3, %c0_4] : memref<128x128xf32, #tpu.memory_space<vmem>>, vector<128x128xf32>
    %cst_5 = arith.constant dense<0.000000e+00> : vector<2x128xf32>
    %5 = tpu.matmul %3, %4, %cst_5 {dimension_numbers = #tpu.dot_dimension_numbers<[1], [0], [0], [1], [0, 0, 1, 1], [], []>} : vector<2x128xf32>, vector<128x128xf32>, vector<2x128xf32> -> vector<2x128xf32>
    %c0_6 = arith.constant 0 : index
    %c0_7 = arith.constant 0 : index
    %6 = vector.load %arg2[%c0_6, %c0_7] : memref<1x128xf32, #tpu.memory_space<vmem>>, vector<1x128xf32>
    %7 = vector.broadcast %6 : vector<1x128xf32> to vector<2x128xf32>
    %8 = arith.addf %5, %7 : vector<2x128xf32>
    %c0_8 = arith.constant 0 : index
    %c0_9 = arith.constant 0 : index
    %9 = vector.load %arg3[%c0_8, %c0_9] : memref<128x256xf32, #tpu.memory_space<vmem>>, vector<128x256xf32>
    %cst_10 = arith.constant dense<0.000000e+00> : vector<2x256xf32>
    %10 = tpu.matmul %8, %9, %cst_10 {dimension_numbers = #tpu.dot_dimension_numbers<[1], [0], [0], [1], [0, 0, 1, 1], [], []>} : vector<2x128xf32>, vector<128x256xf32>, vector<2x256xf32> -> vector<2x256xf32>
    %c0_11 = arith.constant 0 : index
    %c0_12 = arith.constant 0 : index
    %11 = vector.load %arg4[%c0_11, %c0_12] : memref<1x256xf32, #tpu.memory_space<vmem>>, vector<1x256xf32>
    %12 = vector.broadcast %11 : vector<1x256xf32> to vector<2x256xf32>
    %13 = arith.addf %10, %12 : vector<2x256xf32>
    %cst_13 = arith.constant dense<0.000000e+00> : vector<2xf32>
    %14 = vector.multi_reduction <add>, %13, %cst_13 [1] : vector<2x256xf32> to vector<2xf32>
    %15 = vector.shape_cast %14 : vector<2xf32> to vector<2x1xf32>
    %cst_14 = arith.constant 2.560000e+02 : f32
    %16 = vector.broadcast %cst_14 : f32 to vector<2x1xf32>
    %17 = arith.divf %15, %16 : vector<2x1xf32>
    %18 = vector.broadcast %17 : vector<2x1xf32> to vector<2x256xf32>
    %19 = arith.subf %13, %18 : vector<2x256xf32>
    %20 = arith.mulf %19, %19 : vector<2x256xf32>
    %cst_15 = arith.constant dense<0.000000e+00> : vector<2xf32>
    %21 = vector.multi_reduction <add>, %20, %cst_15 [1] : vector<2x256xf32> to vector<2xf32>
    %22 = vector.shape_cast %21 : vector<2xf32> to vector<2x1xf32>
    %cst_16 = arith.constant 2.560000e+02 : f32
    %23 = vector.broadcast %cst_16 : f32 to vector<2x1xf32>
    %24 = arith.divf %22, %23 : vector<2x1xf32>
    %25 = vector.broadcast %17 : vector<2x1xf32> to vector<2x256xf32>
    %26 = arith.subf %13, %25 : vector<2x256xf32>
    %cst_17 = arith.constant 9.99999974E-6 : f32
    %27 = vector.broadcast %cst_17 : f32 to vector<2x1xf32>
    %28 = arith.addf %24, %27 : vector<2x1xf32>
    %29 = math.rsqrt %28 : vector<2x1xf32>
    %30 = vector.broadcast %29 : vector<2x1xf32> to vector<2x256xf32>
    %31 = arith.mulf %26, %30 : vector<2x256xf32>
    %c0_18 = arith.constant 0 : index
    %c0_19 = arith.constant 0 : index
    %32 = vector.load %arg5[%c0_18, %c0_19] : memref<1x256xf32, #tpu.memory_space<vmem>>, vector<1x256xf32>
    %33 = vector.broadcast %32 : vector<1x256xf32> to vector<2x256xf32>
    %34 = arith.mulf %31, %33 : vector<2x256xf32>
    %c0_20 = arith.constant 0 : index
    %c0_21 = arith.constant 0 : index
    %35 = vector.load %arg6[%c0_20, %c0_21] : memref<1x256xf32, #tpu.memory_space<vmem>>, vector<1x256xf32>
    %36 = vector.broadcast %35 : vector<1x256xf32> to vector<2x256xf32>
    %37 = arith.addf %34, %36 : vector<2x256xf32>
    %38 = math.tanh %37 : vector<2x256xf32>
    %c0_22 = arith.constant 0 : index
    %c0_23 = arith.constant 0 : index
    %39 = vector.load %arg7[%c0_22, %c0_23] : memref<2x256xf32, #tpu.memory_space<vmem>>, vector<2x256xf32>
    tpu.vector_store %arg7[%c0_22, %c0_23], %38 {strides = array<i32>} : memref<2x256xf32, #tpu.memory_space<vmem>>, vector<2x256xf32>,
    return
  }
}

</mosaic_0001>

<llo_original>
// kernel: resnet_encoder_forward.11
$region0: #{resnet_encoder_forward.11}
  #allocation0 [shape = 'u32[]', space=smem, size = 0x4, offset = 0x4, fixed_abs, tag = 'smem constant byte address 0x4 - core index']
  #allocation1 [shape = 'u32[144,128]{1,0:T(1,128)}', space=vmem, size = 0x12000, scoped, tag = 'internal scratch']
  %s0 = inlined_call_operand.vmem [shape: bf16[512,256], index: 0, kind: input, shape index: {}]
  %s1 = inlined_call_operand.vmem [shape: bf16[256,128], index: 1, kind: input, shape index: {}]
  %s2 = inlined_call_operand.vmem [shape: f32[1,128], index: 2, kind: input, shape index: {}]
  %s3 = inlined_call_operand.vmem [shape: f32[512,128], index: 3, kind: output, shape index: {}]
  %s4 = sld [smem:[#allocation0]]
  $region45: #{resnet_encoder_forward.11} parent=0
    _
  %s6 = ssub.s32 1, %s4
  %s7 = scalar_select 0, %s6, %s4
  loop: start=0, step=1, limit=6
  $region2: #{resnet_encoder_forward.11} parent=0 // loop_pre_header
    _
  $region3: #{resnet_encoder_forward.11} parent=0 // loop_header
    %s9 = sphi 0, %s13
    %p10 = scmp.ge.s32.totalorder %s9, 6
    %s16 = sphi 0, %s28
    %s17 = sphi 0, %s24
    %s18 = sphi 0, %s16
    %s19 = sphi 0, %s17
    %s20 = sphi 0, %s18
    %s21 = sphi 0, %s19
    %s31 = sphi 0, %s33
    %s34 = sphi 0, %s31
    %s35 = sphi 0, %s34
    %s51 = sphi 0, %s35
    %s57 = sphi 0, %s59
    %s60 = sphi 0, %s57
    %s61 = sphi 0, %s60
    %s77 = sphi 0, %s61
    %s83 = sphi 0, %s85
    %s86 = sphi 0, %s83
    %s87 = sphi 0, %s86
    %s103 = sphi 0, %s87
    %s111 = sphi 0, %s113
    %s114 = sphi 0, %s111
    %s115 = sphi 0, %s114
    %s131 = sphi 0, %s115
  $region4: #{resnet_encoder_forward.11} parent=0 // loop_header_branch
    %12 = sbr.rel (%p10) target = $region8
  $region5: #{resnet_encoder_forward.11} parent=0 // loop_body
    %s14 = ssub.s32 %s9, 1
    %s15 = ssub.s32 %s9, 2
    %s22 = sadd.s32 1, %s17
    %p23 = scmp.ge.s32.totalorder %s22, 1
    %s24 = scalar_select %p23, 0, %s22
    %s25 = sadd.s32 1, %s16
    %s26 = scalar_select %p23, %s25, %s16
    %p27 = scmp.ge.s32.totalorder %s26, 4
    %s28 = scalar_select %p27, 0, %s26
    %s29 = ssub.s32 %s16, %s28
    %p30 = scmp.eq.s32.totalorder %s29, 0
    %s32 = sadd.s32 %s31, 1
    %s33 = scalar_select %p30, %s31, %s32
    %p36 = pneg %p30
    %p37 = scmp.eq.s32.totalorder %s9, 3
    %p38 = por %p36, %p37
    %p39 = scmp.ne.s32.totalorder %s31, %s34
    %p40 = scmp.eq.s32.totalorder %s9, 0
    %p41 = por %p39, %p40
    %p42 = scmp.ne.s32.totalorder %s31, %s34
    %p43 = scmp.eq.s32.totalorder %s14, 3
    %p44 = por %p42, %p43
    %p45 = scmp.ne.s32.totalorder %s34, %s35
    %p46 = scmp.eq.s32.totalorder %s14, 0
    %p47 = por %p45, %p46
    %p48 = scmp.ne.s32.totalorder %s34, %s35
    %p49 = scmp.eq.s32.totalorder %s15, 3
    %p50 = por %p48, %p49
    %p52 = scmp.ne.s32.totalorder %s35, %s51
    %p53 = scmp.eq.s32.totalorder %s15, 0
    %p54 = por %p52, %p53
    %s55 = ssub.s32 %s17, %s24
    %p56 = scmp.eq.s32.totalorder %s55, 0
    %s58 = sadd.s32 %s57, 1
    %s59 = scalar_select %p56, %s57, %s58
    %p62 = pneg %p56
    %p63 = scmp.eq.s32.totalorder %s9, 3
    %p64 = por %p62, %p63
    %p65 = scmp.ne.s32.totalorder %s57, %s60
    %p66 = scmp.eq.s32.totalorder %s9, 0
    %p67 = por %p65, %p66
    %p68 = scmp.ne.s32.totalorder %s57, %s60
    %p69 = scmp.eq.s32.totalorder %s14, 3
    %p70 = por %p68, %p69
    %p71 = scmp.ne.s32.totalorder %s60, %s61
    %p72 = scmp.eq.s32.totalorder %s14, 0
    %p73 = por %p71, %p72
    %p74 = scmp.ne.s32.totalorder %s60, %s61
    %p75 = scmp.eq.s32.totalorder %s15, 3
    %p76 = por %p74, %p75
    %p78 = scmp.ne.s32.totalorder %s61, %s77
    %p79 = scmp.eq.s32.totalorder %s15, 0
    %p80 = por %p78, %p79
    %s81 = ssub.s32 %s17, %s24
    %p82 = scmp.eq.s32.totalorder %s81, 0
    %s84 = sadd.s32 %s83, 1
    %s85 = scalar_select %p82, %s83, %s84
    %p88 = pneg %p82
    %p89 = scmp.eq.s32.totalorder %s9, 3
    %p90 = por %p88, %p89
    %p91 = scmp.ne.s32.totalorder %s83, %s86
    %p92 = scmp.eq.s32.totalorder %s9, 0
    %p93 = por %p91, %p92
    %p94 = scmp.ne.s32.totalorder %s83, %s86
    %p95 = scmp.eq.s32.totalorder %s14, 3
    %p96 = por %p94, %p95
    %p97 = scmp.ne.s32.totalorder %s86, %s87
    %p98 = scmp.eq.s32.totalorder %s14, 0
    %p99 = por %p97, %p98
    %p100 = scmp.ne.s32.totalorder %s86, %s87
    %p101 = scmp.eq.s32.totalorder %s15, 3
    %p102 = por %p100, %p101
    %p104 = scmp.ne.s32.totalorder %s87, %s103
    %p105 = scmp.eq.s32.totalorder %s15, 0
    %p106 = por %p104, %p105
    %s107 = ssub.s32 %s16, %s28
    %s108 = ssub.s32 %s17, %s24
    %s109 = sor.u32 %s107, %s108
    %p110 = scmp.eq.s32.totalorder %s109, 0
    %s112 = sadd.s32 %s111, 1
    %s113 = scalar_select %p110, %s111, %s112
    %p116 = pneg %p110
    %p117 = scmp.eq.s32.totalorder %s9, 3
    %p118 = por %p116, %p117
    %p119 = scmp.ne.s32.totalorder %s111, %s114
    %p120 = scmp.eq.s32.totalorder %s9, 0
    %p121 = por %p119, %p120
    %p122 = scmp.ne.s32.totalorder %s111, %s114
    %p123 = scmp.eq.s32.totalorder %s14, 3
    %p124 = por %p122, %p123
    %p125 = scmp.ne.s32.totalorder %s114, %s115
    %p126 = scmp.eq.s32.totalorder %s14, 0
    %p127 = por %p125, %p126
    %p128 = scmp.ne.s32.totalorder %s114, %s115
    %p129 = scmp.eq.s32.totalorder %s15, 3
    %p130 = por %p128, %p129
    %p132 = scmp.ne.s32.totalorder %s115, %s131
    %p133 = scmp.eq.s32.totalorder %s15, 0
    %p134 = por %p132, %p133
    %p135 = scmp.le.s32.totalorder 1, %s9
    %p136 = scmp.lt.s32.totalorder %s9, 5
    %p137 = pnand %p135, %p136
    %p138 = pneg %p137
    // Predicated region
    $region9: #{resnet_encoder_forward.11} parent=5 // pred_check
      _
    $region10: #{resnet_encoder_forward.11} parent=5 // pred_check_branch
      %140 = sbr.rel (%p137) target = $region12
    $region11: #{resnet_encoder_forward.11} parent=5 // pred_region
      %s141 = ssub.s32 %s9, 1
      // Predicated region
      $region13: #{resnet_encoder_forward.11} parent=11 // pred_check
        %p142 = pneg %p73
      $region14: #{resnet_encoder_forward.11} parent=11 // pred_check_branch
        %144 = sbr.rel (%p142) target = $region16
      $region15: #{resnet_encoder_forward.11} parent=11 // pred_region
        %p145 = scmp.lt.s32.totalorder %s19, 0
        %s146 = scalar_select %p145, %s19, 0
        %s147 = smul.addr %s146, 4
        %s148 = scalar_lea.vmem %s1, %s147
      $region16: #{resnet_encoder_forward.11} parent=11 // pred_fallthru
        _
      // Predicated region
      $region17: #{resnet_encoder_forward.11} parent=11 // pred_check
        %p149 = pneg %p99
      $region18: #{resnet_encoder_forward.11} parent=11 // pred_check_branch
        %151 = sbr.rel (%p149) target = $region20
      $region19: #{resnet_encoder_forward.11} parent=11 // pred_region
        %p152 = scmp.lt.s32.totalorder %s19, 0
        %s153 = scalar_select %p152, %s19, 0
        %s154 = scalar_lea.vmem %s2, %s153
      $region20: #{resnet_encoder_forward.11} parent=11 // pred_fallthru
        _
    $region12: #{resnet_encoder_forward.11} parent=5 // pred_fallthru
      _
    %p155 = scmp.lt.s32.totalorder %s9, 4
    // Predicated region
    $region21: #{resnet_encoder_forward.11} parent=5 // pred_check
      %p156 = pneg %p155
    $region22: #{resnet_encoder_forward.11} parent=5 // pred_check_branch
      %158 = sbr.rel (%p156) target = $region24
    $region23: #{resnet_encoder_forward.11} parent=5 // pred_region
      // Predicated region
      $region25: #{resnet_encoder_forward.11} parent=23 // pred_check
        %p159 = pneg %p41
      $region26: #{resnet_encoder_forward.11} parent=23 // pred_check_branch
        %161 = sbr.rel (%p159) target = $region28
      $region27: #{resnet_encoder_forward.11} parent=23 // pred_region
        %s162 = smul.u32 16, %s16
        %p163 = scmp.lt.s32.totalorder %s162, 63
        %s164 = scalar_select %p163, %s162, 63
        %s165 = smul.addr %s164, 2
        %s166 = smul.addr %s165, 4
        %s167 = scalar_lea.vmem %s0, %s166
        %s168 = smul.u32 16, %s16
      $region28: #{resnet_encoder_forward.11} parent=23 // pred_fallthru
        _
    $region24: #{resnet_encoder_forward.11} parent=5 // pred_fallthru
      _
    %p169 = scmp.le.s32.totalorder 1, %s9
    %p170 = scmp.lt.s32.totalorder %s9, 5
    %p171 = pnand %p169, %p170
    %p172 = pneg %p171
    // Predicated region
    $region29: #{resnet_encoder_forward.11} parent=5 // pred_check
      _
    $region30: #{resnet_encoder_forward.11} parent=5 // pred_check_branch
      %174 = sbr.rel (%p171) target = $region32
    $region31: #{resnet_encoder_forward.11} parent=5 // pred_region
      %s175 = ssub.s32 %s9, 1
      %s176 = smul.u32 16, %s18
      %p177 = scmp.lt.s32.totalorder %s176, 63
      %s178 = scalar_select %p177, %s176, 63
      %s179 = smul.addr %s178, 2
      %s180 = smul.addr %s179, 4
      %s181 = scalar_lea.vmem %s0, %s180
      %p182 = pneg %p47
      %p183 = pneg %p44
      %p184 = scmp.lt.s32.totalorder %s19, 0
      %s185 = scalar_select %p184, %s19, 0
      %s186 = smul.addr %s185, 4
      %s187 = scalar_lea.vmem %s1, %s186
      %p188 = pneg %p73
      %p189 = pneg %p70
      %p190 = scmp.lt.s32.totalorder %s19, 0
      %s191 = scalar_select %p190, %s19, 0
      %s192 = scalar_lea.vmem %s2, %s191
      %p193 = pneg %p99
      %p194 = pneg %p96
      %p195 = pneg %p127
      %p196 = pneg %p124
      %s197 = smul.u32 16, %s18
      %p198 = scmp.lt.s32.totalorder %s197, 63
      %s199 = scalar_select %p198, %s197, 63
      %p200 = scmp.lt.s32.totalorder %s19, 0
      %s201 = scalar_select %p200, %s19, 0
      %s202 = sadd.s32 %s201, %s199
      %s203 = smul.addr %s202, 8
      %s204 = scalar_lea.vmem %s3, %s203
      %s205 = smul.u32 16, %s18
      %p206 = scmp.lt.s32.totalorder %s205, 63
      %s207 = scalar_select %p206, %s205, 63
      %s208 = smul.addr %s207, 2
      %s209 = smul.addr %s208, 4
      %s210 = scalar_lea.vmem %s0, %s209
      %s211 = smul.u32 16, %s18
      %p212 = scmp.lt.s32.totalorder %s19, 0
      %s213 = scalar_select %p212, %s19, 0
      %s214 = smul.addr %s213, 4
      %s215 = scalar_lea.vmem %s1, %s214
      %p216 = scmp.lt.s32.totalorder %s19, 0
      %s217 = scalar_select %p216, %s19, 0
      %s218 = scalar_lea.vmem %s2, %s217
      %s219 = smul.u32 16, %s18
      %p220 = scmp.lt.s32.totalorder %s219, 63
      %s221 = scalar_select %p220, %s219, 63
      %p222 = scmp.lt.s32.totalorder %s19, 0
      %s223 = scalar_select %p222, %s19, 0
      %s224 = sadd.s32 %s223, %s221
      %s225 = smul.addr %s224, 8
      %s226 = scalar_lea.vmem %s3, %s225
      %s227 = smul.u32 16, %s18
      %v229 = vld [vmem:[%s210] sm:$0xff]
      %v230 = vld [vmem:[%s210 + $0x8] sm:$0xff]
      %v231 = vld [vmem:[%s210 + $0x10] sm:$0xff]
      %v232 = vld [vmem:[%s210 + $0x18] sm:$0xff]
      %v233 = vld [vmem:[%s210 + $0x20] sm:$0xff]
      %v234 = vld [vmem:[%s210 + $0x28] sm:$0xff]
      %v235 = vld [vmem:[%s210 + $0x30] sm:$0xff]
      %v236 = vld [vmem:[%s210 + $0x38] sm:$0xff]
      %v237 = vld [vmem:[%s210 + $0x40] sm:$0xff]
      %v238 = vld [vmem:[%s210 + $0x48] sm:$0xff]
      %v239 = vld [vmem:[%s210 + $0x50] sm:$0xff]
      %v240 = vld [vmem:[%s210 + $0x58] sm:$0xff]
      %v241 = vld [vmem:[%s210 + $0x60] sm:$0xff]
      %v242 = vld [vmem:[%s210 + $0x68] sm:$0xff]
      %v243 = vld [vmem:[%s210 + $0x70] sm:$0xff]
      %v244 = vld [vmem:[%s210 + $0x78] sm:$0xff]
      %v245 = vld [vmem:[%s215] sm:$0xf]
      %v246 = vld [vmem:[%s215 + $0x4] sm:$0xf]
      %v247 = vld [vmem:[%s215 + $0x8] sm:$0xf]
      %v248 = vld [vmem:[%s215 + $0xc] sm:$0xf]
      %v249 = vld [vmem:[%s215 + $0x10] sm:$0xf]
      %v250 = vld [vmem:[%s215 + $0x14] sm:$0xf]
      %v251 = vld [vmem:[%s215 + $0x18] sm:$0xf]
      %v252 = vld [vmem:[%s215 + $0x1c] sm:$0xf]
      %v253 = vld [vmem:[%s215 + $0x20] sm:$0xf]
      %v254 = vld [vmem:[%s215 + $0x24] sm:$0xf]
      %v255 = vld [vmem:[%s215 + $0x28] sm:$0xf]
      %v256 = vld [vmem:[%s215 + $0x2c] sm:$0xf]
      %v257 = vld [vmem:[%s215 + $0x30] sm:$0xf]
      %v258 = vld [vmem:[%s215 + $0x34] sm:$0xf]
      %v259 = vld [vmem:[%s215 + $0x38] sm:$0xf]
      %v260 = vld [vmem:[%s215 + $0x3c] sm:$0xf]
      %v261 = vld [vmem:[%s215 + $0x40] sm:$0xf]
      %v262 = vld [vmem:[%s215 + $0x44] sm:$0xf]
      %v263 = vld [vmem:[%s215 + $0x48] sm:$0xf]
      %v264 = vld [vmem:[%s215 + $0x4c] sm:$0xf]
      %v265 = vld [vmem:[%s215 + $0x50] sm:$0xf]
      %v266 = vld [vmem:[%s215 + $0x54] sm:$0xf]
      %v267 = vld [vmem:[%s215 + $0x58] sm:$0xf]
      %v268 = vld [vmem:[%s215 + $0x5c] sm:$0xf]
      %v269 = vld [vmem:[%s215 + $0x60] sm:$0xf]
      %v270 = vld [vmem:[%s215 + $0x64] sm:$0xf]
      %v271 = vld [vmem:[%s215 + $0x68] sm:$0xf]
      %v272 = vld [vmem:[%s215 + $0x6c] sm:$0xf]
      %v273 = vld [vmem:[%s215 + $0x70] sm:$0xf]
      %v274 = vld [vmem:[%s215 + $0x74] sm:$0xf]
      %v275 = vld [vmem:[%s215 + $0x78] sm:$0xf]
      %v276 = vld [vmem:[%s215 + $0x7c] sm:$0xf]
      %v277 = vld [vmem:[%s218] sm:$0x1]
      %v279 = vlaneseq
      %v280 = vshrl.u32 %v279, 7
      %v281 = vsub.s32 0, %v280
      %v282 = vrot.slane %v277, %v281
      %v300 = vunpack.c.l.b16 %v229
      %v301 = vunpack.c.h.b16 %v229
      %v302 = vunpack.c.l.b16 %v230
      %v303 = vunpack.c.h.b16 %v230
      %v304 = vunpack.c.l.b16 %v231
      %v305 = vunpack.c.h.b16 %v231
      %v306 = vunpack.c.l.b16 %v232
      %v307 = vunpack.c.h.b16 %v232
      %v308 = vunpack.c.l.b16 %v233
      %v309 = vunpack.c.h.b16 %v233
      %v310 = vunpack.c.l.b16 %v234
      %v311 = vunpack.c.h.b16 %v234
      %v312 = vunpack.c.l.b16 %v235
      %v313 = vunpack.c.h.b16 %v235
      %v314 = vunpack.c.l.b16 %v236
      %v315 = vunpack.c.h.b16 %v236
      %v316 = vunpack.c.l.b16 %v237
      %v317 = vunpack.c.h.b16 %v237
      %v318 = vunpack.c.l.b16 %v238
      %v319 = vunpack.c.h.b16 %v238
      %v320 = vunpack.c.l.b16 %v239
      %v321 = vunpack.c.h.b16 %v239
      %v322 = vunpack.c.l.b16 %v240
      %v323 = vunpack.c.h.b16 %v240
      %v324 = vunpack.c.l.b16 %v241
      %v325 = vunpack.c.h.b16 %v241
      %v326 = vunpack.c.l.b16 %v242
      %v327 = vunpack.c.h.b16 %v242
      %v328 = vunpack.c.l.b16 %v243
      %v329 = vunpack.c.h.b16 %v243
      %v330 = vunpack.c.l.b16 %v244
      %v331 = vunpack.c.h.b16 %v244
      %v332 = vpack.c.b16 %v302, %v300
      %v333 = vpack.c.b16 %v303, %v301
      %v334 = vpack.c.b16 %v306, %v304
      %v335 = vpack.c.b16 %v307, %v305
      %v336 = vpack.c.b16 %v310, %v308
      %v337 = vpack.c.b16 %v311, %v309
      %v338 = vpack.c.b16 %v314, %v312
      %v339 = vpack.c.b16 %v315, %v313
      %v340 = vpack.c.b16 %v318, %v316
      %v341 = vpack.c.b16 %v319, %v317
      %v342 = vpack.c.b16 %v322, %v320
      %v343 = vpack.c.b16 %v323, %v321
      %v344 = vpack.c.b16 %v326, %v324
      %v345 = vpack.c.b16 %v327, %v325
      %v346 = vpack.c.b16 %v330, %v328
      %v347 = vpack.c.b16 %v331, %v329
      %v396 = vunpack.c.l.b16 %v245
      %v397 = vunpack.c.l.b16 %v246
      %v398 = vunpack.c.l.b16 %v247
      %v399 = vunpack.c.l.b16 %v248
      %v400 = vunpack.c.l.b16 %v249
      %v401 = vunpack.c.l.b16 %v250
      %v402 = vunpack.c.l.b16 %v251
      %v403 = vunpack.c.l.b16 %v252
      %v404 = vunpack.c.l.b16 %v253
      %v405 = vunpack.c.l.b16 %v254
      %v406 = vunpack.c.l.b16 %v255
      %v407 = vunpack.c.l.b16 %v256
      %v408 = vunpack.c.l.b16 %v257
      %v409 = vunpack.c.l.b16 %v258
      %v410 = vunpack.c.l.b16 %v259
      %v411 = vunpack.c.l.b16 %v260
      %v412 = vunpack.c.l.b16 %v261
      %v413 = vunpack.c.l.b16 %v262
      %v414 = vunpack.c.l.b16 %v263
      %v415 = vunpack.c.l.b16 %v264
      %v416 = vunpack.c.l.b16 %v265
      %v417 = vunpack.c.l.b16 %v266
      %v418 = vunpack.c.l.b16 %v267
      %v419 = vunpack.c.l.b16 %v268
      %v420 = vunpack.c.l.b16 %v269
      %v421 = vunpack.c.l.b16 %v270
      %v422 = vunpack.c.l.b16 %v271
      %v423 = vunpack.c.l.b16 %v272
      %v424 = vunpack.c.l.b16 %v273
      %v425 = vunpack.c.l.b16 %v274
      %v426 = vunpack.c.l.b16 %v275
      %v427 = vunpack.c.l.b16 %v276
      %v428 = vpack.c.b16 %v397, %v396
      %v429 = vpack.c.b16 %v399, %v398
      %v430 = vpack.c.b16 %v401, %v400
      %v431 = vpack.c.b16 %v403, %v402
      %v432 = vpack.c.b16 %v405, %v404
      %v433 = vpack.c.b16 %v407, %v406
      %v434 = vpack.c.b16 %v409, %v408
      %v435 = vpack.c.b16 %v411, %v410
      %v436 = vpack.c.b16 %v413, %v412
      %v437 = vpack.c.b16 %v415, %v414
      %v438 = vpack.c.b16 %v417, %v416
      %v439 = vpack.c.b16 %v419, %v418
      %v440 = vpack.c.b16 %v421, %v420
      %v441 = vpack.c.b16 %v423, %v422
      %v442 = vpack.c.b16 %v425, %v424
      %v443 = vpack.c.b16 %v427, %v426
      %460 = vmatprep.subr.bf16.mxu0 0
      %461 = vmatpush1.bf16.msra.mxu0 %v428
      %462 = vmatprep.subr.bf16.mxu0 0
      %463 = vmatpush1.bf16.msra.mxu0 %v429
      %464 = vmatprep.subr.bf16.mxu0 0
      %465 = vmatpush1.bf16.msra.mxu0 %v430
      %466 = vmatprep.subr.bf16.mxu0 0
      %467 = vmatpush1.bf16.msra.mxu0 %v431
      %468 = vmatprep.subr.bf16.mxu0 0
      %469 = vmatpush1.bf16.msra.mxu0 %v432
      %470 = vmatprep.subr.bf16.mxu0 0
      %471 = vmatpush1.bf16.msra.mxu0 %v433
      %472 = vmatprep.subr.bf16.mxu0 0
      %473 = vmatpush1.bf16.msra.mxu0 %v434
      %474 = vmatprep.subr.bf16.mxu0 0
      %475 = vmatpush1.bf16.msra.mxu0 %v435
      %476 = vmatprep.subr.bf16.mxu0 0
      %477 = vmatpush1.bf16.msra.mxu0 %v436
      %478 = vmatprep.subr.bf16.mxu0 0
      %479 = vmatpush1.bf16.msra.mxu0 %v437
      %480 = vmatprep.subr.bf16.mxu0 0
      %481 = vmatpush1.bf16.msra.mxu0 %v438
      %482 = vmatprep.subr.bf16.mxu0 0
      %483 = vmatpush1.bf16.msra.mxu0 %v439
      %484 = vmatprep.subr.bf16.mxu0 0
      %485 = vmatpush1.bf16.msra.mxu0 %v440
      %486 = vmatprep.subr.bf16.mxu0 0
      %487 = vmatpush1.bf16.msra.mxu0 %v441
      %488 = vmatprep.subr.bf16.mxu0 0
      %489 = vmatpush1.bf16.msra.mxu0 %v442
      %490 = vmatprep.subr.bf16.mxu0 0
      %491 = vmatpush1.bf16.msra.mxu0 %v443
      %492 = vmatprep.mubr.bf16.mxu0 %v333
      %493 = vmatmul.mubr.bf16.gmra.mrb[0].mxu0 %v332
      %v494 = vpop.f32.mrb[0].mxu0
      %v495 = vadd.f32 %v282, %v494
      %v496 = vpop.f32.mrb[0].mxu0
      %v497 = vpop.f32.mrb[0].mxu0
      %v498 = vadd.f32 %v282, %v497
      %v499 = vpop.f32.mrb[0].mxu0
      %500 = vmatprep.mubr.bf16.mxu0 %v335
      %501 = vmatmul.mubr.bf16.gmra.mrb[0].mxu0 %v334
      %v502 = vpop.f32.mrb[0].mxu0
      %v503 = vadd.f32 %v282, %v502
      %v504 = vpop.f32.mrb[0].mxu0
      %v505 = vpop.f32.mrb[0].mxu0
      %v506 = vadd.f32 %v282, %v505
      %v507 = vpop.f32.mrb[0].mxu0
      %508 = vmatprep.mubr.bf16.mxu0 %v337
      %509 = vmatmul.mubr.bf16.gmra.mrb[0].mxu0 %v336
      %v510 = vpop.f32.mrb[0].mxu0
      %v511 = vadd.f32 %v282, %v510
      %v512 = vpop.f32.mrb[0].mxu0
      %v513 = vpop.f32.mrb[0].mxu0
      %v514 = vadd.f32 %v282, %v513
      %v515 = vpop.f32.mrb[0].mxu0
      %516 = vmatprep.mubr.bf16.mxu0 %v339
      %517 = vmatmul.mubr.bf16.gmra.mrb[0].mxu0 %v338
      %v518 = vpop.f32.mrb[0].mxu0
      %v519 = vadd.f32 %v282, %v518
      %v520 = vpop.f32.mrb[0].mxu0
      %v521 = vpop.f32.mrb[0].mxu0
      %v522 = vadd.f32 %v282, %v521
      %v523 = vpop.f32.mrb[0].mxu0
      %524 = vmatprep.mubr.bf16.mxu0 %v341
      %525 = vmatmul.mubr.bf16.gmra.mrb[0].mxu0 %v340
      %v526 = vpop.f32.mrb[0].mxu0
      %v527 = vadd.f32 %v282, %v526
      %v528 = vpop.f32.mrb[0].mxu0
      %v529 = vpop.f32.mrb[0].mxu0
      %v530 = vadd.f32 %v282, %v529
      %v531 = vpop.f32.mrb[0].mxu0
      %532 = vmatprep.mubr.bf16.mxu0 %v343
      %533 = vmatmul.mubr.bf16.gmra.mrb[0].mxu0 %v342
      %v534 = vpop.f32.mrb[0].mxu0
      %v535 = vadd.f32 %v282, %v534
      %v536 = vpop.f32.mrb[0].mxu0
      %v537 = vpop.f32.mrb[0].mxu0
      %v538 = vadd.f32 %v282, %v537
      %v539 = vpop.f32.mrb[0].mxu0
      %540 = vmatprep.mubr.bf16.mxu0 %v345
      %541 = vmatmul.mubr.bf16.gmra.mrb[0].mxu0 %v344
      %v542 = vpop.f32.mrb[0].mxu0
      %v543 = vadd.f32 %v282, %v542
      %v544 = vpop.f32.mrb[0].mxu0
      %v545 = vpop.f32.mrb[0].mxu0
      %v546 = vadd.f32 %v282, %v545
      %v547 = vpop.f32.mrb[0].mxu0
      %548 = vmatprep.mubr.bf16.mxu0 %v347
      %549 = vmatmul.mubr.bf16.gmra.mrb[0].mxu0 %v346
      %v550 = vpop.f32.mrb[0].mxu0
      %v551 = vadd.f32 %v282, %v550
      %v552 = vpop.f32.mrb[0].mxu0
      %v553 = vpop.f32.mrb[0].mxu0
      %v554 = vadd.f32 %v282, %v553
      %v555 = vpop.f32.mrb[0].mxu0
      %556 = vdwg.mxu0
      %v557 = vmax.f32 %v495, 0.0
      %v558 = vmax.f32 %v498, 0.0
      %v559 = vmax.f32 %v503, 0.0
      %v560 = vmax.f32 %v506, 0.0
      %v561 = vmax.f32 %v511, 0.0
      %v562 = vmax.f32 %v514, 0.0
      %v563 = vmax.f32 %v519, 0.0
      %v564 = vmax.f32 %v522, 0.0
      %v565 = vmax.f32 %v527, 0.0
      %v566 = vmax.f32 %v530, 0.0
      %v567 = vmax.f32 %v535, 0.0
      %v568 = vmax.f32 %v538, 0.0
      %v569 = vmax.f32 %v543, 0.0
      %v570 = vmax.f32 %v546, 0.0
      %v571 = vmax.f32 %v551, 0.0
      %v572 = vmax.f32 %v554, 0.0
      %573 = vst [vmem:[%s226] sm:$0xff] %v557
      %574 = vst [vmem:[%s226 + $0x8] sm:$0xff] %v558
      %575 = vst [vmem:[%s226 + $0x10] sm:$0xff] %v559
      %576 = vst [vmem:[%s226 + $0x18] sm:$0xff] %v560
      %577 = vst [vmem:[%s226 + $0x20] sm:$0xff] %v561
      %578 = vst [vmem:[%s226 + $0x28] sm:$0xff] %v562
      %579 = vst [vmem:[%s226 + $0x30] sm:$0xff] %v563
      %580 = vst [vmem:[%s226 + $0x38] sm:$0xff] %v564
      %581 = vst [vmem:[%s226 + $0x40] sm:$0xff] %v565
      %582 = vst [vmem:[%s226 + $0x48] sm:$0xff] %v566
      %583 = vst [vmem:[%s226 + $0x50] sm:$0xff] %v567
      %584 = vst [vmem:[%s226 + $0x58] sm:$0xff] %v568
      %585 = vst [vmem:[%s226 + $0x60] sm:$0xff] %v569
      %586 = vst [vmem:[%s226 + $0x68] sm:$0xff] %v570
      %587 = vst [vmem:[%s226 + $0x70] sm:$0xff] %v571
      %588 = vst [vmem:[%s226 + $0x78] sm:$0xff] %v572
      %s589 = smul.u32 16, %s18
      %p590 = scmp.lt.s32.totalorder %s589, 63
      %s591 = scalar_select %p590, %s589, 63
      %p592 = scmp.lt.s32.totalorder %s19, 0
      %s593 = scalar_select %p592, %s19, 0
      %s594 = sadd.s32 %s593, %s591
      %s595 = smul.addr %s594, 8
      %s596 = scalar_lea.vmem %s3, %s595
      // Predicated region
      $region33: #{resnet_encoder_forward.11} parent=31 // pred_check
        %p597 = pneg %p124
      $region34: #{resnet_encoder_forward.11} parent=31 // pred_check_branch
        %599 = sbr.rel (%p597) target = $region36
      $region35: #{resnet_encoder_forward.11} parent=31 // pred_region
        %s600 = smul.u32 16, %s18
      $region36: #{resnet_encoder_forward.11} parent=31 // pred_fallthru
        _
    $region32: #{resnet_encoder_forward.11} parent=5 // pred_fallthru
      _
    %p601 = scmp.le.s32.totalorder 2, %s9
    // Predicated region
    $region37: #{resnet_encoder_forward.11} parent=5 // pred_check
      %p602 = pneg %p601
    $region38: #{resnet_encoder_forward.11} parent=5 // pred_check_branch
      %604 = sbr.rel (%p602) target = $region40
    $region39: #{resnet_encoder_forward.11} parent=5 // pred_region
      %s605 = ssub.s32 %s9, 2
      // Predicated region
      $region41: #{resnet_encoder_forward.11} parent=39 // pred_check
        %p606 = pneg %p130
      $region42: #{resnet_encoder_forward.11} parent=39 // pred_check_branch
        %608 = sbr.rel (%p606) target = $region44
      $region43: #{resnet_encoder_forward.11} parent=39 // pred_region
        %s609 = smul.u32 16, %s20
        %p610 = scmp.lt.s32.totalorder %s609, 63
        %s611 = scalar_select %p610, %s609, 63
        %p612 = scmp.lt.s32.totalorder %s21, 0
        %s613 = scalar_select %p612, %s21, 0
        %s614 = sadd.s32 %s613, %s611
        %s615 = smul.addr %s614, 8
        %s616 = scalar_lea.vmem %s3, %s615
      $region44: #{resnet_encoder_forward.11} parent=39 // pred_fallthru
        _
    $region40: #{resnet_encoder_forward.11} parent=5 // pred_fallthru
      _
  $region6: #{resnet_encoder_forward.11} parent=0 // loop_footer
    %s13 = sadd.s32 1, %s9
  $region7: #{resnet_encoder_forward.11} parent=0 // loop_footer_branch
    %8 = sbr.rel target = $region3
  $region8: #{resnet_encoder_forward.11} parent=0 // loop_exit
    _

// kernel: resnet_encoder_forward.12
$region0: #{resnet_encoder_forward.12}
  #allocation0 [shape = 'u32[]', space=smem, size = 0x4, offset = 0x4, fixed_abs, tag = 'smem constant byte address 0x4 - core index']
  #allocation1 [shape = 'u32[144,128]{1,0:T(1,128)}', space=vmem, size = 0x12000, scoped, tag = 'internal scratch']
  %s0 = inlined_call_operand.vmem [shape: bf16[128,640], index: 0, kind: input, shape index: {}]
  %s1 = inlined_call_operand.vmem [shape: bf16[640,128], index: 1, kind: input, shape index: {}]
  %s2 = inlined_call_operand.vmem [shape: f32[1,128], index: 2, kind: input, shape index: {}]
  %s3 = inlined_call_operand.vmem [shape: f32[128,128], index: 3, kind: output, shape index: {}]
  %s4 = sld [smem:[#allocation0]]
  $region22: #{resnet_encoder_forward.12} parent=0
    _
  %s6 = ssub.s32 1, %s4
  %s7 = scalar_select 0, %s6, %s4
  // Predicated region
  $region2: #{resnet_encoder_forward.12} parent=0 // pred_check
    _
  $region3: #{resnet_encoder_forward.12} parent=0 // pred_check_branch
    %9 = sbr.rel (0) target = $region5
  $region4: #{resnet_encoder_forward.12} parent=0 // pred_region
    _
  $region5: #{resnet_encoder_forward.12} parent=0 // pred_fallthru
    _
  // Predicated region
  $region6: #{resnet_encoder_forward.12} parent=0 // pred_check
    _
  $region7: #{resnet_encoder_forward.12} parent=0 // pred_check_branch
    %11 = sbr.rel (0) target = $region9
  $region8: #{resnet_encoder_forward.12} parent=0 // pred_region
    _
  $region9: #{resnet_encoder_forward.12} parent=0 // pred_fallthru
    _
  // Predicated region
  $region10: #{resnet_encoder_forward.12} parent=0 // pred_check
    _
  $region11: #{resnet_encoder_forward.12} parent=0 // pred_check_branch
    %13 = sbr.rel (0) target = $region13
  $region12: #{resnet_encoder_forward.12} parent=0 // pred_region
    _
  $region13: #{resnet_encoder_forward.12} parent=0 // pred_fallthru
    _
  %v15 = vld [vmem:[%s0] sm:$0xff]
  %v16 = vld [vmem:[%s0 + $0x8] sm:$0xff]
  %v17 = vld [vmem:[%s0 + $0x10] sm:$0xf]
  %v18 = vld [vmem:[%s0 + $0x14] sm:$0xff]
  %v19 = vld [vmem:[%s0 + $0x1c] sm:$0xff]
  %v20 = vld [vmem:[%s0 + $0x24] sm:$0xf]
  %v21 = vld [vmem:[%s0 + $0x28] sm:$0xff]
  %v22 = vld [vmem:[%s0 + $0x30] sm:$0xff]
  %v23 = vld [vmem:[%s0 + $0x38] sm:$0xf]
  %v24 = vld [vmem:[%s0 + $0x3c] sm:$0xff]
  %v25 = vld [vmem:[%s0 + $0x44] sm:$0xff]
  %v26 = vld [vmem:[%s0 + $0x4c] sm:$0xf]
  %v27 = vld [vmem:[%s0 + $0x50] sm:$0xff]
  %v28 = vld [vmem:[%s0 + $0x58] sm:$0xff]
  %v29 = vld [vmem:[%s0 + $0x60] sm:$0xf]
  %v30 = vld [vmem:[%s0 + $0x64] sm:$0xff]
  %v31 = vld [vmem:[%s0 + $0x6c] sm:$0xff]
  %v32 = vld [vmem:[%s0 + $0x74] sm:$0xf]
  %v33 = vld [vmem:[%s0 + $0x78] sm:$0xff]
  %v34 = vld [vmem:[%s0 + $0x80] sm:$0xff]
  %v35 = vld [vmem:[%s0 + $0x88] sm:$0xf]
  %v36 = vld [vmem:[%s0 + $0x8c] sm:$0xff]
  %v37 = vld [vmem:[%s0 + $0x94] sm:$0xff]
  %v38 = vld [vmem:[%s0 + $0x9c] sm:$0xf]
  %v39 = vld [vmem:[%s0 + $0xa0] sm:$0xff]
  %v40 = vld [vmem:[%s0 + $0xa8] sm:$0xff]
  %v41 = vld [vmem:[%s0 + $0xb0] sm:$0xf]
  %v42 = vld [vmem:[%s0 + $0xb4] sm:$0xff]
  %v43 = vld [vmem:[%s0 + $0xbc] sm:$0xff]
  %v44 = vld [vmem:[%s0 + $0xc4] sm:$0xf]
  %v45 = vld [vmem:[%s0 + $0xc8] sm:$0xff]
  %v46 = vld [vmem:[%s0 + $0xd0] sm:$0xff]
  %v47 = vld [vmem:[%s0 + $0xd8] sm:$0xf]
  %v48 = vld [vmem:[%s0 + $0xdc] sm:$0xff]
  %v49 = vld [vmem:[%s0 + $0xe4] sm:$0xff]
  %v50 = vld [vmem:[%s0 + $0xec] sm:$0xf]
  %v51 = vld [vmem:[%s0 + $0xf0] sm:$0xff]
  %v52 = vld [vmem:[%s0 + $0xf8] sm:$0xff]
  %v53 = vld [vmem:[%s0 + $0x100] sm:$0xf]
  %v54 = vld [vmem:[%s0 + $0x104] sm:$0xff]
  %v55 = vld [vmem:[%s0 + $0x10c] sm:$0xff]
  %v56 = vld [vmem:[%s0 + $0x114] sm:$0xf]
  %v57 = vld [vmem:[%s0 + $0x118] sm:$0xff]
  %v58 = vld [vmem:[%s0 + $0x120] sm:$0xff]
  %v59 = vld [vmem:[%s0 + $0x128] sm:$0xf]
  %v60 = vld [vmem:[%s0 + $0x12c] sm:$0xff]
  %v61 = vld [vmem:[%s0 + $0x134] sm:$0xff]
  %v62 = vld [vmem:[%s0 + $0x13c] sm:$0xf]
  %v63 = vld [vmem:[%s1] sm:$0xf]
  %v64 = vld [vmem:[%s1 + $0x4] sm:$0xf]
  %v65 = vld [vmem:[%s1 + $0x8] sm:$0xf]
  %v66 = vld [vmem:[%s1 + $0xc] sm:$0xf]
  %v67 = vld [vmem:[%s1 + $0x10] sm:$0xf]
  %v68 = vld [vmem:[%s1 + $0x14] sm:$0xf]
  %v69 = vld [vmem:[%s1 + $0x18] sm:$0xf]
  %v70 = vld [vmem:[%s1 + $0x1c] sm:$0xf]
  %v71 = vld [vmem:[%s1 + $0x20] sm:$0xf]
  %v72 = vld [vmem:[%s1 + $0x24] sm:$0xf]
  %v73 = vld [vmem:[%s1 + $0x28] sm:$0xf]
  %v74 = vld [vmem:[%s1 + $0x2c] sm:$0xf]
  %v75 = vld [vmem:[%s1 + $0x30] sm:$0xf]
  %v76 = vld [vmem:[%s1 + $0x34] sm:$0xf]
  %v77 = vld [vmem:[%s1 + $0x38] sm:$0xf]
  %v78 = vld [vmem:[%s1 + $0x3c] sm:$0xf]
  %v79 = vld [vmem:[%s1 + $0x40] sm:$0xf]
  %v80 = vld [vmem:[%s1 + $0x44] sm:$0xf]
  %v81 = vld [vmem:[%s1 + $0x48] sm:$0xf]
  %v82 = vld [vmem:[%s1 + $0x4c] sm:$0xf]
  %v83 = vld [vmem:[%s1 + $0x50] sm:$0xf]
  %v84 = vld [vmem:[%s1 + $0x54] sm:$0xf]
  %v85 = vld [vmem:[%s1 + $0x58] sm:$0xf]
  %v86 = vld [vmem:[%s1 + $0x5c] sm:$0xf]
  %v87 = vld [vmem:[%s1 + $0x60] sm:$0xf]
  %v88 = vld [vmem:[%s1 + $0x64] sm:$0xf]
  %v89 = vld [vmem:[%s1 + $0x68] sm:$0xf]
  %v90 = vld [vmem:[%s1 + $0x6c] sm:$0xf]
  %v91 = vld [vmem:[%s1 + $0x70] sm:$0xf]
  %v92 = vld [vmem:[%s1 + $0x74] sm:$0xf]
  %v93 = vld [vmem:[%s1 + $0x78] sm:$0xf]
  %v94 = vld [vmem:[%s1 + $0x7c] sm:$0xf]
  %v95 = vld [vmem:[%s1 + $0x80] sm:$0xf]
  %v96 = vld [vmem:[%s1 + $0x84] sm:$0xf]
  %v97 = vld [vmem:[%s1 + $0x88] sm:$0xf]
  %v98 = vld [vmem:[%s1 + $0x8c] sm:$0xf]
  %v99 = vld [vmem:[%s1 + $0x90] sm:$0xf]
  %v100 = vld [vmem:[%s1 + $0x94] sm:$0xf]
  %v101 = vld [vmem:[%s1 + $0x98] sm:$0xf]
  %v102 = vld [vmem:[%s1 + $0x9c] sm:$0xf]
  %v103 = vld [vmem:[%s1 + $0xa0] sm:$0xf]
  %v104 = vld [vmem:[%s1 + $0xa4] sm:$0xf]
  %v105 = vld [vmem:[%s1 + $0xa8] sm:$0xf]
  %v106 = vld [vmem:[%s1 + $0xac] sm:$0xf]
  %v107 = vld [vmem:[%s1 + $0xb0] sm:$0xf]
  %v108 = vld [vmem:[%s1 + $0xb4] sm:$0xf]
  %v109 = vld [vmem:[%s1 + $0xb8] sm:$0xf]
  %v110 = vld [vmem:[%s1 + $0xbc] sm:$0xf]
  %v111 = vld [vmem:[%s1 + $0xc0] sm:$0xf]
  %v112 = vld [vmem:[%s1 + $0xc4] sm:$0xf]
  %v113 = vld [vmem:[%s1 + $0xc8] sm:$0xf]
  %v114 = vld [vmem:[%s1 + $0xcc] sm:$0xf]
  %v115 = vld [vmem:[%s1 + $0xd0] sm:$0xf]
  %v116 = vld [vmem:[%s1 + $0xd4] sm:$0xf]
  %v117 = vld [vmem:[%s1 + $0xd8] sm:$0xf]
  %v118 = vld [vmem:[%s1 + $0xdc] sm:$0xf]
  %v119 = vld [vmem:[%s1 + $0xe0] sm:$0xf]
  %v120 = vld [vmem:[%s1 + $0xe4] sm:$0xf]
  %v121 = vld [vmem:[%s1 + $0xe8] sm:$0xf]
  %v122 = vld [vmem:[%s1 + $0xec] sm:$0xf]
  %v123 = vld [vmem:[%s1 + $0xf0] sm:$0xf]
  %v124 = vld [vmem:[%s1 + $0xf4] sm:$0xf]
  %v125 = vld [vmem:[%s1 + $0xf8] sm:$0xf]
  %v126 = vld [vmem:[%s1 + $0xfc] sm:$0xf]
  %v127 = vld [vmem:[%s1 + $0x100] sm:$0xf]
  %v128 = vld [vmem:[%s1 + $0x104] sm:$0xf]
  %v129 = vld [vmem:[%s1 + $0x108] sm:$0xf]
  %v130 = vld [vmem:[%s1 + $0x10c] sm:$0xf]
  %v131 = vld [vmem:[%s1 + $0x110] sm:$0xf]
  %v132 = vld [vmem:[%s1 + $0x114] sm:$0xf]
  %v133 = vld [vmem:[%s1 + $0x118] sm:$0xf]
  %v134 = vld [vmem:[%s1 + $0x11c] sm:$0xf]
  %v135 = vld [vmem:[%s1 + $0x120] sm:$0xf]
  %v136 = vld [vmem:[%s1 + $0x124] sm:$0xf]
  %v137 = vld [vmem:[%s1 + $0x128] sm:$0xf]
  %v138 = vld [vmem:[%s1 + $0x12c] sm:$0xf]
  %v139 = vld [vmem:[%s1 + $0x130] sm:$0xf]
  %v140 = vld [vmem:[%s1 + $0x134] sm:$0xf]
  %v141 = vld [vmem:[%s1 + $0x138] sm:$0xf]
  %v142 = vld [vmem:[%s1 + $0x13c] sm:$0xf]
  %v143 = vld [vmem:[%s2] sm:$0x1]
  %v145 = vlaneseq
  %v146 = vshrl.u32 %v145, 7
  %v147 = vsub.s32 0, %v146
  %v148 = vrot.slane %v143, %v147
  %v198 = vunpack.c.l.b16 %v15
  %v199 = vunpack.c.h.b16 %v15
  %v200 = vunpack.c.l.b16 %v16
  %v201 = vunpack.c.h.b16 %v16
  %v202 = vunpack.c.l.b16 %v17
  %v203 = vunpack.c.l.b16 %v18
  %v204 = vunpack.c.h.b16 %v18
  %v205 = vunpack.c.l.b16 %v19
  %v206 = vunpack.c.h.b16 %v19
  %v207 = vunpack.c.l.b16 %v20
  %v208 = vunpack.c.l.b16 %v21
  %v209 = vunpack.c.h.b16 %v21
  %v210 = vunpack.c.l.b16 %v22
  %v211 = vunpack.c.h.b16 %v22
  %v212 = vunpack.c.l.b16 %v23
  %v213 = vunpack.c.l.b16 %v24
  %v214 = vunpack.c.h.b16 %v24
  %v215 = vunpack.c.l.b16 %v25
  %v216 = vunpack.c.h.b16 %v25
  %v217 = vunpack.c.l.b16 %v26
  %v218 = vunpack.c.l.b16 %v27
  %v219 = vunpack.c.h.b16 %v27
  %v220 = vunpack.c.l.b16 %v28
  %v221 = vunpack.c.h.b16 %v28
  %v222 = vunpack.c.l.b16 %v29
  %v223 = vunpack.c.l.b16 %v30
  %v224 = vunpack.c.h.b16 %v30
  %v225 = vunpack.c.l.b16 %v31
  %v226 = vunpack.c.h.b16 %v31
  %v227 = vunpack.c.l.b16 %v32
  %v228 = vunpack.c.l.b16 %v33
  %v229 = vunpack.c.h.b16 %v33
  %v230 = vunpack.c.l.b16 %v34
  %v231 = vunpack.c.h.b16 %v34
  %v232 = vunpack.c.l.b16 %v35
  %v233 = vunpack.c.l.b16 %v36
  %v234 = vunpack.c.h.b16 %v36
  %v235 = vunpack.c.l.b16 %v37
  %v236 = vunpack.c.h.b16 %v37
  %v237 = vunpack.c.l.b16 %v38
  %v238 = vunpack.c.l.b16 %v39
  %v239 = vunpack.c.h.b16 %v39
  %v240 = vunpack.c.l.b16 %v40
  %v241 = vunpack.c.h.b16 %v40
  %v242 = vunpack.c.l.b16 %v41
  %v243 = vunpack.c.l.b16 %v42
  %v244 = vunpack.c.h.b16 %v42
  %v245 = vunpack.c.l.b16 %v43
  %v246 = vunpack.c.h.b16 %v43
  %v247 = vunpack.c.l.b16 %v44
  %v248 = vunpack.c.l.b16 %v45
  %v249 = vunpack.c.h.b16 %v45
  %v250 = vunpack.c.l.b16 %v46
  %v251 = vunpack.c.h.b16 %v46
  %v252 = vunpack.c.l.b16 %v47
  %v253 = vunpack.c.l.b16 %v48
  %v254 = vunpack.c.h.b16 %v48
  %v255 = vunpack.c.l.b16 %v49
  %v256 = vunpack.c.h.b16 %v49
  %v257 = vunpack.c.l.b16 %v50
  %v258 = vunpack.c.l.b16 %v51
  %v259 = vunpack.c.h.b16 %v51
  %v260 = vunpack.c.l.b16 %v52
  %v261 = vunpack.c.h.b16 %v52
  %v262 = vunpack.c.l.b16 %v53
  %v263 = vunpack.c.l.b16 %v54
  %v264 = vunpack.c.h.b16 %v54
  %v265 = vunpack.c.l.b16 %v55
  %v266 = vunpack.c.h.b16 %v55
  %v267 = vunpack.c.l.b16 %v56
  %v268 = vunpack.c.l.b16 %v57
  %v269 = vunpack.c.h.b16 %v57
  %v270 = vunpack.c.l.b16 %v58
  %v271 = vunpack.c.h.b16 %v58
  %v272 = vunpack.c.l.b16 %v59
  %v273 = vunpack.c.l.b16 %v60
  %v274 = vunpack.c.h.b16 %v60
  %v275 = vunpack.c.l.b16 %v61
  %v276 = vunpack.c.h.b16 %v61
  %v277 = vunpack.c.l.b16 %v62
  %v278 = vpack.c.b16 %v203, %v198
  %v279 = vpack.c.b16 %v204, %v199
  %v280 = vpack.c.b16 %v205, %v200
  %v281 = vpack.c.b16 %v206, %v201
  %v282 = vpack.c.b16 %v207, %v202
  %v283 = vpack.c.b16 %v213, %v208
  %v284 = vpack.c.b16 %v214, %v209
  %v285 = vpack.c.b16 %v215, %v210
  %v286 = vpack.c.b16 %v216, %v211
  %v287 = vpack.c.b16 %v217, %v212
  %v288 = vpack.c.b16 %v223, %v218
  %v289 = vpack.c.b16 %v224, %v219
  %v290 = vpack.c.b16 %v225, %v220
  %v291 = vpack.c.b16 %v226, %v221
  %v292 = vpack.c.b16 %v227, %v222
  %v293 = vpack.c.b16 %v233, %v228
  %v294 = vpack.c.b16 %v234, %v229
  %v295 = vpack.c.b16 %v235, %v230
  %v296 = vpack.c.b16 %v236, %v231
  %v297 = vpack.c.b16 %v237, %v232
  %v298 = vpack.c.b16 %v243, %v238
  %v299 = vpack.c.b16 %v244, %v239
  %v300 = vpack.c.b16 %v245, %v240
  %v301 = vpack.c.b16 %v246, %v241
  %v302 = vpack.c.b16 %v247, %v242
  %v303 = vpack.c.b16 %v253, %v248
  %v304 = vpack.c.b16 %v254, %v249
  %v305 = vpack.c.b16 %v255, %v250
  %v306 = vpack.c.b16 %v256, %v251
  %v307 = vpack.c.b16 %v257, %v252
  %v308 = vpack.c.b16 %v263, %v258
  %v309 = vpack.c.b16 %v264, %v259
  %v310 = vpack.c.b16 %v265, %v260
  %v311 = vpack.c.b16 %v266, %v261
  %v312 = vpack.c.b16 %v267, %v262
  %v313 = vpack.c.b16 %v273, %v268
  %v314 = vpack.c.b16 %v274, %v269
  %v315 = vpack.c.b16 %v275, %v270
  %v316 = vpack.c.b16 %v276, %v271
  %v317 = vpack.c.b16 %v277, %v272
  %v438 = vunpack.c.l.b16 %v63
  %v439 = vunpack.c.l.b16 %v64
  %v440 = vunpack.c.l.b16 %v65
  %v441 = vunpack.c.l.b16 %v66
  %v442 = vunpack.c.l.b16 %v67
  %v443 = vunpack.c.l.b16 %v68
  %v444 = vunpack.c.l.b16 %v69
  %v445 = vunpack.c.l.b16 %v70
  %v446 = vunpack.c.l.b16 %v71
  %v447 = vunpack.c.l.b16 %v72
  %v448 = vunpack.c.l.b16 %v73
  %v449 = vunpack.c.l.b16 %v74
  %v450 = vunpack.c.l.b16 %v75
  %v451 = vunpack.c.l.b16 %v76
  %v452 = vunpack.c.l.b16 %v77
  %v453 = vunpack.c.l.b16 %v78
  %v454 = vunpack.c.l.b16 %v79
  %v455 = vunpack.c.l.b16 %v80
  %v456 = vunpack.c.l.b16 %v81
  %v457 = vunpack.c.l.b16 %v82
  %v458 = vunpack.c.l.b16 %v83
  %v459 = vunpack.c.l.b16 %v84
  %v460 = vunpack.c.l.b16 %v85
  %v461 = vunpack.c.l.b16 %v86
  %v462 = vunpack.c.l.b16 %v87
  %v463 = vunpack.c.l.b16 %v88
  %v464 = vunpack.c.l.b16 %v89
  %v465 = vunpack.c.l.b16 %v90
  %v466 = vunpack.c.l.b16 %v91
  %v467 = vunpack.c.l.b16 %v92
  %v468 = vunpack.c.l.b16 %v93
  %v469 = vunpack.c.l.b16 %v94
  %v470 = vunpack.c.l.b16 %v95
  %v471 = vunpack.c.l.b16 %v96
  %v472 = vunpack.c.l.b16 %v97
  %v473 = vunpack.c.l.b16 %v98
  %v474 = vunpack.c.l.b16 %v99
  %v475 = vunpack.c.l.b16 %v100
  %v476 = vunpack.c.l.b16 %v101
  %v477 = vunpack.c.l.b16 %v102
  %v478 = vunpack.c.l.b16 %v103
  %v479 = vunpack.c.l.b16 %v104
  %v480 = vunpack.c.l.b16 %v105
  %v481 = vunpack.c.l.b16 %v106
  %v482 = vunpack.c.l.b16 %v107
  %v483 = vunpack.c.l.b16 %v108
  %v484 = vunpack.c.l.b16 %v109
  %v485 = vunpack.c.l.b16 %v110
  %v486 = vunpack.c.l.b16 %v111
  %v487 = vunpack.c.l.b16 %v112
  %v488 = vunpack.c.l.b16 %v113
  %v489 = vunpack.c.l.b16 %v114
  %v490 = vunpack.c.l.b16 %v115
  %v491 = vunpack.c.l.b16 %v116
  %v492 = vunpack.c.l.b16 %v117
  %v493 = vunpack.c.l.b16 %v118
  %v494 = vunpack.c.l.b16 %v119
  %v495 = vunpack.c.l.b16 %v120
  %v496 = vunpack.c.l.b16 %v121
  %v497 = vunpack.c.l.b16 %v122
  %v498 = vunpack.c.l.b16 %v123
  %v499 = vunpack.c.l.b16 %v124
  %v500 = vunpack.c.l.b16 %v125
  %v501 = vunpack.c.l.b16 %v126
  %v502 = vunpack.c.l.b16 %v127
  %v503 = vunpack.c.l.b16 %v128
  %v504 = vunpack.c.l.b16 %v129
  %v505 = vunpack.c.l.b16 %v130
  %v506 = vunpack.c.l.b16 %v131
  %v507 = vunpack.c.l.b16 %v132
  %v508 = vunpack.c.l.b16 %v133
  %v509 = vunpack.c.l.b16 %v134
  %v510 = vunpack.c.l.b16 %v135
  %v511 = vunpack.c.l.b16 %v136
  %v512 = vunpack.c.l.b16 %v137
  %v513 = vunpack.c.l.b16 %v138
  %v514 = vunpack.c.l.b16 %v139
  %v515 = vunpack.c.l.b16 %v140
  %v516 = vunpack.c.l.b16 %v141
  %v517 = vunpack.c.l.b16 %v142
  %v518 = vpack.c.b16 %v439, %v438
  %v519 = vpack.c.b16 %v441, %v440
  %v520 = vpack.c.b16 %v443, %v442
  %v521 = vpack.c.b16 %v445, %v444
  %v522 = vpack.c.b16 %v447, %v446
  %v523 = vpack.c.b16 %v449, %v448
  %v524 = vpack.c.b16 %v451, %v450
  %v525 = vpack.c.b16 %v453, %v452
  %v526 = vpack.c.b16 %v455, %v454
  %v527 = vpack.c.b16 %v457, %v456
  %v528 = vpack.c.b16 %v459, %v458
  %v529 = vpack.c.b16 %v461, %v460
  %v530 = vpack.c.b16 %v463, %v462
  %v531 = vpack.c.b16 %v465, %v464
  %v532 = vpack.c.b16 %v467, %v466
  %v533 = vpack.c.b16 %v469, %v468
  %v534 = vpack.c.b16 %v471, %v470
  %v535 = vpack.c.b16 %v473, %v472
  %v536 = vpack.c.b16 %v475, %v474
  %v537 = vpack.c.b16 %v477, %v476
  %v538 = vpack.c.b16 %v479, %v478
  %v539 = vpack.c.b16 %v481, %v480
  %v540 = vpack.c.b16 %v483, %v482
  %v541 = vpack.c.b16 %v485, %v484
  %v542 = vpack.c.b16 %v487, %v486
  %v543 = vpack.c.b16 %v489, %v488
  %v544 = vpack.c.b16 %v491, %v490
  %v545 = vpack.c.b16 %v493, %v492
  %v546 = vpack.c.b16 %v495, %v494
  %v547 = vpack.c.b16 %v497, %v496
  %v548 = vpack.c.b16 %v499, %v498
  %v549 = vpack.c.b16 %v501, %v500
  %v550 = vpack.c.b16 %v503, %v502
  %v551 = vpack.c.b16 %v505, %v504
  %v552 = vpack.c.b16 %v507, %v506
  %v553 = vpack.c.b16 %v509, %v508
  %v554 = vpack.c.b16 %v511, %v510
  %v555 = vpack.c.b16 %v513, %v512
  %v556 = vpack.c.b16 %v515, %v514
  %v557 = vpack.c.b16 %v517, %v516
  %598 = vmatprep.subr.bf16.mxu0 0
  %599 = vmatpush1.bf16.msra.mxu0 %v518
  %600 = vmatprep.subr.bf16.mxu0 0
  %601 = vmatpush1.bf16.msra.mxu0 %v519
  %602 = vmatprep.subr.bf16.mxu0 0
  %603 = vmatpush1.bf16.msra.mxu0 %v520
  %604 = vmatprep.subr.bf16.mxu0 0
  %605 = vmatpush1.bf16.msra.mxu0 %v521
  %606 = vmatprep.subr.bf16.mxu0 0
  %607 = vmatpush1.bf16.msra.mxu0 %v522
  %608 = vmatprep.subr.bf16.mxu0 0
  %609 = vmatpush1.bf16.msra.mxu0 %v523
  %610 = vmatprep.subr.bf16.mxu0 0
  %611 = vmatpush1.bf16.msra.mxu0 %v524
  %612 = vmatprep.subr.bf16.mxu0 0
  %613 = vmatpush1.bf16.msra.mxu0 %v525
  %614 = vmatprep.subr.bf16.mxu0 0
  %615 = vmatpush1.bf16.msra.mxu0 %v526
  %616 = vmatprep.subr.bf16.mxu0 0
  %617 = vmatpush1.bf16.msra.mxu0 %v527
  %618 = vmatprep.subr.bf16.mxu0 0
  %619 = vmatpush1.bf16.msra.mxu0 %v528
  %620 = vmatprep.subr.bf16.mxu0 0
  %621 = vmatpush1.bf16.msra.mxu0 %v529
  %622 = vmatprep.subr.bf16.mxu0 0
  %623 = vmatpush1.bf16.msra.mxu0 %v530
  %624 = vmatprep.subr.bf16.mxu0 0
  %625 = vmatpush1.bf16.msra.mxu0 %v531
  %626 = vmatprep.subr.bf16.mxu0 0
  %627 = vmatpush1.bf16.msra.mxu0 %v532
  %628 = vmatprep.subr.bf16.mxu0 0
  %629 = vmatpush1.bf16.msra.mxu0 %v533
  %630 = vmatprep.mubr.bf16.mxu0 %v279
  %631 = vmatmul.mubr.bf16.gmra.mrb[0].mxu0 %v278
  %v632 = vpop.f32.mrb[0].mxu0
  %v633 = vadd.f32 %v148, %v632
  %v634 = vpop.f32.mrb[0].mxu0
  %v635 = vpop.f32.mrb[0].mxu0
  %v636 = vadd.f32 %v148, %v635
  %v637 = vpop.f32.mrb[0].mxu0
  %638 = vmatprep.mubr.bf16.mxu0 %v284
  %639 = vmatmul.mubr.bf16.gmra.mrb[0].mxu0 %v283
  %v640 = vpop.f32.mrb[0].mxu0
  %v641 = vadd.f32 %v148, %v640
  %v642 = vpop.f32.mrb[0].mxu0
  %v643 = vpop.f32.mrb[0].mxu0
  %v644 = vadd.f32 %v148, %v643
  %v645 = vpop.f32.mrb[0].mxu0
  %646 = vmatprep.mubr.bf16.mxu0 %v289
  %647 = vmatmul.mubr.bf16.gmra.mrb[0].mxu0 %v288
  %v648 = vpop.f32.mrb[0].mxu0
  %v649 = vadd.f32 %v148, %v648
  %v650 = vpop.f32.mrb[0].mxu0
  %v651 = vpop.f32.mrb[0].mxu0
  %v652 = vadd.f32 %v148, %v651
  %v653 = vpop.f32.mrb[0].mxu0
  %654 = vmatprep.mubr.bf16.mxu0 %v294
  %655 = vmatmul.mubr.bf16.gmra.mrb[0].mxu0 %v293
  %v656 = vpop.f32.mrb[0].mxu0
  %v657 = vadd.f32 %v148, %v656
  %v658 = vpop.f32.mrb[0].mxu0
  %v659 = vpop.f32.mrb[0].mxu0
  %v660 = vadd.f32 %v148, %v659
  %v661 = vpop.f32.mrb[0].mxu0
  %662 = vmatprep.mubr.bf16.mxu0 %v299
  %663 = vmatmul.mubr.bf16.gmra.mrb[0].mxu0 %v298
  %v664 = vpop.f32.mrb[0].mxu0
  %v665 = vadd.f32 %v148, %v664
  %v666 = vpop.f32.mrb[0].mxu0
  %v667 = vpop.f32.mrb[0].mxu0
  %v668 = vadd.f32 %v148, %v667
  %v669 = vpop.f32.mrb[0].mxu0
  %670 = vmatprep.mubr.bf16.mxu0 %v304
  %671 = vmatmul.mubr.bf16.gmra.mrb[0].mxu0 %v303
  %v672 = vpop.f32.mrb[0].mxu0
  %v673 = vadd.f32 %v148, %v672
  %v674 = vpop.f32.mrb[0].mxu0
  %v675 = vpop.f32.mrb[0].mxu0
  %v676 = vadd.f32 %v148, %v675
  %v677 = vpop.f32.mrb[0].mxu0
  %678 = vmatprep.mubr.bf16.mxu0 %v309
  %679 = vmatmul.mubr.bf16.gmra.mrb[0].mxu0 %v308
  %v680 = vpop.f32.mrb[0].mxu0
  %v681 = vadd.f32 %v148, %v680
  %v682 = vpop.f32.mrb[0].mxu0
  %v683 = vpop.f32.mrb[0].mxu0
  %v684 = vadd.f32 %v148, %v683
  %v685 = vpop.f32.mrb[0].mxu0
  %686 = vmatprep.mubr.bf16.mxu0 %v314
  %687 = vmatmul.mubr.bf16.gmra.mrb[0].mxu0 %v313
  %v688 = vpop.f32.mrb[0].mxu0
  %v689 = vadd.f32 %v148, %v688
  %v690 = vpop.f32.mrb[0].mxu0
  %v691 = vpop.f32.mrb[0].mxu0
  %v692 = vadd.f32 %v148, %v691
  %v693 = vpop.f32.mrb[0].mxu0
  %694 = vdwg.mxu0
  %695 = vmatprep.subr.bf16.mxu0 0
  %696 = vmatpush1.bf16.msra.mxu0 %v534
  %697 = vmatprep.subr.bf16.mxu0 0
  %698 = vmatpush1.bf16.msra.mxu0 %v535
  %699 = vmatprep.subr.bf16.mxu0 0
  %700 = vmatpush1.bf16.msra.mxu0 %v536
  %701 = vmatprep.subr.bf16.mxu0 0
  %702 = vmatpush1.bf16.msra.mxu0 %v537
  %703 = vmatprep.subr.bf16.mxu0 0
  %704 = vmatpush1.bf16.msra.mxu0 %v538
  %705 = vmatprep.subr.bf16.mxu0 0
  %706 = vmatpush1.bf16.msra.mxu0 %v539
  %707 = vmatprep.subr.bf16.mxu0 0
  %708 = vmatpush1.bf16.msra.mxu0 %v540
  %709 = vmatprep.subr.bf16.mxu0 0
  %710 = vmatpush1.bf16.msra.mxu0 %v541
  %711 = vmatprep.subr.bf16.mxu0 0
  %712 = vmatpush1.bf16.msra.mxu0 %v542
  %713 = vmatprep.subr.bf16.mxu0 0
  %714 = vmatpush1.bf16.msra.mxu0 %v543
  %715 = vmatprep.subr.bf16.mxu0 0
  %716 = vmatpush1.bf16.msra.mxu0 %v544
  %717 = vmatprep.subr.bf16.mxu0 0
  %718 = vmatpush1.bf16.msra.mxu0 %v545
  %719 = vmatprep.subr.bf16.mxu0 0
  %720 = vmatpush1.bf16.msra.mxu0 %v546
  %721 = vmatprep.subr.bf16.mxu0 0
  %722 = vmatpush1.bf16.msra.mxu0 %v547
  %723 = vmatprep.subr.bf16.mxu0 0
  %724 = vmatpush1.bf16.msra.mxu0 %v548
  %725 = vmatprep.subr.bf16.mxu0 0
  %726 = vmatpush1.bf16.msra.mxu0 %v549
  %727 = vmatprep.mubr.bf16.mxu0 %v281
  %728 = vmatmul.mubr.bf16.gmra.mrb[0].mxu0 %v280
  %v729 = vpop.f32.mrb[0].mxu0
  %v730 = vadd.f32 %v633, %v729
  %v731 = vpop.f32.mrb[0].mxu0
  %v732 = vpop.f32.mrb[0].mxu0
  %v733 = vadd.f32 %v636, %v732
  %v734 = vpop.f32.mrb[0].mxu0
  %735 = vmatprep.mubr.bf16.mxu0 %v286
  %736 = vmatmul.mubr.bf16.gmra.mrb[0].mxu0 %v285
  %v737 = vpop.f32.mrb[0].mxu0
  %v738 = vadd.f32 %v641, %v737
  %v739 = vpop.f32.mrb[0].mxu0
  %v740 = vpop.f32.mrb[0].mxu0
  %v741 = vadd.f32 %v644, %v740
  %v742 = vpop.f32.mrb[0].mxu0
  %743 = vmatprep.mubr.bf16.mxu0 %v291
  %744 = vmatmul.mubr.bf16.gmra.mrb[0].mxu0 %v290
  %v745 = vpop.f32.mrb[0].mxu0
  %v746 = vadd.f32 %v649, %v745
  %v747 = vpop.f32.mrb[0].mxu0
  %v748 = vpop.f32.mrb[0].mxu0
  %v749 = vadd.f32 %v652, %v748
  %v750 = vpop.f32.mrb[0].mxu0
  %751 = vmatprep.mubr.bf16.mxu0 %v296
  %752 = vmatmul.mubr.bf16.gmra.mrb[0].mxu0 %v295
  %v753 = vpop.f32.mrb[0].mxu0
  %v754 = vadd.f32 %v657, %v753
  %v755 = vpop.f32.mrb[0].mxu0
  %v756 = vpop.f32.mrb[0].mxu0
  %v757 = vadd.f32 %v660, %v756
  %v758 = vpop.f32.mrb[0].mxu0
  %759 = vmatprep.mubr.bf16.mxu0 %v301
  %760 = vmatmul.mubr.bf16.gmra.mrb[0].mxu0 %v300
  %v761 = vpop.f32.mrb[0].mxu0
  %v762 = vadd.f32 %v665, %v761
  %v763 = vpop.f32.mrb[0].mxu0
  %v764 = vpop.f32.mrb[0].mxu0
  %v765 = vadd.f32 %v668, %v764
  %v766 = vpop.f32.mrb[0].mxu0
  %767 = vmatprep.mubr.bf16.mxu0 %v306
  %768 = vmatmul.mubr.bf16.gmra.mrb[0].mxu0 %v305
  %v769 = vpop.f32.mrb[0].mxu0
  %v770 = vadd.f32 %v673, %v769
  %v771 = vpop.f32.mrb[0].mxu0
  %v772 = vpop.f32.mrb[0].mxu0
  %v773 = vadd.f32 %v676, %v772
  %v774 = vpop.f32.mrb[0].mxu0
  %775 = vmatprep.mubr.bf16.mxu0 %v311
  %776 = vmatmul.mubr.bf16.gmra.mrb[0].mxu0 %v310
  %v777 = vpop.f32.mrb[0].mxu0
  %v778 = vadd.f32 %v681, %v777
  %v779 = vpop.f32.mrb[0].mxu0
  %v780 = vpop.f32.mrb[0].mxu0
  %v781 = vadd.f32 %v684, %v780
  %v782 = vpop.f32.mrb[0].mxu0
  %783 = vmatprep.mubr.bf16.mxu0 %v316
  %784 = vmatmul.mubr.bf16.gmra.mrb[0].mxu0 %v315
  %v785 = vpop.f32.mrb[0].mxu0
  %v786 = vadd.f32 %v689, %v785
  %v787 = vpop.f32.mrb[0].mxu0
  %v788 = vpop.f32.mrb[0].mxu0
  %v789 = vadd.f32 %v692, %v788
  %v790 = vpop.f32.mrb[0].mxu0
  %791 = vdwg.mxu0
  %792 = vmatprep.subr.bf16.mxu0 0
  %793 = vmatpush1.bf16.msra.mxu0 %v550
  %794 = vmatprep.subr.bf16.mxu0 0
  %795 = vmatpush1.bf16.msra.mxu0 %v551
  %796 = vmatprep.subr.bf16.mxu0 0
  %797 = vmatpush1.bf16.msra.mxu0 %v552
  %798 = vmatprep.subr.bf16.mxu0 0
  %799 = vmatpush1.bf16.msra.mxu0 %v553
  %800 = vmatprep.subr.bf16.mxu0 0
  %801 = vmatpush1.bf16.msra.mxu0 %v554
  %802 = vmatprep.subr.bf16.mxu0 0
  %803 = vmatpush1.bf16.msra.mxu0 %v555
  %804 = vmatprep.subr.bf16.mxu0 0
  %805 = vmatpush1.bf16.msra.mxu0 %v556
  %806 = vmatprep.subr.bf16.mxu0 0
  %807 = vmatpush1.bf16.msra.mxu0 %v557
  %808 = vmatprep.subr.bf16.mxu0 0
  %809 = vmatpush1.bf16.msra.mxu0 0
  %810 = vmatprep.subr.bf16.mxu0 0
  %811 = vmatpush1.bf16.msra.mxu0 0
  %812 = vmatprep.subr.bf16.mxu0 0
  %813 = vmatpush1.bf16.msra.mxu0 0
  %814 = vmatprep.subr.bf16.mxu0 0
  %815 = vmatpush1.bf16.msra.mxu0 0
  %816 = vmatprep.subr.bf16.mxu0 0
  %817 = vmatpush1.bf16.msra.mxu0 0
  %818 = vmatprep.subr.bf16.mxu0 0
  %819 = vmatpush1.bf16.msra.mxu0 0
  %820 = vmatprep.subr.bf16.mxu0 0
  %821 = vmatpush1.bf16.msra.mxu0 0
  %822 = vmatprep.subr.bf16.mxu0 0
  %823 = vmatpush1.bf16.msra.mxu0 0
  %824 = vmatprep.mubr.bf16.mxu0 0
  %825 = vmatmul.mubr.bf16.gmra.mrb[0].mxu0 %v282
  %v826 = vpop.f32.mrb[0].mxu0
  %v827 = vadd.f32 %v730, %v826
  %v828 = vpop.f32.mrb[0].mxu0
  %v829 = vpop.f32.mrb[0].mxu0
  %v830 = vadd.f32 %v733, %v829
  %v831 = vpop.f32.mrb[0].mxu0
  %832 = vmatprep.mubr.bf16.mxu0 0
  %833 = vmatmul.mubr.bf16.gmra.mrb[0].mxu0 %v287
  %v834 = vpop.f32.mrb[0].mxu0
  %v835 = vadd.f32 %v738, %v834
  %v836 = vpop.f32.mrb[0].mxu0
  %v837 = vpop.f32.mrb[0].mxu0
  %v838 = vadd.f32 %v741, %v837
  %v839 = vpop.f32.mrb[0].mxu0
  %840 = vmatprep.mubr.bf16.mxu0 0
  %841 = vmatmul.mubr.bf16.gmra.mrb[0].mxu0 %v292
  %v842 = vpop.f32.mrb[0].mxu0
  %v843 = vadd.f32 %v746, %v842
  %v844 = vpop.f32.mrb[0].mxu0
  %v845 = vpop.f32.mrb[0].mxu0
  %v846 = vadd.f32 %v749, %v845
  %v847 = vpop.f32.mrb[0].mxu0
  %848 = vmatprep.mubr.bf16.mxu0 0
  %849 = vmatmul.mubr.bf16.gmra.mrb[0].mxu0 %v297
  %v850 = vpop.f32.mrb[0].mxu0
  %v851 = vadd.f32 %v754, %v850
  %v852 = vpop.f32.mrb[0].mxu0
  %v853 = vpop.f32.mrb[0].mxu0
  %v854 = vadd.f32 %v757, %v853
  %v855 = vpop.f32.mrb[0].mxu0
  %856 = vmatprep.mubr.bf16.mxu0 0
  %857 = vmatmul.mubr.bf16.gmra.mrb[0].mxu0 %v302
  %v858 = vpop.f32.mrb[0].mxu0
  %v859 = vadd.f32 %v762, %v858
  %v860 = vpop.f32.mrb[0].mxu0
  %v861 = vpop.f32.mrb[0].mxu0
  %v862 = vadd.f32 %v765, %v861
  %v863 = vpop.f32.mrb[0].mxu0
  %864 = vmatprep.mubr.bf16.mxu0 0
  %865 = vmatmul.mubr.bf16.gmra.mrb[0].mxu0 %v307
  %v866 = vpop.f32.mrb[0].mxu0
  %v867 = vadd.f32 %v770, %v866
  %v868 = vpop.f32.mrb[0].mxu0
  %v869 = vpop.f32.mrb[0].mxu0
  %v870 = vadd.f32 %v773, %v869
  %v871 = vpop.f32.mrb[0].mxu0
  %872 = vmatprep.mubr.bf16.mxu0 0
  %873 = vmatmul.mubr.bf16.gmra.mrb[0].mxu0 %v312
  %v874 = vpop.f32.mrb[0].mxu0
  %v875 = vadd.f32 %v778, %v874
  %v876 = vpop.f32.mrb[0].mxu0
  %v877 = vpop.f32.mrb[0].mxu0
  %v878 = vadd.f32 %v781, %v877
  %v879 = vpop.f32.mrb[0].mxu0
  %880 = vmatprep.mubr.bf16.mxu0 0
  %881 = vmatmul.mubr.bf16.gmra.mrb[0].mxu0 %v317
  %v882 = vpop.f32.mrb[0].mxu0
  %v883 = vadd.f32 %v786, %v882
  %v884 = vpop.f32.mrb[0].mxu0
  %v885 = vpop.f32.mrb[0].mxu0
  %v886 = vadd.f32 %v789, %v885
  %v887 = vpop.f32.mrb[0].mxu0
  %888 = vdwg.mxu0
  %v889 = vmax.f32 %v827, 0.0
  %v890 = vmax.f32 %v830, 0.0
  %v891 = vmax.f32 %v835, 0.0
  %v892 = vmax.f32 %v838, 0.0
  %v893 = vmax.f32 %v843, 0.0
  %v894 = vmax.f32 %v846, 0.0
  %v895 = vmax.f32 %v851, 0.0
  %v896 = vmax.f32 %v854, 0.0
  %v897 = vmax.f32 %v859, 0.0
  %v898 = vmax.f32 %v862, 0.0
  %v899 = vmax.f32 %v867, 0.0
  %v900 = vmax.f32 %v870, 0.0
  %v901 = vmax.f32 %v875, 0.0
  %v902 = vmax.f32 %v878, 0.0
  %v903 = vmax.f32 %v883, 0.0
  %v904 = vmax.f32 %v886, 0.0
  %905 = vst [vmem:[%s3] sm:$0xff] %v889
  %906 = vst [vmem:[%s3 + $0x8] sm:$0xff] %v890
  %907 = vst [vmem:[%s3 + $0x10] sm:$0xff] %v891
  %908 = vst [vmem:[%s3 + $0x18] sm:$0xff] %v892
  %909 = vst [vmem:[%s3 + $0x20] sm:$0xff] %v893
  %910 = vst [vmem:[%s3 + $0x28] sm:$0xff] %v894
  %911 = vst [vmem:[%s3 + $0x30] sm:$0xff] %v895
  %912 = vst [vmem:[%s3 + $0x38] sm:$0xff] %v896
  %913 = vst [vmem:[%s3 + $0x40] sm:$0xff] %v897
  %914 = vst [vmem:[%s3 + $0x48] sm:$0xff] %v898
  %915 = vst [vmem:[%s3 + $0x50] sm:$0xff] %v899
  %916 = vst [vmem:[%s3 + $0x58] sm:$0xff] %v900
  %917 = vst [vmem:[%s3 + $0x60] sm:$0xff] %v901
  %918 = vst [vmem:[%s3 + $0x68] sm:$0xff] %v902
  %919 = vst [vmem:[%s3 + $0x70] sm:$0xff] %v903
  %920 = vst [vmem:[%s3 + $0x78] sm:$0xff] %v904
  // Predicated region
  $region14: #{resnet_encoder_forward.12} parent=0 // pred_check
    _
  $region15: #{resnet_encoder_forward.12} parent=0 // pred_check_branch
    %922 = sbr.rel (0) target = $region17
  $region16: #{resnet_encoder_forward.12} parent=0 // pred_region
    _
  $region17: #{resnet_encoder_forward.12} parent=0 // pred_fallthru
    _
  // Predicated region
  $region18: #{resnet_encoder_forward.12} parent=0 // pred_check
    _
  $region19: #{resnet_encoder_forward.12} parent=0 // pred_check_branch
    %924 = sbr.rel (0) target = $region21
  $region20: #{resnet_encoder_forward.12} parent=0 // pred_region
    _
  $region21: #{resnet_encoder_forward.12} parent=0 // pred_fallthru
    _

// kernel: resnet_encoder_forward.13
$region0: #{resnet_encoder_forward.13}
  #allocation0 [shape = 'u32[]', space=smem, size = 0x4, offset = 0x4, fixed_abs, tag = 'smem constant byte address 0x4 - core index']
  #allocation1 [shape = 'u32[144,128]{1,0:T(1,128)}', space=vmem, size = 0x12000, scoped, tag = 'internal scratch']
  %s0 = inlined_call_operand.vmem [shape: bf16[128,640], index: 0, kind: input, shape index: {}]
  %s1 = inlined_call_operand.vmem [shape: bf16[640,128], index: 1, kind: input, shape index: {}]
  %s2 = inlined_call_operand.vmem [shape: f32[1,128], index: 2, kind: input, shape index: {}]
  %s3 = inlined_call_operand.vmem [shape: f32[128,128], index: 3, kind: input, shape index: {}]
  %s4 = inlined_call_operand.vmem [shape: f32[128,128], index: 4, kind: output, shape index: {}]
  %s5 = sld [smem:[#allocation0]]
  $region26: #{resnet_encoder_forward.13} parent=0
    _
  %s7 = ssub.s32 1, %s5
  %s8 = scalar_select 0, %s7, %s5
  // Predicated region
  $region2: #{resnet_encoder_forward.13} parent=0 // pred_check
    _
  $region3: #{resnet_encoder_forward.13} parent=0 // pred_check_branch
    %10 = sbr.rel (0) target = $region5
  $region4: #{resnet_encoder_forward.13} parent=0 // pred_region
    _
  $region5: #{resnet_encoder_forward.13} parent=0 // pred_fallthru
    _
  // Predicated region
  $region6: #{resnet_encoder_forward.13} parent=0 // pred_check
    _
  $region7: #{resnet_encoder_forward.13} parent=0 // pred_check_branch
    %12 = sbr.rel (0) target = $region9
  $region8: #{resnet_encoder_forward.13} parent=0 // pred_region
    _
  $region9: #{resnet_encoder_forward.13} parent=0 // pred_fallthru
    _
  // Predicated region
  $region10: #{resnet_encoder_forward.13} parent=0 // pred_check
    _
  $region11: #{resnet_encoder_forward.13} parent=0 // pred_check_branch
    %14 = sbr.rel (0) target = $region13
  $region12: #{resnet_encoder_forward.13} parent=0 // pred_region
    _
  $region13: #{resnet_encoder_forward.13} parent=0 // pred_fallthru
    _
  // Predicated region
  $region14: #{resnet_encoder_forward.13} parent=0 // pred_check
    _
  $region15: #{resnet_encoder_forward.13} parent=0 // pred_check_branch
    %16 = sbr.rel (0) target = $region17
  $region16: #{resnet_encoder_forward.13} parent=0 // pred_region
    _
  $region17: #{resnet_encoder_forward.13} parent=0 // pred_fallthru
    _
  %v18 = vld [vmem:[%s0] sm:$0xff]
  %v19 = vld [vmem:[%s0 + $0x8] sm:$0xff]
  %v20 = vld [vmem:[%s0 + $0x10] sm:$0xf]
  %v21 = vld [vmem:[%s0 + $0x14] sm:$0xff]
  %v22 = vld [vmem:[%s0 + $0x1c] sm:$0xff]
  %v23 = vld [vmem:[%s0 + $0x24] sm:$0xf]
  %v24 = vld [vmem:[%s0 + $0x28] sm:$0xff]
  %v25 = vld [vmem:[%s0 + $0x30] sm:$0xff]
  %v26 = vld [vmem:[%s0 + $0x38] sm:$0xf]
  %v27 = vld [vmem:[%s0 + $0x3c] sm:$0xff]
  %v28 = vld [vmem:[%s0 + $0x44] sm:$0xff]
  %v29 = vld [vmem:[%s0 + $0x4c] sm:$0xf]
  %v30 = vld [vmem:[%s0 + $0x50] sm:$0xff]
  %v31 = vld [vmem:[%s0 + $0x58] sm:$0xff]
  %v32 = vld [vmem:[%s0 + $0x60] sm:$0xf]
  %v33 = vld [vmem:[%s0 + $0x64] sm:$0xff]
  %v34 = vld [vmem:[%s0 + $0x6c] sm:$0xff]
  %v35 = vld [vmem:[%s0 + $0x74] sm:$0xf]
  %v36 = vld [vmem:[%s0 + $0x78] sm:$0xff]
  %v37 = vld [vmem:[%s0 + $0x80] sm:$0xff]
  %v38 = vld [vmem:[%s0 + $0x88] sm:$0xf]
  %v39 = vld [vmem:[%s0 + $0x8c] sm:$0xff]
  %v40 = vld [vmem:[%s0 + $0x94] sm:$0xff]
  %v41 = vld [vmem:[%s0 + $0x9c] sm:$0xf]
  %v42 = vld [vmem:[%s0 + $0xa0] sm:$0xff]
  %v43 = vld [vmem:[%s0 + $0xa8] sm:$0xff]
  %v44 = vld [vmem:[%s0 + $0xb0] sm:$0xf]
  %v45 = vld [vmem:[%s0 + $0xb4] sm:$0xff]
  %v46 = vld [vmem:[%s0 + $0xbc] sm:$0xff]
  %v47 = vld [vmem:[%s0 + $0xc4] sm:$0xf]
  %v48 = vld [vmem:[%s0 + $0xc8] sm:$0xff]
  %v49 = vld [vmem:[%s0 + $0xd0] sm:$0xff]
  %v50 = vld [vmem:[%s0 + $0xd8] sm:$0xf]
  %v51 = vld [vmem:[%s0 + $0xdc] sm:$0xff]
  %v52 = vld [vmem:[%s0 + $0xe4] sm:$0xff]
  %v53 = vld [vmem:[%s0 + $0xec] sm:$0xf]
  %v54 = vld [vmem:[%s0 + $0xf0] sm:$0xff]
  %v55 = vld [vmem:[%s0 + $0xf8] sm:$0xff]
  %v56 = vld [vmem:[%s0 + $0x100] sm:$0xf]
  %v57 = vld [vmem:[%s0 + $0x104] sm:$0xff]
  %v58 = vld [vmem:[%s0 + $0x10c] sm:$0xff]
  %v59 = vld [vmem:[%s0 + $0x114] sm:$0xf]
  %v60 = vld [vmem:[%s0 + $0x118] sm:$0xff]
  %v61 = vld [vmem:[%s0 + $0x120] sm:$0xff]
  %v62 = vld [vmem:[%s0 + $0x128] sm:$0xf]
  %v63 = vld [vmem:[%s0 + $0x12c] sm:$0xff]
  %v64 = vld [vmem:[%s0 + $0x134] sm:$0xff]
  %v65 = vld [vmem:[%s0 + $0x13c] sm:$0xf]
  %v66 = vld [vmem:[%s1] sm:$0xf]
  %v67 = vld [vmem:[%s1 + $0x4] sm:$0xf]
  %v68 = vld [vmem:[%s1 + $0x8] sm:$0xf]
  %v69 = vld [vmem:[%s1 + $0xc] sm:$0xf]
  %v70 = vld [vmem:[%s1 + $0x10] sm:$0xf]
  %v71 = vld [vmem:[%s1 + $0x14] sm:$0xf]
  %v72 = vld [vmem:[%s1 + $0x18] sm:$0xf]
  %v73 = vld [vmem:[%s1 + $0x1c] sm:$0xf]
  %v74 = vld [vmem:[%s1 + $0x20] sm:$0xf]
  %v75 = vld [vmem:[%s1 + $0x24] sm:$0xf]
  %v76 = vld [vmem:[%s1 + $0x28] sm:$0xf]
  %v77 = vld [vmem:[%s1 + $0x2c] sm:$0xf]
  %v78 = vld [vmem:[%s1 + $0x30] sm:$0xf]
  %v79 = vld [vmem:[%s1 + $0x34] sm:$0xf]
  %v80 = vld [vmem:[%s1 + $0x38] sm:$0xf]
  %v81 = vld [vmem:[%s1 + $0x3c] sm:$0xf]
  %v82 = vld [vmem:[%s1 + $0x40] sm:$0xf]
  %v83 = vld [vmem:[%s1 + $0x44] sm:$0xf]
  %v84 = vld [vmem:[%s1 + $0x48] sm:$0xf]
  %v85 = vld [vmem:[%s1 + $0x4c] sm:$0xf]
  %v86 = vld [vmem:[%s1 + $0x50] sm:$0xf]
  %v87 = vld [vmem:[%s1 + $0x54] sm:$0xf]
  %v88 = vld [vmem:[%s1 + $0x58] sm:$0xf]
  %v89 = vld [vmem:[%s1 + $0x5c] sm:$0xf]
  %v90 = vld [vmem:[%s1 + $0x60] sm:$0xf]
  %v91 = vld [vmem:[%s1 + $0x64] sm:$0xf]
  %v92 = vld [vmem:[%s1 + $0x68] sm:$0xf]
  %v93 = vld [vmem:[%s1 + $0x6c] sm:$0xf]
  %v94 = vld [vmem:[%s1 + $0x70] sm:$0xf]
  %v95 = vld [vmem:[%s1 + $0x74] sm:$0xf]
  %v96 = vld [vmem:[%s1 + $0x78] sm:$0xf]
  %v97 = vld [vmem:[%s1 + $0x7c] sm:$0xf]
  %v98 = vld [vmem:[%s1 + $0x80] sm:$0xf]
  %v99 = vld [vmem:[%s1 + $0x84] sm:$0xf]
  %v100 = vld [vmem:[%s1 + $0x88] sm:$0xf]
  %v101 = vld [vmem:[%s1 + $0x8c] sm:$0xf]
  %v102 = vld [vmem:[%s1 + $0x90] sm:$0xf]
  %v103 = vld [vmem:[%s1 + $0x94] sm:$0xf]
  %v104 = vld [vmem:[%s1 + $0x98] sm:$0xf]
  %v105 = vld [vmem:[%s1 + $0x9c] sm:$0xf]
  %v106 = vld [vmem:[%s1 + $0xa0] sm:$0xf]
  %v107 = vld [vmem:[%s1 + $0xa4] sm:$0xf]
  %v108 = vld [vmem:[%s1 + $0xa8] sm:$0xf]
  %v109 = vld [vmem:[%s1 + $0xac] sm:$0xf]
  %v110 = vld [vmem:[%s1 + $0xb0] sm:$0xf]
  %v111 = vld [vmem:[%s1 + $0xb4] sm:$0xf]
  %v112 = vld [vmem:[%s1 + $0xb8] sm:$0xf]
  %v113 = vld [vmem:[%s1 + $0xbc] sm:$0xf]
  %v114 = vld [vmem:[%s1 + $0xc0] sm:$0xf]
  %v115 = vld [vmem:[%s1 + $0xc4] sm:$0xf]
  %v116 = vld [vmem:[%s1 + $0xc8] sm:$0xf]
  %v117 = vld [vmem:[%s1 + $0xcc] sm:$0xf]
  %v118 = vld [vmem:[%s1 + $0xd0] sm:$0xf]
  %v119 = vld [vmem:[%s1 + $0xd4] sm:$0xf]
  %v120 = vld [vmem:[%s1 + $0xd8] sm:$0xf]
  %v121 = vld [vmem:[%s1 + $0xdc] sm:$0xf]
  %v122 = vld [vmem:[%s1 + $0xe0] sm:$0xf]
  %v123 = vld [vmem:[%s1 + $0xe4] sm:$0xf]
  %v124 = vld [vmem:[%s1 + $0xe8] sm:$0xf]
  %v125 = vld [vmem:[%s1 + $0xec] sm:$0xf]
  %v126 = vld [vmem:[%s1 + $0xf0] sm:$0xf]
  %v127 = vld [vmem:[%s1 + $0xf4] sm:$0xf]
  %v128 = vld [vmem:[%s1 + $0xf8] sm:$0xf]
  %v129 = vld [vmem:[%s1 + $0xfc] sm:$0xf]
  %v130 = vld [vmem:[%s1 + $0x100] sm:$0xf]
  %v131 = vld [vmem:[%s1 + $0x104] sm:$0xf]
  %v132 = vld [vmem:[%s1 + $0x108] sm:$0xf]
  %v133 = vld [vmem:[%s1 + $0x10c] sm:$0xf]
  %v134 = vld [vmem:[%s1 + $0x110] sm:$0xf]
  %v135 = vld [vmem:[%s1 + $0x114] sm:$0xf]
  %v136 = vld [vmem:[%s1 + $0x118] sm:$0xf]
  %v137 = vld [vmem:[%s1 + $0x11c] sm:$0xf]
  %v138 = vld [vmem:[%s1 + $0x120] sm:$0xf]
  %v139 = vld [vmem:[%s1 + $0x124] sm:$0xf]
  %v140 = vld [vmem:[%s1 + $0x128] sm:$0xf]
  %v141 = vld [vmem:[%s1 + $0x12c] sm:$0xf]
  %v142 = vld [vmem:[%s1 + $0x130] sm:$0xf]
  %v143 = vld [vmem:[%s1 + $0x134] sm:$0xf]
  %v144 = vld [vmem:[%s1 + $0x138] sm:$0xf]
  %v145 = vld [vmem:[%s1 + $0x13c] sm:$0xf]
  %v146 = vld [vmem:[%s2] sm:$0x1]
  %v148 = vlaneseq
  %v149 = vshrl.u32 %v148, 7
  %v150 = vsub.s32 0, %v149
  %v151 = vrot.slane %v146, %v150
  %v201 = vunpack.c.l.b16 %v18
  %v202 = vunpack.c.h.b16 %v18
  %v203 = vunpack.c.l.b16 %v19
  %v204 = vunpack.c.h.b16 %v19
  %v205 = vunpack.c.l.b16 %v20
  %v206 = vunpack.c.l.b16 %v21
  %v207 = vunpack.c.h.b16 %v21
  %v208 = vunpack.c.l.b16 %v22
  %v209 = vunpack.c.h.b16 %v22
  %v210 = vunpack.c.l.b16 %v23
  %v211 = vunpack.c.l.b16 %v24
  %v212 = vunpack.c.h.b16 %v24
  %v213 = vunpack.c.l.b16 %v25
  %v214 = vunpack.c.h.b16 %v25
  %v215 = vunpack.c.l.b16 %v26
  %v216 = vunpack.c.l.b16 %v27
  %v217 = vunpack.c.h.b16 %v27
  %v218 = vunpack.c.l.b16 %v28
  %v219 = vunpack.c.h.b16 %v28
  %v220 = vunpack.c.l.b16 %v29
  %v221 = vunpack.c.l.b16 %v30
  %v222 = vunpack.c.h.b16 %v30
  %v223 = vunpack.c.l.b16 %v31
  %v224 = vunpack.c.h.b16 %v31
  %v225 = vunpack.c.l.b16 %v32
  %v226 = vunpack.c.l.b16 %v33
  %v227 = vunpack.c.h.b16 %v33
  %v228 = vunpack.c.l.b16 %v34
  %v229 = vunpack.c.h.b16 %v34
  %v230 = vunpack.c.l.b16 %v35
  %v231 = vunpack.c.l.b16 %v36
  %v232 = vunpack.c.h.b16 %v36
  %v233 = vunpack.c.l.b16 %v37
  %v234 = vunpack.c.h.b16 %v37
  %v235 = vunpack.c.l.b16 %v38
  %v236 = vunpack.c.l.b16 %v39
  %v237 = vunpack.c.h.b16 %v39
  %v238 = vunpack.c.l.b16 %v40
  %v239 = vunpack.c.h.b16 %v40
  %v240 = vunpack.c.l.b16 %v41
  %v241 = vunpack.c.l.b16 %v42
  %v242 = vunpack.c.h.b16 %v42
  %v243 = vunpack.c.l.b16 %v43
  %v244 = vunpack.c.h.b16 %v43
  %v245 = vunpack.c.l.b16 %v44
  %v246 = vunpack.c.l.b16 %v45
  %v247 = vunpack.c.h.b16 %v45
  %v248 = vunpack.c.l.b16 %v46
  %v249 = vunpack.c.h.b16 %v46
  %v250 = vunpack.c.l.b16 %v47
  %v251 = vunpack.c.l.b16 %v48
  %v252 = vunpack.c.h.b16 %v48
  %v253 = vunpack.c.l.b16 %v49
  %v254 = vunpack.c.h.b16 %v49
  %v255 = vunpack.c.l.b16 %v50
  %v256 = vunpack.c.l.b16 %v51
  %v257 = vunpack.c.h.b16 %v51
  %v258 = vunpack.c.l.b16 %v52
  %v259 = vunpack.c.h.b16 %v52
  %v260 = vunpack.c.l.b16 %v53
  %v261 = vunpack.c.l.b16 %v54
  %v262 = vunpack.c.h.b16 %v54
  %v263 = vunpack.c.l.b16 %v55
  %v264 = vunpack.c.h.b16 %v55
  %v265 = vunpack.c.l.b16 %v56
  %v266 = vunpack.c.l.b16 %v57
  %v267 = vunpack.c.h.b16 %v57
  %v268 = vunpack.c.l.b16 %v58
  %v269 = vunpack.c.h.b16 %v58
  %v270 = vunpack.c.l.b16 %v59
  %v271 = vunpack.c.l.b16 %v60
  %v272 = vunpack.c.h.b16 %v60
  %v273 = vunpack.c.l.b16 %v61
  %v274 = vunpack.c.h.b16 %v61
  %v275 = vunpack.c.l.b16 %v62
  %v276 = vunpack.c.l.b16 %v63
  %v277 = vunpack.c.h.b16 %v63
  %v278 = vunpack.c.l.b16 %v64
  %v279 = vunpack.c.h.b16 %v64
  %v280 = vunpack.c.l.b16 %v65
  %v281 = vpack.c.b16 %v206, %v201
  %v282 = vpack.c.b16 %v207, %v202
  %v283 = vpack.c.b16 %v208, %v203
  %v284 = vpack.c.b16 %v209, %v204
  %v285 = vpack.c.b16 %v210, %v205
  %v286 = vpack.c.b16 %v216, %v211
  %v287 = vpack.c.b16 %v217, %v212
  %v288 = vpack.c.b16 %v218, %v213
  %v289 = vpack.c.b16 %v219, %v214
  %v290 = vpack.c.b16 %v220, %v215
  %v291 = vpack.c.b16 %v226, %v221
  %v292 = vpack.c.b16 %v227, %v222
  %v293 = vpack.c.b16 %v228, %v223
  %v294 = vpack.c.b16 %v229, %v224
  %v295 = vpack.c.b16 %v230, %v225
  %v296 = vpack.c.b16 %v236, %v231
  %v297 = vpack.c.b16 %v237, %v232
  %v298 = vpack.c.b16 %v238, %v233
  %v299 = vpack.c.b16 %v239, %v234
  %v300 = vpack.c.b16 %v240, %v235
  %v301 = vpack.c.b16 %v246, %v241
  %v302 = vpack.c.b16 %v247, %v242
  %v303 = vpack.c.b16 %v248, %v243
  %v304 = vpack.c.b16 %v249, %v244
  %v305 = vpack.c.b16 %v250, %v245
  %v306 = vpack.c.b16 %v256, %v251
  %v307 = vpack.c.b16 %v257, %v252
  %v308 = vpack.c.b16 %v258, %v253
  %v309 = vpack.c.b16 %v259, %v254
  %v310 = vpack.c.b16 %v260, %v255
  %v311 = vpack.c.b16 %v266, %v261
  %v312 = vpack.c.b16 %v267, %v262
  %v313 = vpack.c.b16 %v268, %v263
  %v314 = vpack.c.b16 %v269, %v264
  %v315 = vpack.c.b16 %v270, %v265
  %v316 = vpack.c.b16 %v276, %v271
  %v317 = vpack.c.b16 %v277, %v272
  %v318 = vpack.c.b16 %v278, %v273
  %v319 = vpack.c.b16 %v279, %v274
  %v320 = vpack.c.b16 %v280, %v275
  %v441 = vunpack.c.l.b16 %v66
  %v442 = vunpack.c.l.b16 %v67
  %v443 = vunpack.c.l.b16 %v68
  %v444 = vunpack.c.l.b16 %v69
  %v445 = vunpack.c.l.b16 %v70
  %v446 = vunpack.c.l.b16 %v71
  %v447 = vunpack.c.l.b16 %v72
  %v448 = vunpack.c.l.b16 %v73
  %v449 = vunpack.c.l.b16 %v74
  %v450 = vunpack.c.l.b16 %v75
  %v451 = vunpack.c.l.b16 %v76
  %v452 = vunpack.c.l.b16 %v77
  %v453 = vunpack.c.l.b16 %v78
  %v454 = vunpack.c.l.b16 %v79
  %v455 = vunpack.c.l.b16 %v80
  %v456 = vunpack.c.l.b16 %v81
  %v457 = vunpack.c.l.b16 %v82
  %v458 = vunpack.c.l.b16 %v83
  %v459 = vunpack.c.l.b16 %v84
  %v460 = vunpack.c.l.b16 %v85
  %v461 = vunpack.c.l.b16 %v86
  %v462 = vunpack.c.l.b16 %v87
  %v463 = vunpack.c.l.b16 %v88
  %v464 = vunpack.c.l.b16 %v89
  %v465 = vunpack.c.l.b16 %v90
  %v466 = vunpack.c.l.b16 %v91
  %v467 = vunpack.c.l.b16 %v92
  %v468 = vunpack.c.l.b16 %v93
  %v469 = vunpack.c.l.b16 %v94
  %v470 = vunpack.c.l.b16 %v95
  %v471 = vunpack.c.l.b16 %v96
  %v472 = vunpack.c.l.b16 %v97
  %v473 = vunpack.c.l.b16 %v98
  %v474 = vunpack.c.l.b16 %v99
  %v475 = vunpack.c.l.b16 %v100
  %v476 = vunpack.c.l.b16 %v101
  %v477 = vunpack.c.l.b16 %v102
  %v478 = vunpack.c.l.b16 %v103
  %v479 = vunpack.c.l.b16 %v104
  %v480 = vunpack.c.l.b16 %v105
  %v481 = vunpack.c.l.b16 %v106
  %v482 = vunpack.c.l.b16 %v107
  %v483 = vunpack.c.l.b16 %v108
  %v484 = vunpack.c.l.b16 %v109
  %v485 = vunpack.c.l.b16 %v110
  %v486 = vunpack.c.l.b16 %v111
  %v487 = vunpack.c.l.b16 %v112
  %v488 = vunpack.c.l.b16 %v113
  %v489 = vunpack.c.l.b16 %v114
  %v490 = vunpack.c.l.b16 %v115
  %v491 = vunpack.c.l.b16 %v116
  %v492 = vunpack.c.l.b16 %v117
  %v493 = vunpack.c.l.b16 %v118
  %v494 = vunpack.c.l.b16 %v119
  %v495 = vunpack.c.l.b16 %v120
  %v496 = vunpack.c.l.b16 %v121
  %v497 = vunpack.c.l.b16 %v122
  %v498 = vunpack.c.l.b16 %v123
  %v499 = vunpack.c.l.b16 %v124
  %v500 = vunpack.c.l.b16 %v125
  %v501 = vunpack.c.l.b16 %v126
  %v502 = vunpack.c.l.b16 %v127
  %v503 = vunpack.c.l.b16 %v128
  %v504 = vunpack.c.l.b16 %v129
  %v505 = vunpack.c.l.b16 %v130
  %v506 = vunpack.c.l.b16 %v131
  %v507 = vunpack.c.l.b16 %v132
  %v508 = vunpack.c.l.b16 %v133
  %v509 = vunpack.c.l.b16 %v134
  %v510 = vunpack.c.l.b16 %v135
  %v511 = vunpack.c.l.b16 %v136
  %v512 = vunpack.c.l.b16 %v137
  %v513 = vunpack.c.l.b16 %v138
  %v514 = vunpack.c.l.b16 %v139
  %v515 = vunpack.c.l.b16 %v140
  %v516 = vunpack.c.l.b16 %v141
  %v517 = vunpack.c.l.b16 %v142
  %v518 = vunpack.c.l.b16 %v143
  %v519 = vunpack.c.l.b16 %v144
  %v520 = vunpack.c.l.b16 %v145
  %v521 = vpack.c.b16 %v442, %v441
  %v522 = vpack.c.b16 %v444, %v443
  %v523 = vpack.c.b16 %v446, %v445
  %v524 = vpack.c.b16 %v448, %v447
  %v525 = vpack.c.b16 %v450, %v449
  %v526 = vpack.c.b16 %v452, %v451
  %v527 = vpack.c.b16 %v454, %v453
  %v528 = vpack.c.b16 %v456, %v455
  %v529 = vpack.c.b16 %v458, %v457
  %v530 = vpack.c.b16 %v460, %v459
  %v531 = vpack.c.b16 %v462, %v461
  %v532 = vpack.c.b16 %v464, %v463
  %v533 = vpack.c.b16 %v466, %v465
  %v534 = vpack.c.b16 %v468, %v467
  %v535 = vpack.c.b16 %v470, %v469
  %v536 = vpack.c.b16 %v472, %v471
  %v537 = vpack.c.b16 %v474, %v473
  %v538 = vpack.c.b16 %v476, %v475
  %v539 = vpack.c.b16 %v478, %v477
  %v540 = vpack.c.b16 %v480, %v479
  %v541 = vpack.c.b16 %v482, %v481
  %v542 = vpack.c.b16 %v484, %v483
  %v543 = vpack.c.b16 %v486, %v485
  %v544 = vpack.c.b16 %v488, %v487
  %v545 = vpack.c.b16 %v490, %v489
  %v546 = vpack.c.b16 %v492, %v491
  %v547 = vpack.c.b16 %v494, %v493
  %v548 = vpack.c.b16 %v496, %v495
  %v549 = vpack.c.b16 %v498, %v497
  %v550 = vpack.c.b16 %v500, %v499
  %v551 = vpack.c.b16 %v502, %v501
  %v552 = vpack.c.b16 %v504, %v503
  %v553 = vpack.c.b16 %v506, %v505
  %v554 = vpack.c.b16 %v508, %v507
  %v555 = vpack.c.b16 %v510, %v509
  %v556 = vpack.c.b16 %v512, %v511
  %v557 = vpack.c.b16 %v514, %v513
  %v558 = vpack.c.b16 %v516, %v515
  %v559 = vpack.c.b16 %v518, %v517
  %v560 = vpack.c.b16 %v520, %v519
  %601 = vmatprep.subr.bf16.mxu0 0
  %602 = vmatpush1.bf16.msra.mxu0 %v521
  %603 = vmatprep.subr.bf16.mxu0 0
  %604 = vmatpush1.bf16.msra.mxu0 %v522
  %605 = vmatprep.subr.bf16.mxu0 0
  %606 = vmatpush1.bf16.msra.mxu0 %v523
  %607 = vmatprep.subr.bf16.mxu0 0
  %608 = vmatpush1.bf16.msra.mxu0 %v524
  %609 = vmatprep.subr.bf16.mxu0 0
  %610 = vmatpush1.bf16.msra.mxu0 %v525
  %611 = vmatprep.subr.bf16.mxu0 0
  %612 = vmatpush1.bf16.msra.mxu0 %v526
  %613 = vmatprep.subr.bf16.mxu0 0
  %614 = vmatpush1.bf16.msra.mxu0 %v527
  %615 = vmatprep.subr.bf16.mxu0 0
  %616 = vmatpush1.bf16.msra.mxu0 %v528
  %617 = vmatprep.subr.bf16.mxu0 0
  %618 = vmatpush1.bf16.msra.mxu0 %v529
  %619 = vmatprep.subr.bf16.mxu0 0
  %620 = vmatpush1.bf16.msra.mxu0 %v530
  %621 = vmatprep.subr.bf16.mxu0 0
  %622 = vmatpush1.bf16.msra.mxu0 %v531
  %623 = vmatprep.subr.bf16.mxu0 0
  %624 = vmatpush1.bf16.msra.mxu0 %v532
  %625 = vmatprep.subr.bf16.mxu0 0
  %626 = vmatpush1.bf16.msra.mxu0 %v533
  %627 = vmatprep.subr.bf16.mxu0 0
  %628 = vmatpush1.bf16.msra.mxu0 %v534
  %629 = vmatprep.subr.bf16.mxu0 0
  %630 = vmatpush1.bf16.msra.mxu0 %v535
  %631 = vmatprep.subr.bf16.mxu0 0
  %632 = vmatpush1.bf16.msra.mxu0 %v536
  %633 = vmatprep.mubr.bf16.mxu0 %v282
  %634 = vmatmul.mubr.bf16.gmra.mrb[0].mxu0 %v281
  %v635 = vpop.f32.mrb[0].mxu0
  %v636 = vadd.f32 %v151, %v635
  %v637 = vpop.f32.mrb[0].mxu0
  %v638 = vpop.f32.mrb[0].mxu0
  %v639 = vadd.f32 %v151, %v638
  %v640 = vpop.f32.mrb[0].mxu0
  %641 = vmatprep.mubr.bf16.mxu0 %v287
  %642 = vmatmul.mubr.bf16.gmra.mrb[0].mxu0 %v286
  %v643 = vpop.f32.mrb[0].mxu0
  %v644 = vadd.f32 %v151, %v643
  %v645 = vpop.f32.mrb[0].mxu0
  %v646 = vpop.f32.mrb[0].mxu0
  %v647 = vadd.f32 %v151, %v646
  %v648 = vpop.f32.mrb[0].mxu0
  %649 = vmatprep.mubr.bf16.mxu0 %v292
  %650 = vmatmul.mubr.bf16.gmra.mrb[0].mxu0 %v291
  %v651 = vpop.f32.mrb[0].mxu0
  %v652 = vadd.f32 %v151, %v651
  %v653 = vpop.f32.mrb[0].mxu0
  %v654 = vpop.f32.mrb[0].mxu0
  %v655 = vadd.f32 %v151, %v654
  %v656 = vpop.f32.mrb[0].mxu0
  %657 = vmatprep.mubr.bf16.mxu0 %v297
  %658 = vmatmul.mubr.bf16.gmra.mrb[0].mxu0 %v296
  %v659 = vpop.f32.mrb[0].mxu0
  %v660 = vadd.f32 %v151, %v659
  %v661 = vpop.f32.mrb[0].mxu0
  %v662 = vpop.f32.mrb[0].mxu0
  %v663 = vadd.f32 %v151, %v662
  %v664 = vpop.f32.mrb[0].mxu0
  %665 = vmatprep.mubr.bf16.mxu0 %v302
  %666 = vmatmul.mubr.bf16.gmra.mrb[0].mxu0 %v301
  %v667 = vpop.f32.mrb[0].mxu0
  %v668 = vadd.f32 %v151, %v667
  %v669 = vpop.f32.mrb[0].mxu0
  %v670 = vpop.f32.mrb[0].mxu0
  %v671 = vadd.f32 %v151, %v670
  %v672 = vpop.f32.mrb[0].mxu0
  %673 = vmatprep.mubr.bf16.mxu0 %v307
  %674 = vmatmul.mubr.bf16.gmra.mrb[0].mxu0 %v306
  %v675 = vpop.f32.mrb[0].mxu0
  %v676 = vadd.f32 %v151, %v675
  %v677 = vpop.f32.mrb[0].mxu0
  %v678 = vpop.f32.mrb[0].mxu0
  %v679 = vadd.f32 %v151, %v678
  %v680 = vpop.f32.mrb[0].mxu0
  %681 = vmatprep.mubr.bf16.mxu0 %v312
  %682 = vmatmul.mubr.bf16.gmra.mrb[0].mxu0 %v311
  %v683 = vpop.f32.mrb[0].mxu0
  %v684 = vadd.f32 %v151, %v683
  %v685 = vpop.f32.mrb[0].mxu0
  %v686 = vpop.f32.mrb[0].mxu0
  %v687 = vadd.f32 %v151, %v686
  %v688 = vpop.f32.mrb[0].mxu0
  %689 = vmatprep.mubr.bf16.mxu0 %v317
  %690 = vmatmul.mubr.bf16.gmra.mrb[0].mxu0 %v316
  %v691 = vpop.f32.mrb[0].mxu0
  %v692 = vadd.f32 %v151, %v691
  %v693 = vpop.f32.mrb[0].mxu0
  %v694 = vpop.f32.mrb[0].mxu0
  %v695 = vadd.f32 %v151, %v694
  %v696 = vpop.f32.mrb[0].mxu0
  %697 = vdwg.mxu0
  %698 = vmatprep.subr.bf16.mxu0 0
  %699 = vmatpush1.bf16.msra.mxu0 %v537
  %700 = vmatprep.subr.bf16.mxu0 0
  %701 = vmatpush1.bf16.msra.mxu0 %v538
  %702 = vmatprep.subr.bf16.mxu0 0
  %703 = vmatpush1.bf16.msra.mxu0 %v539
  %704 = vmatprep.subr.bf16.mxu0 0
  %705 = vmatpush1.bf16.msra.mxu0 %v540
  %706 = vmatprep.subr.bf16.mxu0 0
  %707 = vmatpush1.bf16.msra.mxu0 %v541
  %708 = vmatprep.subr.bf16.mxu0 0
  %709 = vmatpush1.bf16.msra.mxu0 %v542
  %710 = vmatprep.subr.bf16.mxu0 0
  %711 = vmatpush1.bf16.msra.mxu0 %v543
  %712 = vmatprep.subr.bf16.mxu0 0
  %713 = vmatpush1.bf16.msra.mxu0 %v544
  %714 = vmatprep.subr.bf16.mxu0 0
  %715 = vmatpush1.bf16.msra.mxu0 %v545
  %716 = vmatprep.subr.bf16.mxu0 0
  %717 = vmatpush1.bf16.msra.mxu0 %v546
  %718 = vmatprep.subr.bf16.mxu0 0
  %719 = vmatpush1.bf16.msra.mxu0 %v547
  %720 = vmatprep.subr.bf16.mxu0 0
  %721 = vmatpush1.bf16.msra.mxu0 %v548
  %722 = vmatprep.subr.bf16.mxu0 0
  %723 = vmatpush1.bf16.msra.mxu0 %v549
  %724 = vmatprep.subr.bf16.mxu0 0
  %725 = vmatpush1.bf16.msra.mxu0 %v550
  %726 = vmatprep.subr.bf16.mxu0 0
  %727 = vmatpush1.bf16.msra.mxu0 %v551
  %728 = vmatprep.subr.bf16.mxu0 0
  %729 = vmatpush1.bf16.msra.mxu0 %v552
  %730 = vmatprep.mubr.bf16.mxu0 %v284
  %731 = vmatmul.mubr.bf16.gmra.mrb[0].mxu0 %v283
  %v732 = vpop.f32.mrb[0].mxu0
  %v733 = vadd.f32 %v636, %v732
  %v734 = vpop.f32.mrb[0].mxu0
  %v735 = vpop.f32.mrb[0].mxu0
  %v736 = vadd.f32 %v639, %v735
  %v737 = vpop.f32.mrb[0].mxu0
  %738 = vmatprep.mubr.bf16.mxu0 %v289
  %739 = vmatmul.mubr.bf16.gmra.mrb[0].mxu0 %v288
  %v740 = vpop.f32.mrb[0].mxu0
  %v741 = vadd.f32 %v644, %v740
  %v742 = vpop.f32.mrb[0].mxu0
  %v743 = vpop.f32.mrb[0].mxu0
  %v744 = vadd.f32 %v647, %v743
  %v745 = vpop.f32.mrb[0].mxu0
  %746 = vmatprep.mubr.bf16.mxu0 %v294
  %747 = vmatmul.mubr.bf16.gmra.mrb[0].mxu0 %v293
  %v748 = vpop.f32.mrb[0].mxu0
  %v749 = vadd.f32 %v652, %v748
  %v750 = vpop.f32.mrb[0].mxu0
  %v751 = vpop.f32.mrb[0].mxu0
  %v752 = vadd.f32 %v655, %v751
  %v753 = vpop.f32.mrb[0].mxu0
  %754 = vmatprep.mubr.bf16.mxu0 %v299
  %755 = vmatmul.mubr.bf16.gmra.mrb[0].mxu0 %v298
  %v756 = vpop.f32.mrb[0].mxu0
  %v757 = vadd.f32 %v660, %v756
  %v758 = vpop.f32.mrb[0].mxu0
  %v759 = vpop.f32.mrb[0].mxu0
  %v760 = vadd.f32 %v663, %v759
  %v761 = vpop.f32.mrb[0].mxu0
  %762 = vmatprep.mubr.bf16.mxu0 %v304
  %763 = vmatmul.mubr.bf16.gmra.mrb[0].mxu0 %v303
  %v764 = vpop.f32.mrb[0].mxu0
  %v765 = vadd.f32 %v668, %v764
  %v766 = vpop.f32.mrb[0].mxu0
  %v767 = vpop.f32.mrb[0].mxu0
  %v768 = vadd.f32 %v671, %v767
  %v769 = vpop.f32.mrb[0].mxu0
  %770 = vmatprep.mubr.bf16.mxu0 %v309
  %771 = vmatmul.mubr.bf16.gmra.mrb[0].mxu0 %v308
  %v772 = vpop.f32.mrb[0].mxu0
  %v773 = vadd.f32 %v676, %v772
  %v774 = vpop.f32.mrb[0].mxu0
  %v775 = vpop.f32.mrb[0].mxu0
  %v776 = vadd.f32 %v679, %v775
  %v777 = vpop.f32.mrb[0].mxu0
  %778 = vmatprep.mubr.bf16.mxu0 %v314
  %779 = vmatmul.mubr.bf16.gmra.mrb[0].mxu0 %v313
  %v780 = vpop.f32.mrb[0].mxu0
  %v781 = vadd.f32 %v684, %v780
  %v782 = vpop.f32.mrb[0].mxu0
  %v783 = vpop.f32.mrb[0].mxu0
  %v784 = vadd.f32 %v687, %v783
  %v785 = vpop.f32.mrb[0].mxu0
  %786 = vmatprep.mubr.bf16.mxu0 %v319
  %787 = vmatmul.mubr.bf16.gmra.mrb[0].mxu0 %v318
  %v788 = vpop.f32.mrb[0].mxu0
  %v789 = vadd.f32 %v692, %v788
  %v790 = vpop.f32.mrb[0].mxu0
  %v791 = vpop.f32.mrb[0].mxu0
  %v792 = vadd.f32 %v695, %v791
  %v793 = vpop.f32.mrb[0].mxu0
  %794 = vdwg.mxu0
  %795 = vmatprep.subr.bf16.mxu0 0
  %796 = vmatpush1.bf16.msra.mxu0 %v553
  %797 = vmatprep.subr.bf16.mxu0 0
  %798 = vmatpush1.bf16.msra.mxu0 %v554
  %799 = vmatprep.subr.bf16.mxu0 0
  %800 = vmatpush1.bf16.msra.mxu0 %v555
  %801 = vmatprep.subr.bf16.mxu0 0
  %802 = vmatpush1.bf16.msra.mxu0 %v556
  %803 = vmatprep.subr.bf16.mxu0 0
  %804 = vmatpush1.bf16.msra.mxu0 %v557
  %805 = vmatprep.subr.bf16.mxu0 0
  %806 = vmatpush1.bf16.msra.mxu0 %v558
  %807 = vmatprep.subr.bf16.mxu0 0
  %808 = vmatpush1.bf16.msra.mxu0 %v559
  %809 = vmatprep.subr.bf16.mxu0 0
  %810 = vmatpush1.bf16.msra.mxu0 %v560
  %811 = vmatprep.subr.bf16.mxu0 0
  %812 = vmatpush1.bf16.msra.mxu0 0
  %813 = vmatprep.subr.bf16.mxu0 0
  %814 = vmatpush1.bf16.msra.mxu0 0
  %815 = vmatprep.subr.bf16.mxu0 0
  %816 = vmatpush1.bf16.msra.mxu0 0
  %817 = vmatprep.subr.bf16.mxu0 0
  %818 = vmatpush1.bf16.msra.mxu0 0
  %819 = vmatprep.subr.bf16.mxu0 0
  %820 = vmatpush1.bf16.msra.mxu0 0
  %821 = vmatprep.subr.bf16.mxu0 0
  %822 = vmatpush1.bf16.msra.mxu0 0
  %823 = vmatprep.subr.bf16.mxu0 0
  %824 = vmatpush1.bf16.msra.mxu0 0
  %825 = vmatprep.subr.bf16.mxu0 0
  %826 = vmatpush1.bf16.msra.mxu0 0
  %827 = vmatprep.mubr.bf16.mxu0 0
  %828 = vmatmul.mubr.bf16.gmra.mrb[0].mxu0 %v285
  %v829 = vpop.f32.mrb[0].mxu0
  %v830 = vadd.f32 %v733, %v829
  %v831 = vpop.f32.mrb[0].mxu0
  %v832 = vpop.f32.mrb[0].mxu0
  %v833 = vadd.f32 %v736, %v832
  %v834 = vpop.f32.mrb[0].mxu0
  %835 = vmatprep.mubr.bf16.mxu0 0
  %836 = vmatmul.mubr.bf16.gmra.mrb[0].mxu0 %v290
  %v837 = vpop.f32.mrb[0].mxu0
  %v838 = vadd.f32 %v741, %v837
  %v839 = vpop.f32.mrb[0].mxu0
  %v840 = vpop.f32.mrb[0].mxu0
  %v841 = vadd.f32 %v744, %v840
  %v842 = vpop.f32.mrb[0].mxu0
  %843 = vmatprep.mubr.bf16.mxu0 0
  %844 = vmatmul.mubr.bf16.gmra.mrb[0].mxu0 %v295
  %v845 = vpop.f32.mrb[0].mxu0
  %v846 = vadd.f32 %v749, %v845
  %v847 = vpop.f32.mrb[0].mxu0
  %v848 = vpop.f32.mrb[0].mxu0
  %v849 = vadd.f32 %v752, %v848
  %v850 = vpop.f32.mrb[0].mxu0
  %851 = vmatprep.mubr.bf16.mxu0 0
  %852 = vmatmul.mubr.bf16.gmra.mrb[0].mxu0 %v300
  %v853 = vpop.f32.mrb[0].mxu0
  %v854 = vadd.f32 %v757, %v853
  %v855 = vpop.f32.mrb[0].mxu0
  %v856 = vpop.f32.mrb[0].mxu0
  %v857 = vadd.f32 %v760, %v856
  %v858 = vpop.f32.mrb[0].mxu0
  %859 = vmatprep.mubr.bf16.mxu0 0
  %860 = vmatmul.mubr.bf16.gmra.mrb[0].mxu0 %v305
  %v861 = vpop.f32.mrb[0].mxu0
  %v862 = vadd.f32 %v765, %v861
  %v863 = vpop.f32.mrb[0].mxu0
  %v864 = vpop.f32.mrb[0].mxu0
  %v865 = vadd.f32 %v768, %v864
  %v866 = vpop.f32.mrb[0].mxu0
  %867 = vmatprep.mubr.bf16.mxu0 0
  %868 = vmatmul.mubr.bf16.gmra.mrb[0].mxu0 %v310
  %v869 = vpop.f32.mrb[0].mxu0
  %v870 = vadd.f32 %v773, %v869
  %v871 = vpop.f32.mrb[0].mxu0
  %v872 = vpop.f32.mrb[0].mxu0
  %v873 = vadd.f32 %v776, %v872
  %v874 = vpop.f32.mrb[0].mxu0
  %875 = vmatprep.mubr.bf16.mxu0 0
  %876 = vmatmul.mubr.bf16.gmra.mrb[0].mxu0 %v315
  %v877 = vpop.f32.mrb[0].mxu0
  %v878 = vadd.f32 %v781, %v877
  %v879 = vpop.f32.mrb[0].mxu0
  %v880 = vpop.f32.mrb[0].mxu0
  %v881 = vadd.f32 %v784, %v880
  %v882 = vpop.f32.mrb[0].mxu0
  %883 = vmatprep.mubr.bf16.mxu0 0
  %884 = vmatmul.mubr.bf16.gmra.mrb[0].mxu0 %v320
  %v885 = vpop.f32.mrb[0].mxu0
  %v886 = vadd.f32 %v789, %v885
  %v887 = vpop.f32.mrb[0].mxu0
  %v888 = vpop.f32.mrb[0].mxu0
  %v889 = vadd.f32 %v792, %v888
  %v890 = vpop.f32.mrb[0].mxu0
  %891 = vdwg.mxu0
  %v892 = vld [vmem:[%s3] sm:$0xff]
  %v893 = vld [vmem:[%s3 + $0x8] sm:$0xff]
  %v894 = vld [vmem:[%s3 + $0x10] sm:$0xff]
  %v895 = vld [vmem:[%s3 + $0x18] sm:$0xff]
  %v896 = vld [vmem:[%s3 + $0x20] sm:$0xff]
  %v897 = vld [vmem:[%s3 + $0x28] sm:$0xff]
  %v898 = vld [vmem:[%s3 + $0x30] sm:$0xff]
  %v899 = vld [vmem:[%s3 + $0x38] sm:$0xff]
  %v900 = vld [vmem:[%s3 + $0x40] sm:$0xff]
  %v901 = vld [vmem:[%s3 + $0x48] sm:$0xff]
  %v902 = vld [vmem:[%s3 + $0x50] sm:$0xff]
  %v903 = vld [vmem:[%s3 + $0x58] sm:$0xff]
  %v904 = vld [vmem:[%s3 + $0x60] sm:$0xff]
  %v905 = vld [vmem:[%s3 + $0x68] sm:$0xff]
  %v906 = vld [vmem:[%s3 + $0x70] sm:$0xff]
  %v907 = vld [vmem:[%s3 + $0x78] sm:$0xff]
  %v908 = vadd.f32 %v830, %v892
  %v909 = vadd.f32 %v833, %v893
  %v910 = vadd.f32 %v838, %v894
  %v911 = vadd.f32 %v841, %v895
  %v912 = vadd.f32 %v846, %v896
  %v913 = vadd.f32 %v849, %v897
  %v914 = vadd.f32 %v854, %v898
  %v915 = vadd.f32 %v857, %v899
  %v916 = vadd.f32 %v862, %v900
  %v917 = vadd.f32 %v865, %v901
  %v918 = vadd.f32 %v870, %v902
  %v919 = vadd.f32 %v873, %v903
  %v920 = vadd.f32 %v878, %v904
  %v921 = vadd.f32 %v881, %v905
  %v922 = vadd.f32 %v886, %v906
  %v923 = vadd.f32 %v889, %v907
  %v924 = vmax.f32 %v908, 0.0
  %v925 = vmax.f32 %v909, 0.0
  %v926 = vmax.f32 %v910, 0.0
  %v927 = vmax.f32 %v911, 0.0
  %v928 = vmax.f32 %v912, 0.0
  %v929 = vmax.f32 %v913, 0.0
  %v930 = vmax.f32 %v914, 0.0
  %v931 = vmax.f32 %v915, 0.0
  %v932 = vmax.f32 %v916, 0.0
  %v933 = vmax.f32 %v917, 0.0
  %v934 = vmax.f32 %v918, 0.0
  %v935 = vmax.f32 %v919, 0.0
  %v936 = vmax.f32 %v920, 0.0
  %v937 = vmax.f32 %v921, 0.0
  %v938 = vmax.f32 %v922, 0.0
  %v939 = vmax.f32 %v923, 0.0
  %940 = vst [vmem:[%s4] sm:$0xff] %v924
  %941 = vst [vmem:[%s4 + $0x8] sm:$0xff] %v925
  %942 = vst [vmem:[%s4 + $0x10] sm:$0xff] %v926
  %943 = vst [vmem:[%s4 + $0x18] sm:$0xff] %v927
  %944 = vst [vmem:[%s4 + $0x20] sm:$0xff] %v928
  %945 = vst [vmem:[%s4 + $0x28] sm:$0xff] %v929
  %946 = vst [vmem:[%s4 + $0x30] sm:$0xff] %v930
  %947 = vst [vmem:[%s4 + $0x38] sm:$0xff] %v931
  %948 = vst [vmem:[%s4 + $0x40] sm:$0xff] %v932
  %949 = vst [vmem:[%s4 + $0x48] sm:$0xff] %v933
  %950 = vst [vmem:[%s4 + $0x50] sm:$0xff] %v934
  %951 = vst [vmem:[%s4 + $0x58] sm:$0xff] %v935
  %952 = vst [vmem:[%s4 + $0x60] sm:$0xff] %v936
  %953 = vst [vmem:[%s4 + $0x68] sm:$0xff] %v937
  %954 = vst [vmem:[%s4 + $0x70] sm:$0xff] %v938
  %955 = vst [vmem:[%s4 + $0x78] sm:$0xff] %v939
  // Predicated region
  $region18: #{resnet_encoder_forward.13} parent=0 // pred_check
    _
  $region19: #{resnet_encoder_forward.13} parent=0 // pred_check_branch
    %957 = sbr.rel (0) target = $region21
  $region20: #{resnet_encoder_forward.13} parent=0 // pred_region
    _
  $region21: #{resnet_encoder_forward.13} parent=0 // pred_fallthru
    _
  // Predicated region
  $region22: #{resnet_encoder_forward.13} parent=0 // pred_check
    _
  $region23: #{resnet_encoder_forward.13} parent=0 // pred_check_branch
    %959 = sbr.rel (0) target = $region25
  $region24: #{resnet_encoder_forward.13} parent=0 // pred_region
    _
  $region25: #{resnet_encoder_forward.13} parent=0 // pred_fallthru
    _

// kernel: resnet_encoder_forward.17
$region0: #{resnet_encoder_forward.17}
  #allocation0 [shape = 'u32[]', space=smem, size = 0x4, offset = 0x4, fixed_abs, tag = 'smem constant byte address 0x4 - core index']
  #allocation1 [shape = 'u32[144,128]{1,0:T(1,128)}', space=vmem, size = 0x12000, scoped, tag = 'internal scratch']
  %s0 = inlined_call_operand.vmem [shape: bf16[32,640], index: 0, kind: input, shape index: {}]
  %s1 = inlined_call_operand.vmem [shape: bf16[640,128], index: 1, kind: input, shape index: {}]
  %s2 = inlined_call_operand.vmem [shape: f32[1,128], index: 2, kind: input, shape index: {}]
  %s3 = inlined_call_operand.vmem [shape: f32[32,128], index: 3, kind: output, shape index: {}]
  %s4 = sld [smem:[#allocation0]]
  $region22: #{resnet_encoder_forward.17} parent=0
    _
  %s6 = ssub.s32 1, %s4
  %s7 = scalar_select 0, %s6, %s4
  // Predicated region
  $region2: #{resnet_encoder_forward.17} parent=0 // pred_check
    _
  $region3: #{resnet_encoder_forward.17} parent=0 // pred_check_branch
    %9 = sbr.rel (0) target = $region5
  $region4: #{resnet_encoder_forward.17} parent=0 // pred_region
    _
  $region5: #{resnet_encoder_forward.17} parent=0 // pred_fallthru
    _
  // Predicated region
  $region6: #{resnet_encoder_forward.17} parent=0 // pred_check
    _
  $region7: #{resnet_encoder_forward.17} parent=0 // pred_check_branch
    %11 = sbr.rel (0) target = $region9
  $region8: #{resnet_encoder_forward.17} parent=0 // pred_region
    _
  $region9: #{resnet_encoder_forward.17} parent=0 // pred_fallthru
    _
  // Predicated region
  $region10: #{resnet_encoder_forward.17} parent=0 // pred_check
    _
  $region11: #{resnet_encoder_forward.17} parent=0 // pred_check_branch
    %13 = sbr.rel (0) target = $region13
  $region12: #{resnet_encoder_forward.17} parent=0 // pred_region
    _
  $region13: #{resnet_encoder_forward.17} parent=0 // pred_fallthru
    _
  %v15 = vld [vmem:[%s0] sm:$0xff]
  %v16 = vld [vmem:[%s0 + $0x8] sm:$0xff]
  %v17 = vld [vmem:[%s0 + $0x10] sm:$0xf]
  %v18 = vld [vmem:[%s0 + $0x14] sm:$0xff]
  %v19 = vld [vmem:[%s0 + $0x1c] sm:$0xff]
  %v20 = vld [vmem:[%s0 + $0x24] sm:$0xf]
  %v21 = vld [vmem:[%s0 + $0x28] sm:$0xff]
  %v22 = vld [vmem:[%s0 + $0x30] sm:$0xff]
  %v23 = vld [vmem:[%s0 + $0x38] sm:$0xf]
  %v24 = vld [vmem:[%s0 + $0x3c] sm:$0xff]
  %v25 = vld [vmem:[%s0 + $0x44] sm:$0xff]
  %v26 = vld [vmem:[%s0 + $0x4c] sm:$0xf]
  %v27 = vld [vmem:[%s1] sm:$0xf]
  %v28 = vld [vmem:[%s1 + $0x4] sm:$0xf]
  %v29 = vld [vmem:[%s1 + $0x8] sm:$0xf]
  %v30 = vld [vmem:[%s1 + $0xc] sm:$0xf]
  %v31 = vld [vmem:[%s1 + $0x10] sm:$0xf]
  %v32 = vld [vmem:[%s1 + $0x14] sm:$0xf]
  %v33 = vld [vmem:[%s1 + $0x18] sm:$0xf]
  %v34 = vld [vmem:[%s1 + $0x1c] sm:$0xf]
  %v35 = vld [vmem:[%s1 + $0x20] sm:$0xf]
  %v36 = vld [vmem:[%s1 + $0x24] sm:$0xf]
  %v37 = vld [vmem:[%s1 + $0x28] sm:$0xf]
  %v38 = vld [vmem:[%s1 + $0x2c] sm:$0xf]
  %v39 = vld [vmem:[%s1 + $0x30] sm:$0xf]
  %v40 = vld [vmem:[%s1 + $0x34] sm:$0xf]
  %v41 = vld [vmem:[%s1 + $0x38] sm:$0xf]
  %v42 = vld [vmem:[%s1 + $0x3c] sm:$0xf]
  %v43 = vld [vmem:[%s1 + $0x40] sm:$0xf]
  %v44 = vld [vmem:[%s1 + $0x44] sm:$0xf]
  %v45 = vld [vmem:[%s1 + $0x48] sm:$0xf]
  %v46 = vld [vmem:[%s1 + $0x4c] sm:$0xf]
  %v47 = vld [vmem:[%s1 + $0x50] sm:$0xf]
  %v48 = vld [vmem:[%s1 + $0x54] sm:$0xf]
  %v49 = vld [vmem:[%s1 + $0x58] sm:$0xf]
  %v50 = vld [vmem:[%s1 + $0x5c] sm:$0xf]
  %v51 = vld [vmem:[%s1 + $0x60] sm:$0xf]
  %v52 = vld [vmem:[%s1 + $0x64] sm:$0xf]
  %v53 = vld [vmem:[%s1 + $0x68] sm:$0xf]
  %v54 = vld [vmem:[%s1 + $0x6c] sm:$0xf]
  %v55 = vld [vmem:[%s1 + $0x70] sm:$0xf]
  %v56 = vld [vmem:[%s1 + $0x74] sm:$0xf]
  %v57 = vld [vmem:[%s1 + $0x78] sm:$0xf]
  %v58 = vld [vmem:[%s1 + $0x7c] sm:$0xf]
  %v59 = vld [vmem:[%s1 + $0x80] sm:$0xf]
  %v60 = vld [vmem:[%s1 + $0x84] sm:$0xf]
  %v61 = vld [vmem:[%s1 + $0x88] sm:$0xf]
  %v62 = vld [vmem:[%s1 + $0x8c] sm:$0xf]
  %v63 = vld [vmem:[%s1 + $0x90] sm:$0xf]
  %v64 = vld [vmem:[%s1 + $0x94] sm:$0xf]
  %v65 = vld [vmem:[%s1 + $0x98] sm:$0xf]
  %v66 = vld [vmem:[%s1 + $0x9c] sm:$0xf]
  %v67 = vld [vmem:[%s1 + $0xa0] sm:$0xf]
  %v68 = vld [vmem:[%s1 + $0xa4] sm:$0xf]
  %v69 = vld [vmem:[%s1 + $0xa8] sm:$0xf]
  %v70 = vld [vmem:[%s1 + $0xac] sm:$0xf]
  %v71 = vld [vmem:[%s1 + $0xb0] sm:$0xf]
  %v72 = vld [vmem:[%s1 + $0xb4] sm:$0xf]
  %v73 = vld [vmem:[%s1 + $0xb8] sm:$0xf]
  %v74 = vld [vmem:[%s1 + $0xbc] sm:$0xf]
  %v75 = vld [vmem:[%s1 + $0xc0] sm:$0xf]
  %v76 = vld [vmem:[%s1 + $0xc4] sm:$0xf]
  %v77 = vld [vmem:[%s1 + $0xc8] sm:$0xf]
  %v78 = vld [vmem:[%s1 + $0xcc] sm:$0xf]
  %v79 = vld [vmem:[%s1 + $0xd0] sm:$0xf]
  %v80 = vld [vmem:[%s1 + $0xd4] sm:$0xf]
  %v81 = vld [vmem:[%s1 + $0xd8] sm:$0xf]
  %v82 = vld [vmem:[%s1 + $0xdc] sm:$0xf]
  %v83 = vld [vmem:[%s1 + $0xe0] sm:$0xf]
  %v84 = vld [vmem:[%s1 + $0xe4] sm:$0xf]
  %v85 = vld [vmem:[%s1 + $0xe8] sm:$0xf]
  %v86 = vld [vmem:[%s1 + $0xec] sm:$0xf]
  %v87 = vld [vmem:[%s1 + $0xf0] sm:$0xf]
  %v88 = vld [vmem:[%s1 + $0xf4] sm:$0xf]
  %v89 = vld [vmem:[%s1 + $0xf8] sm:$0xf]
  %v90 = vld [vmem:[%s1 + $0xfc] sm:$0xf]
  %v91 = vld [vmem:[%s1 + $0x100] sm:$0xf]
  %v92 = vld [vmem:[%s1 + $0x104] sm:$0xf]
  %v93 = vld [vmem:[%s1 + $0x108] sm:$0xf]
  %v94 = vld [vmem:[%s1 + $0x10c] sm:$0xf]
  %v95 = vld [vmem:[%s1 + $0x110] sm:$0xf]
  %v96 = vld [vmem:[%s1 + $0x114] sm:$0xf]
  %v97 = vld [vmem:[%s1 + $0x118] sm:$0xf]
  %v98 = vld [vmem:[%s1 + $0x11c] sm:$0xf]
  %v99 = vld [vmem:[%s1 + $0x120] sm:$0xf]
  %v100 = vld [vmem:[%s1 + $0x124] sm:$0xf]
  %v101 = vld [vmem:[%s1 + $0x128] sm:$0xf]
  %v102 = vld [vmem:[%s1 + $0x12c] sm:$0xf]
  %v103 = vld [vmem:[%s1 + $0x130] sm:$0xf]
  %v104 = vld [vmem:[%s1 + $0x134] sm:$0xf]
  %v105 = vld [vmem:[%s1 + $0x138] sm:$0xf]
  %v106 = vld [vmem:[%s1 + $0x13c] sm:$0xf]
  %v107 = vld [vmem:[%s2] sm:$0x1]
  %v109 = vlaneseq
  %v110 = vshrl.u32 %v109, 7
  %v111 = vsub.s32 0, %v110
  %v112 = vrot.slane %v107, %v111
  %v126 = vunpack.c.l.b16 %v15
  %v127 = vunpack.c.h.b16 %v15
  %v128 = vunpack.c.l.b16 %v16
  %v129 = vunpack.c.h.b16 %v16
  %v130 = vunpack.c.l.b16 %v17
  %v131 = vunpack.c.l.b16 %v18
  %v132 = vunpack.c.h.b16 %v18
  %v133 = vunpack.c.l.b16 %v19
  %v134 = vunpack.c.h.b16 %v19
  %v135 = vunpack.c.l.b16 %v20
  %v136 = vunpack.c.l.b16 %v21
  %v137 = vunpack.c.h.b16 %v21
  %v138 = vunpack.c.l.b16 %v22
  %v139 = vunpack.c.h.b16 %v22
  %v140 = vunpack.c.l.b16 %v23
  %v141 = vunpack.c.l.b16 %v24
  %v142 = vunpack.c.h.b16 %v24
  %v143 = vunpack.c.l.b16 %v25
  %v144 = vunpack.c.h.b16 %v25
  %v145 = vunpack.c.l.b16 %v26
  %v146 = vpack.c.b16 %v131, %v126
  %v147 = vpack.c.b16 %v132, %v127
  %v148 = vpack.c.b16 %v133, %v128
  %v149 = vpack.c.b16 %v134, %v129
  %v150 = vpack.c.b16 %v135, %v130
  %v151 = vpack.c.b16 %v141, %v136
  %v152 = vpack.c.b16 %v142, %v137
  %v153 = vpack.c.b16 %v143, %v138
  %v154 = vpack.c.b16 %v144, %v139
  %v155 = vpack.c.b16 %v145, %v140
  %v246 = vunpack.c.l.b16 %v27
  %v247 = vunpack.c.l.b16 %v28
  %v248 = vunpack.c.l.b16 %v29
  %v249 = vunpack.c.l.b16 %v30
  %v250 = vunpack.c.l.b16 %v31
  %v251 = vunpack.c.l.b16 %v32
  %v252 = vunpack.c.l.b16 %v33
  %v253 = vunpack.c.l.b16 %v34
  %v254 = vunpack.c.l.b16 %v35
  %v255 = vunpack.c.l.b16 %v36
  %v256 = vunpack.c.l.b16 %v37
  %v257 = vunpack.c.l.b16 %v38
  %v258 = vunpack.c.l.b16 %v39
  %v259 = vunpack.c.l.b16 %v40
  %v260 = vunpack.c.l.b16 %v41
  %v261 = vunpack.c.l.b16 %v42
  %v262 = vunpack.c.l.b16 %v43
  %v263 = vunpack.c.l.b16 %v44
  %v264 = vunpack.c.l.b16 %v45
  %v265 = vunpack.c.l.b16 %v46
  %v266 = vunpack.c.l.b16 %v47
  %v267 = vunpack.c.l.b16 %v48
  %v268 = vunpack.c.l.b16 %v49
  %v269 = vunpack.c.l.b16 %v50
  %v270 = vunpack.c.l.b16 %v51
  %v271 = vunpack.c.l.b16 %v52
  %v272 = vunpack.c.l.b16 %v53
  %v273 = vunpack.c.l.b16 %v54
  %v274 = vunpack.c.l.b16 %v55
  %v275 = vunpack.c.l.b16 %v56
  %v276 = vunpack.c.l.b16 %v57
  %v277 = vunpack.c.l.b16 %v58
  %v278 = vunpack.c.l.b16 %v59
  %v279 = vunpack.c.l.b16 %v60
  %v280 = vunpack.c.l.b16 %v61
  %v281 = vunpack.c.l.b16 %v62
  %v282 = vunpack.c.l.b16 %v63
  %v283 = vunpack.c.l.b16 %v64
  %v284 = vunpack.c.l.b16 %v65
  %v285 = vunpack.c.l.b16 %v66
  %v286 = vunpack.c.l.b16 %v67
  %v287 = vunpack.c.l.b16 %v68
  %v288 = vunpack.c.l.b16 %v69
  %v289 = vunpack.c.l.b16 %v70
  %v290 = vunpack.c.l.b16 %v71
  %v291 = vunpack.c.l.b16 %v72
  %v292 = vunpack.c.l.b16 %v73
  %v293 = vunpack.c.l.b16 %v74
  %v294 = vunpack.c.l.b16 %v75
  %v295 = vunpack.c.l.b16 %v76
  %v296 = vunpack.c.l.b16 %v77
  %v297 = vunpack.c.l.b16 %v78
  %v298 = vunpack.c.l.b16 %v79
  %v299 = vunpack.c.l.b16 %v80
  %v300 = vunpack.c.l.b16 %v81
  %v301 = vunpack.c.l.b16 %v82
  %v302 = vunpack.c.l.b16 %v83
  %v303 = vunpack.c.l.b16 %v84
  %v304 = vunpack.c.l.b16 %v85
  %v305 = vunpack.c.l.b16 %v86
  %v306 = vunpack.c.l.b16 %v87
  %v307 = vunpack.c.l.b16 %v88
  %v308 = vunpack.c.l.b16 %v89
  %v309 = vunpack.c.l.b16 %v90
  %v310 = vunpack.c.l.b16 %v91
  %v311 = vunpack.c.l.b16 %v92
  %v312 = vunpack.c.l.b16 %v93
  %v313 = vunpack.c.l.b16 %v94
  %v314 = vunpack.c.l.b16 %v95
  %v315 = vunpack.c.l.b16 %v96
  %v316 = vunpack.c.l.b16 %v97
  %v317 = vunpack.c.l.b16 %v98
  %v318 = vunpack.c.l.b16 %v99
  %v319 = vunpack.c.l.b16 %v100
  %v320 = vunpack.c.l.b16 %v101
  %v321 = vunpack.c.l.b16 %v102
  %v322 = vunpack.c.l.b16 %v103
  %v323 = vunpack.c.l.b16 %v104
  %v324 = vunpack.c.l.b16 %v105
  %v325 = vunpack.c.l.b16 %v106
  %v326 = vpack.c.b16 %v247, %v246
  %v327 = vpack.c.b16 %v249, %v248
  %v328 = vpack.c.b16 %v251, %v250
  %v329 = vpack.c.b16 %v253, %v252
  %v330 = vpack.c.b16 %v255, %v254
  %v331 = vpack.c.b16 %v257, %v256
  %v332 = vpack.c.b16 %v259, %v258
  %v333 = vpack.c.b16 %v261, %v260
  %v334 = vpack.c.b16 %v263, %v262
  %v335 = vpack.c.b16 %v265, %v264
  %v336 = vpack.c.b16 %v267, %v266
  %v337 = vpack.c.b16 %v269, %v268
  %v338 = vpack.c.b16 %v271, %v270
  %v339 = vpack.c.b16 %v273, %v272
  %v340 = vpack.c.b16 %v275, %v274
  %v341 = vpack.c.b16 %v277, %v276
  %v342 = vpack.c.b16 %v279, %v278
  %v343 = vpack.c.b16 %v281, %v280
  %v344 = vpack.c.b16 %v283, %v282
  %v345 = vpack.c.b16 %v285, %v284
  %v346 = vpack.c.b16 %v287, %v286
  %v347 = vpack.c.b16 %v289, %v288
  %v348 = vpack.c.b16 %v291, %v290
  %v349 = vpack.c.b16 %v293, %v292
  %v350 = vpack.c.b16 %v295, %v294
  %v351 = vpack.c.b16 %v297, %v296
  %v352 = vpack.c.b16 %v299, %v298
  %v353 = vpack.c.b16 %v301, %v300
  %v354 = vpack.c.b16 %v303, %v302
  %v355 = vpack.c.b16 %v305, %v304
  %v356 = vpack.c.b16 %v307, %v306
  %v357 = vpack.c.b16 %v309, %v308
  %v358 = vpack.c.b16 %v311, %v310
  %v359 = vpack.c.b16 %v313, %v312
  %v360 = vpack.c.b16 %v315, %v314
  %v361 = vpack.c.b16 %v317, %v316
  %v362 = vpack.c.b16 %v319, %v318
  %v363 = vpack.c.b16 %v321, %v320
  %v364 = vpack.c.b16 %v323, %v322
  %v365 = vpack.c.b16 %v325, %v324
  %406 = vmatprep.subr.bf16.mxu0 0
  %407 = vmatpush1.bf16.msra.mxu0 %v326
  %408 = vmatprep.subr.bf16.mxu0 0
  %409 = vmatpush1.bf16.msra.mxu0 %v327
  %410 = vmatprep.subr.bf16.mxu0 0
  %411 = vmatpush1.bf16.msra.mxu0 %v328
  %412 = vmatprep.subr.bf16.mxu0 0
  %413 = vmatpush1.bf16.msra.mxu0 %v329
  %414 = vmatprep.subr.bf16.mxu0 0
  %415 = vmatpush1.bf16.msra.mxu0 %v330
  %416 = vmatprep.subr.bf16.mxu0 0
  %417 = vmatpush1.bf16.msra.mxu0 %v331
  %418 = vmatprep.subr.bf16.mxu0 0
  %419 = vmatpush1.bf16.msra.mxu0 %v332
  %420 = vmatprep.subr.bf16.mxu0 0
  %421 = vmatpush1.bf16.msra.mxu0 %v333
  %422 = vmatprep.subr.bf16.mxu0 0
  %423 = vmatpush1.bf16.msra.mxu0 %v334
  %424 = vmatprep.subr.bf16.mxu0 0
  %425 = vmatpush1.bf16.msra.mxu0 %v335
  %426 = vmatprep.subr.bf16.mxu0 0
  %427 = vmatpush1.bf16.msra.mxu0 %v336
  %428 = vmatprep.subr.bf16.mxu0 0
  %429 = vmatpush1.bf16.msra.mxu0 %v337
  %430 = vmatprep.subr.bf16.mxu0 0
  %431 = vmatpush1.bf16.msra.mxu0 %v338
  %432 = vmatprep.subr.bf16.mxu0 0
  %433 = vmatpush1.bf16.msra.mxu0 %v339
  %434 = vmatprep.subr.bf16.mxu0 0
  %435 = vmatpush1.bf16.msra.mxu0 %v340
  %436 = vmatprep.subr.bf16.mxu0 0
  %437 = vmatpush1.bf16.msra.mxu0 %v341
  %438 = vmatprep.mubr.bf16.mxu0 %v147
  %439 = vmatmul.mubr.bf16.gmra.mrb[0].mxu0 %v146
  %v440 = vpop.f32.mrb[0].mxu0
  %v441 = vadd.f32 %v112, %v440
  %v442 = vpop.f32.mrb[0].mxu0
  %v443 = vpop.f32.mrb[0].mxu0
  %v444 = vadd.f32 %v112, %v443
  %v445 = vpop.f32.mrb[0].mxu0
  %446 = vmatprep.mubr.bf16.mxu0 %v152
  %447 = vmatmul.mubr.bf16.gmra.mrb[0].mxu0 %v151
  %v448 = vpop.f32.mrb[0].mxu0
  %v449 = vadd.f32 %v112, %v448
  %v450 = vpop.f32.mrb[0].mxu0
  %v451 = vpop.f32.mrb[0].mxu0
  %v452 = vadd.f32 %v112, %v451
  %v453 = vpop.f32.mrb[0].mxu0
  %454 = vdwg.mxu0
  %455 = vmatprep.subr.bf16.mxu0 0
  %456 = vmatpush1.bf16.msra.mxu0 %v342
  %457 = vmatprep.subr.bf16.mxu0 0
  %458 = vmatpush1.bf16.msra.mxu0 %v343
  %459 = vmatprep.subr.bf16.mxu0 0
  %460 = vmatpush1.bf16.msra.mxu0 %v344
  %461 = vmatprep.subr.bf16.mxu0 0
  %462 = vmatpush1.bf16.msra.mxu0 %v345
  %463 = vmatprep.subr.bf16.mxu0 0
  %464 = vmatpush1.bf16.msra.mxu0 %v346
  %465 = vmatprep.subr.bf16.mxu0 0
  %466 = vmatpush1.bf16.msra.mxu0 %v347
  %467 = vmatprep.subr.bf16.mxu0 0
  %468 = vmatpush1.bf16.msra.mxu0 %v348
  %469 = vmatprep.subr.bf16.mxu0 0
  %470 = vmatpush1.bf16.msra.mxu0 %v349
  %471 = vmatprep.subr.bf16.mxu0 0
  %472 = vmatpush1.bf16.msra.mxu0 %v350
  %473 = vmatprep.subr.bf16.mxu0 0
  %474 = vmatpush1.bf16.msra.mxu0 %v351
  %475 = vmatprep.subr.bf16.mxu0 0
  %476 = vmatpush1.bf16.msra.mxu0 %v352
  %477 = vmatprep.subr.bf16.mxu0 0
  %478 = vmatpush1.bf16.msra.mxu0 %v353
  %479 = vmatprep.subr.bf16.mxu0 0
  %480 = vmatpush1.bf16.msra.mxu0 %v354
  %481 = vmatprep.subr.bf16.mxu0 0
  %482 = vmatpush1.bf16.msra.mxu0 %v355
  %483 = vmatprep.subr.bf16.mxu0 0
  %484 = vmatpush1.bf16.msra.mxu0 %v356
  %485 = vmatprep.subr.bf16.mxu0 0
  %486 = vmatpush1.bf16.msra.mxu0 %v357
  %487 = vmatprep.mubr.bf16.mxu0 %v149
  %488 = vmatmul.mubr.bf16.gmra.mrb[0].mxu0 %v148
  %v489 = vpop.f32.mrb[0].mxu0
  %v490 = vadd.f32 %v441, %v489
  %v491 = vpop.f32.mrb[0].mxu0
  %v492 = vpop.f32.mrb[0].mxu0
  %v493 = vadd.f32 %v444, %v492
  %v494 = vpop.f32.mrb[0].mxu0
  %495 = vmatprep.mubr.bf16.mxu0 %v154
  %496 = vmatmul.mubr.bf16.gmra.mrb[0].mxu0 %v153
  %v497 = vpop.f32.mrb[0].mxu0
  %v498 = vadd.f32 %v449, %v497
  %v499 = vpop.f32.mrb[0].mxu0
  %v500 = vpop.f32.mrb[0].mxu0
  %v501 = vadd.f32 %v452, %v500
  %v502 = vpop.f32.mrb[0].mxu0
  %503 = vdwg.mxu0
  %504 = vmatprep.subr.bf16.mxu0 0
  %505 = vmatpush1.bf16.msra.mxu0 %v358
  %506 = vmatprep.subr.bf16.mxu0 0
  %507 = vmatpush1.bf16.msra.mxu0 %v359
  %508 = vmatprep.subr.bf16.mxu0 0
  %509 = vmatpush1.bf16.msra.mxu0 %v360
  %510 = vmatprep.subr.bf16.mxu0 0
  %511 = vmatpush1.bf16.msra.mxu0 %v361
  %512 = vmatprep.subr.bf16.mxu0 0
  %513 = vmatpush1.bf16.msra.mxu0 %v362
  %514 = vmatprep.subr.bf16.mxu0 0
  %515 = vmatpush1.bf16.msra.mxu0 %v363
  %516 = vmatprep.subr.bf16.mxu0 0
  %517 = vmatpush1.bf16.msra.mxu0 %v364
  %518 = vmatprep.subr.bf16.mxu0 0
  %519 = vmatpush1.bf16.msra.mxu0 %v365
  %520 = vmatprep.subr.bf16.mxu0 0
  %521 = vmatpush1.bf16.msra.mxu0 0
  %522 = vmatprep.subr.bf16.mxu0 0
  %523 = vmatpush1.bf16.msra.mxu0 0
  %524 = vmatprep.subr.bf16.mxu0 0
  %525 = vmatpush1.bf16.msra.mxu0 0
  %526 = vmatprep.subr.bf16.mxu0 0
  %527 = vmatpush1.bf16.msra.mxu0 0
  %528 = vmatprep.subr.bf16.mxu0 0
  %529 = vmatpush1.bf16.msra.mxu0 0
  %530 = vmatprep.subr.bf16.mxu0 0
  %531 = vmatpush1.bf16.msra.mxu0 0
  %532 = vmatprep.subr.bf16.mxu0 0
  %533 = vmatpush1.bf16.msra.mxu0 0
  %534 = vmatprep.subr.bf16.mxu0 0
  %535 = vmatpush1.bf16.msra.mxu0 0
  %536 = vmatprep.mubr.bf16.mxu0 0
  %537 = vmatmul.mubr.bf16.gmra.mrb[0].mxu0 %v150
  %v538 = vpop.f32.mrb[0].mxu0
  %v539 = vadd.f32 %v490, %v538
  %v540 = vpop.f32.mrb[0].mxu0
  %v541 = vpop.f32.mrb[0].mxu0
  %v542 = vadd.f32 %v493, %v541
  %v543 = vpop.f32.mrb[0].mxu0
  %544 = vmatprep.mubr.bf16.mxu0 0
  %545 = vmatmul.mubr.bf16.gmra.mrb[0].mxu0 %v155
  %v546 = vpop.f32.mrb[0].mxu0
  %v547 = vadd.f32 %v498, %v546
  %v548 = vpop.f32.mrb[0].mxu0
  %v549 = vpop.f32.mrb[0].mxu0
  %v550 = vadd.f32 %v501, %v549
  %v551 = vpop.f32.mrb[0].mxu0
  %552 = vdwg.mxu0
  %v553 = vmax.f32 %v539, 0.0
  %v554 = vmax.f32 %v542, 0.0
  %v555 = vmax.f32 %v547, 0.0
  %v556 = vmax.f32 %v550, 0.0
  %557 = vst [vmem:[%s3] sm:$0xff] %v553
  %558 = vst [vmem:[%s3 + $0x8] sm:$0xff] %v554
  %559 = vst [vmem:[%s3 + $0x10] sm:$0xff] %v555
  %560 = vst [vmem:[%s3 + $0x18] sm:$0xff] %v556
  // Predicated region
  $region14: #{resnet_encoder_forward.17} parent=0 // pred_check
    _
  $region15: #{resnet_encoder_forward.17} parent=0 // pred_check_branch
    %562 = sbr.rel (0) target = $region17
  $region16: #{resnet_encoder_forward.17} parent=0 // pred_region
    _
  $region17: #{resnet_encoder_forward.17} parent=0 // pred_fallthru
    _
  // Predicated region
  $region18: #{resnet_encoder_forward.17} parent=0 // pred_check
    _
  $region19: #{resnet_encoder_forward.17} parent=0 // pred_check_branch
    %564 = sbr.rel (0) target = $region21
  $region20: #{resnet_encoder_forward.17} parent=0 // pred_region
    _
  $region21: #{resnet_encoder_forward.17} parent=0 // pred_fallthru
    _

// kernel: resnet_encoder_forward.16
$region0: #{resnet_encoder_forward.16}
  #allocation0 [shape = 'u32[]', space=smem, size = 0x4, offset = 0x4, fixed_abs, tag = 'smem constant byte address 0x4 - core index']
  #allocation1 [shape = 'u32[144,128]{1,0:T(1,128)}', space=vmem, size = 0x12000, scoped, tag = 'internal scratch']
  %s0 = inlined_call_operand.vmem [shape: bf16[32,128], index: 0, kind: input, shape index: {}]
  %s1 = inlined_call_operand.vmem [shape: bf16[128,128], index: 1, kind: input, shape index: {}]
  %s2 = inlined_call_operand.vmem [shape: f32[1,128], index: 2, kind: input, shape index: {}]
  %s3 = inlined_call_operand.vmem [shape: f32[32,128], index: 3, kind: output, shape index: {}]
  %s4 = sld [smem:[#allocation0]]
  $region22: #{resnet_encoder_forward.16} parent=0
    _
  %s6 = ssub.s32 1, %s4
  %s7 = scalar_select 0, %s6, %s4
  // Predicated region
  $region2: #{resnet_encoder_forward.16} parent=0 // pred_check
    _
  $region3: #{resnet_encoder_forward.16} parent=0 // pred_check_branch
    %9 = sbr.rel (0) target = $region5
  $region4: #{resnet_encoder_forward.16} parent=0 // pred_region
    _
  $region5: #{resnet_encoder_forward.16} parent=0 // pred_fallthru
    _
  // Predicated region
  $region6: #{resnet_encoder_forward.16} parent=0 // pred_check
    _
  $region7: #{resnet_encoder_forward.16} parent=0 // pred_check_branch
    %11 = sbr.rel (0) target = $region9
  $region8: #{resnet_encoder_forward.16} parent=0 // pred_region
    _
  $region9: #{resnet_encoder_forward.16} parent=0 // pred_fallthru
    _
  // Predicated region
  $region10: #{resnet_encoder_forward.16} parent=0 // pred_check
    _
  $region11: #{resnet_encoder_forward.16} parent=0 // pred_check_branch
    %13 = sbr.rel (0) target = $region13
  $region12: #{resnet_encoder_forward.16} parent=0 // pred_region
    _
  $region13: #{resnet_encoder_forward.16} parent=0 // pred_fallthru
    _
  %v15 = vld [vmem:[%s0] sm:$0xf]
  %v16 = vld [vmem:[%s0 + $0x4] sm:$0xf]
  %v17 = vld [vmem:[%s0 + $0x8] sm:$0xf]
  %v18 = vld [vmem:[%s0 + $0xc] sm:$0xf]
  %v19 = vld [vmem:[%s1] sm:$0xf]
  %v20 = vld [vmem:[%s1 + $0x4] sm:$0xf]
  %v21 = vld [vmem:[%s1 + $0x8] sm:$0xf]
  %v22 = vld [vmem:[%s1 + $0xc] sm:$0xf]
  %v23 = vld [vmem:[%s1 + $0x10] sm:$0xf]
  %v24 = vld [vmem:[%s1 + $0x14] sm:$0xf]
  %v25 = vld [vmem:[%s1 + $0x18] sm:$0xf]
  %v26 = vld [vmem:[%s1 + $0x1c] sm:$0xf]
  %v27 = vld [vmem:[%s1 + $0x20] sm:$0xf]
  %v28 = vld [vmem:[%s1 + $0x24] sm:$0xf]
  %v29 = vld [vmem:[%s1 + $0x28] sm:$0xf]
  %v30 = vld [vmem:[%s1 + $0x2c] sm:$0xf]
  %v31 = vld [vmem:[%s1 + $0x30] sm:$0xf]
  %v32 = vld [vmem:[%s1 + $0x34] sm:$0xf]
  %v33 = vld [vmem:[%s1 + $0x38] sm:$0xf]
  %v34 = vld [vmem:[%s1 + $0x3c] sm:$0xf]
  %v35 = vld [vmem:[%s2] sm:$0x1]
  %v37 = vlaneseq
  %v38 = vshrl.u32 %v37, 7
  %v39 = vsub.s32 0, %v38
  %v40 = vrot.slane %v35, %v39
  %v46 = vunpack.c.l.b16 %v15
  %v47 = vunpack.c.l.b16 %v16
  %v48 = vunpack.c.l.b16 %v17
  %v49 = vunpack.c.l.b16 %v18
  %v50 = vpack.c.b16 %v47, %v46
  %v51 = vpack.c.b16 %v49, %v48
  %v70 = vunpack.c.l.b16 %v19
  %v71 = vunpack.c.l.b16 %v20
  %v72 = vunpack.c.l.b16 %v21
  %v73 = vunpack.c.l.b16 %v22
  %v74 = vunpack.c.l.b16 %v23
  %v75 = vunpack.c.l.b16 %v24
  %v76 = vunpack.c.l.b16 %v25
  %v77 = vunpack.c.l.b16 %v26
  %v78 = vunpack.c.l.b16 %v27
  %v79 = vunpack.c.l.b16 %v28
  %v80 = vunpack.c.l.b16 %v29
  %v81 = vunpack.c.l.b16 %v30
  %v82 = vunpack.c.l.b16 %v31
  %v83 = vunpack.c.l.b16 %v32
  %v84 = vunpack.c.l.b16 %v33
  %v85 = vunpack.c.l.b16 %v34
  %v86 = vpack.c.b16 %v71, %v70
  %v87 = vpack.c.b16 %v73, %v72
  %v88 = vpack.c.b16 %v75, %v74
  %v89 = vpack.c.b16 %v77, %v76
  %v90 = vpack.c.b16 %v79, %v78
  %v91 = vpack.c.b16 %v81, %v80
  %v92 = vpack.c.b16 %v83, %v82
  %v93 = vpack.c.b16 %v85, %v84
  %102 = vmatprep.subr.bf16.mxu0 0
  %103 = vmatpush1.bf16.msra.mxu0 %v86
  %104 = vmatprep.subr.bf16.mxu0 0
  %105 = vmatpush1.bf16.msra.mxu0 %v87
  %106 = vmatprep.subr.bf16.mxu0 0
  %107 = vmatpush1.bf16.msra.mxu0 %v88
  %108 = vmatprep.subr.bf16.mxu0 0
  %109 = vmatpush1.bf16.msra.mxu0 %v89
  %110 = vmatprep.subr.bf16.mxu0 0
  %111 = vmatpush1.bf16.msra.mxu0 %v90
  %112 = vmatprep.subr.bf16.mxu0 0
  %113 = vmatpush1.bf16.msra.mxu0 %v91
  %114 = vmatprep.subr.bf16.mxu0 0
  %115 = vmatpush1.bf16.msra.mxu0 %v92
  %116 = vmatprep.subr.bf16.mxu0 0
  %117 = vmatpush1.bf16.msra.mxu0 %v93
  %118 = vmatprep.subr.bf16.mxu0 0
  %119 = vmatpush1.bf16.msra.mxu0 0
  %120 = vmatprep.subr.bf16.mxu0 0
  %121 = vmatpush1.bf16.msra.mxu0 0
  %122 = vmatprep.subr.bf16.mxu0 0
  %123 = vmatpush1.bf16.msra.mxu0 0
  %124 = vmatprep.subr.bf16.mxu0 0
  %125 = vmatpush1.bf16.msra.mxu0 0
  %126 = vmatprep.subr.bf16.mxu0 0
  %127 = vmatpush1.bf16.msra.mxu0 0
  %128 = vmatprep.subr.bf16.mxu0 0
  %129 = vmatpush1.bf16.msra.mxu0 0
  %130 = vmatprep.subr.bf16.mxu0 0
  %131 = vmatpush1.bf16.msra.mxu0 0
  %132 = vmatprep.subr.bf16.mxu0 0
  %133 = vmatpush1.bf16.msra.mxu0 0
  %134 = vmatprep.mubr.bf16.mxu0 0
  %135 = vmatmul.mubr.bf16.gmra.mrb[0].mxu0 %v50
  %v136 = vpop.f32.mrb[0].mxu0
  %v137 = vadd.f32 %v40, %v136
  %v138 = vpop.f32.mrb[0].mxu0
  %v139 = vpop.f32.mrb[0].mxu0
  %v140 = vadd.f32 %v40, %v139
  %v141 = vpop.f32.mrb[0].mxu0
  %142 = vmatprep.mubr.bf16.mxu0 0
  %143 = vmatmul.mubr.bf16.gmra.mrb[0].mxu0 %v51
  %v144 = vpop.f32.mrb[0].mxu0
  %v145 = vadd.f32 %v40, %v144
  %v146 = vpop.f32.mrb[0].mxu0
  %v147 = vpop.f32.mrb[0].mxu0
  %v148 = vadd.f32 %v40, %v147
  %v149 = vpop.f32.mrb[0].mxu0
  %150 = vdwg.mxu0
  %151 = vst [vmem:[%s3] sm:$0xff] %v137
  %152 = vst [vmem:[%s3 + $0x8] sm:$0xff] %v140
  %153 = vst [vmem:[%s3 + $0x10] sm:$0xff] %v145
  %154 = vst [vmem:[%s3 + $0x18] sm:$0xff] %v148
  // Predicated region
  $region14: #{resnet_encoder_forward.16} parent=0 // pred_check
    _
  $region15: #{resnet_encoder_forward.16} parent=0 // pred_check_branch
    %156 = sbr.rel (0) target = $region17
  $region16: #{resnet_encoder_forward.16} parent=0 // pred_region
    _
  $region17: #{resnet_encoder_forward.16} parent=0 // pred_fallthru
    _
  // Predicated region
  $region18: #{resnet_encoder_forward.16} parent=0 // pred_check
    _
  $region19: #{resnet_encoder_forward.16} parent=0 // pred_check_branch
    %158 = sbr.rel (0) target = $region21
  $region20: #{resnet_encoder_forward.16} parent=0 // pred_region
    _
  $region21: #{resnet_encoder_forward.16} parent=0 // pred_fallthru
    _

// kernel: resnet_encoder_forward.19
$region0: #{resnet_encoder_forward.19}
  #allocation0 [shape = 'u32[]', space=smem, size = 0x4, offset = 0x4, fixed_abs, tag = 'smem constant byte address 0x4 - core index']
  #allocation1 [shape = 'u32[144,128]{1,0:T(1,128)}', space=vmem, size = 0x12000, scoped, tag = 'internal scratch']
  %s0 = inlined_call_operand.vmem [shape: bf16[32,1152], index: 0, kind: input, shape index: {}]
  %s1 = inlined_call_operand.vmem [shape: bf16[1152,128], index: 1, kind: input, shape index: {}]
  %s2 = inlined_call_operand.vmem [shape: f32[1,128], index: 2, kind: input, shape index: {}]
  %s3 = inlined_call_operand.vmem [shape: f32[32,128], index: 3, kind: output, shape index: {}]
  %s4 = sld [smem:[#allocation0]]
  $region22: #{resnet_encoder_forward.19} parent=0
    _
  %s6 = ssub.s32 1, %s4
  %s7 = scalar_select 0, %s6, %s4
  // Predicated region
  $region2: #{resnet_encoder_forward.19} parent=0 // pred_check
    _
  $region3: #{resnet_encoder_forward.19} parent=0 // pred_check_branch
    %9 = sbr.rel (0) target = $region5
  $region4: #{resnet_encoder_forward.19} parent=0 // pred_region
    _
  $region5: #{resnet_encoder_forward.19} parent=0 // pred_fallthru
    _
  // Predicated region
  $region6: #{resnet_encoder_forward.19} parent=0 // pred_check
    _
  $region7: #{resnet_encoder_forward.19} parent=0 // pred_check_branch
    %11 = sbr.rel (0) target = $region9
  $region8: #{resnet_encoder_forward.19} parent=0 // pred_region
    _
  $region9: #{resnet_encoder_forward.19} parent=0 // pred_fallthru
    _
  // Predicated region
  $region10: #{resnet_encoder_forward.19} parent=0 // pred_check
    _
  $region11: #{resnet_encoder_forward.19} parent=0 // pred_check_branch
    %13 = sbr.rel (0) target = $region13
  $region12: #{resnet_encoder_forward.19} parent=0 // pred_region
    _
  $region13: #{resnet_encoder_forward.19} parent=0 // pred_fallthru
    _
  %v15 = vld [vmem:[%s0] sm:$0xff]
  %v16 = vld [vmem:[%s0 + $0x8] sm:$0xff]
  %v17 = vld [vmem:[%s0 + $0x10] sm:$0xff]
  %v18 = vld [vmem:[%s0 + $0x18] sm:$0xff]
  %v19 = vld [vmem:[%s0 + $0x20] sm:$0xf]
  %v20 = vld [vmem:[%s0 + $0x24] sm:$0xff]
  %v21 = vld [vmem:[%s0 + $0x2c] sm:$0xff]
  %v22 = vld [vmem:[%s0 + $0x34] sm:$0xff]
  %v23 = vld [vmem:[%s0 + $0x3c] sm:$0xff]
  %v24 = vld [vmem:[%s0 + $0x44] sm:$0xf]
  %v25 = vld [vmem:[%s0 + $0x48] sm:$0xff]
  %v26 = vld [vmem:[%s0 + $0x50] sm:$0xff]
  %v27 = vld [vmem:[%s0 + $0x58] sm:$0xff]
  %v28 = vld [vmem:[%s0 + $0x60] sm:$0xff]
  %v29 = vld [vmem:[%s0 + $0x68] sm:$0xf]
  %v30 = vld [vmem:[%s0 + $0x6c] sm:$0xff]
  %v31 = vld [vmem:[%s0 + $0x74] sm:$0xff]
  %v32 = vld [vmem:[%s0 + $0x7c] sm:$0xff]
  %v33 = vld [vmem:[%s0 + $0x84] sm:$0xff]
  %v34 = vld [vmem:[%s0 + $0x8c] sm:$0xf]
  %v35 = vld [vmem:[%s1] sm:$0xf]
  %v36 = vld [vmem:[%s1 + $0x4] sm:$0xf]
  %v37 = vld [vmem:[%s1 + $0x8] sm:$0xf]
  %v38 = vld [vmem:[%s1 + $0xc] sm:$0xf]
  %v39 = vld [vmem:[%s1 + $0x10] sm:$0xf]
  %v40 = vld [vmem:[%s1 + $0x14] sm:$0xf]
  %v41 = vld [vmem:[%s1 + $0x18] sm:$0xf]
  %v42 = vld [vmem:[%s1 + $0x1c] sm:$0xf]
  %v43 = vld [vmem:[%s1 + $0x20] sm:$0xf]
  %v44 = vld [vmem:[%s1 + $0x24] sm:$0xf]
  %v45 = vld [vmem:[%s1 + $0x28] sm:$0xf]
  %v46 = vld [vmem:[%s1 + $0x2c] sm:$0xf]
  %v47 = vld [vmem:[%s1 + $0x30] sm:$0xf]
  %v48 = vld [vmem:[%s1 + $0x34] sm:$0xf]
  %v49 = vld [vmem:[%s1 + $0x38] sm:$0xf]
  %v50 = vld [vmem:[%s1 + $0x3c] sm:$0xf]
  %v51 = vld [vmem:[%s1 + $0x40] sm:$0xf]
  %v52 = vld [vmem:[%s1 + $0x44] sm:$0xf]
  %v53 = vld [vmem:[%s1 + $0x48] sm:$0xf]
  %v54 = vld [vmem:[%s1 + $0x4c] sm:$0xf]
  %v55 = vld [vmem:[%s1 + $0x50] sm:$0xf]
  %v56 = vld [vmem:[%s1 + $0x54] sm:$0xf]
  %v57 = vld [vmem:[%s1 + $0x58] sm:$0xf]
  %v58 = vld [vmem:[%s1 + $0x5c] sm:$0xf]
  %v59 = vld [vmem:[%s1 + $0x60] sm:$0xf]
  %v60 = vld [vmem:[%s1 + $0x64] sm:$0xf]
  %v61 = vld [vmem:[%s1 + $0x68] sm:$0xf]
  %v62 = vld [vmem:[%s1 + $0x6c] sm:$0xf]
  %v63 = vld [vmem:[%s1 + $0x70] sm:$0xf]
  %v64 = vld [vmem:[%s1 + $0x74] sm:$0xf]
  %v65 = vld [vmem:[%s1 + $0x78] sm:$0xf]
  %v66 = vld [vmem:[%s1 + $0x7c] sm:$0xf]
  %v67 = vld [vmem:[%s1 + $0x80] sm:$0xf]
  %v68 = vld [vmem:[%s1 + $0x84] sm:$0xf]
  %v69 = vld [vmem:[%s1 + $0x88] sm:$0xf]
  %v70 = vld [vmem:[%s1 + $0x8c] sm:$0xf]
  %v71 = vld [vmem:[%s1 + $0x90] sm:$0xf]
  %v72 = vld [vmem:[%s1 + $0x94] sm:$0xf]
  %v73 = vld [vmem:[%s1 + $0x98] sm:$0xf]
  %v74 = vld [vmem:[%s1 + $0x9c] sm:$0xf]
  %v75 = vld [vmem:[%s1 + $0xa0] sm:$0xf]
  %v76 = vld [vmem:[%s1 + $0xa4] sm:$0xf]
  %v77 = vld [vmem:[%s1 + $0xa8] sm:$0xf]
  %v78 = vld [vmem:[%s1 + $0xac] sm:$0xf]
  %v79 = vld [vmem:[%s1 + $0xb0] sm:$0xf]
  %v80 = vld [vmem:[%s1 + $0xb4] sm:$0xf]
  %v81 = vld [vmem:[%s1 + $0xb8] sm:$0xf]
  %v82 = vld [vmem:[%s1 + $0xbc] sm:$0xf]
  %v83 = vld [vmem:[%s1 + $0xc0] sm:$0xf]
  %v84 = vld [vmem:[%s1 + $0xc4] sm:$0xf]
  %v85 = vld [vmem:[%s1 + $0xc8] sm:$0xf]
  %v86 = vld [vmem:[%s1 + $0xcc] sm:$0xf]
  %v87 = vld [vmem:[%s1 + $0xd0] sm:$0xf]
  %v88 = vld [vmem:[%s1 + $0xd4] sm:$0xf]
  %v89 = vld [vmem:[%s1 + $0xd8] sm:$0xf]
  %v90 = vld [vmem:[%s1 + $0xdc] sm:$0xf]
  %v91 = vld [vmem:[%s1 + $0xe0] sm:$0xf]
  %v92 = vld [vmem:[%s1 + $0xe4] sm:$0xf]
  %v93 = vld [vmem:[%s1 + $0xe8] sm:$0xf]
  %v94 = vld [vmem:[%s1 + $0xec] sm:$0xf]
  %v95 = vld [vmem:[%s1 + $0xf0] sm:$0xf]
  %v96 = vld [vmem:[%s1 + $0xf4] sm:$0xf]
  %v97 = vld [vmem:[%s1 + $0xf8] sm:$0xf]
  %v98 = vld [vmem:[%s1 + $0xfc] sm:$0xf]
  %v99 = vld [vmem:[%s1 + $0x100] sm:$0xf]
  %v100 = vld [vmem:[%s1 + $0x104] sm:$0xf]
  %v101 = vld [vmem:[%s1 + $0x108] sm:$0xf]
  %v102 = vld [vmem:[%s1 + $0x10c] sm:$0xf]
  %v103 = vld [vmem:[%s1 + $0x110] sm:$0xf]
  %v104 = vld [vmem:[%s1 + $0x114] sm:$0xf]
  %v105 = vld [vmem:[%s1 + $0x118] sm:$0xf]
  %v106 = vld [vmem:[%s1 + $0x11c] sm:$0xf]
  %v107 = vld [vmem:[%s1 + $0x120] sm:$0xf]
  %v108 = vld [vmem:[%s1 + $0x124] sm:$0xf]
  %v109 = vld [vmem:[%s1 + $0x128] sm:$0xf]
  %v110 = vld [vmem:[%s1 + $0x12c] sm:$0xf]
  %v111 = vld [vmem:[%s1 + $0x130] sm:$0xf]
  %v112 = vld [vmem:[%s1 + $0x134] sm:$0xf]
  %v113 = vld [vmem:[%s1 + $0x138] sm:$0xf]
  %v114 = vld [vmem:[%s1 + $0x13c] sm:$0xf]
  %v115 = vld [vmem:[%s1 + $0x140] sm:$0xf]
  %v116 = vld [vmem:[%s1 + $0x144] sm:$0xf]
  %v117 = vld [vmem:[%s1 + $0x148] sm:$0xf]
  %v118 = vld [vmem:[%s1 + $0x14c] sm:$0xf]
  %v119 = vld [vmem:[%s1 + $0x150] sm:$0xf]
  %v120 = vld [vmem:[%s1 + $0x154] sm:$0xf]
  %v121 = vld [vmem:[%s1 + $0x158] sm:$0xf]
  %v122 = vld [vmem:[%s1 + $0x15c] sm:$0xf]
  %v123 = vld [vmem:[%s1 + $0x160] sm:$0xf]
  %v124 = vld [vmem:[%s1 + $0x164] sm:$0xf]
  %v125 = vld [vmem:[%s1 + $0x168] sm:$0xf]
  %v126 = vld [vmem:[%s1 + $0x16c] sm:$0xf]
  %v127 = vld [vmem:[%s1 + $0x170] sm:$0xf]
  %v128 = vld [vmem:[%s1 + $0x174] sm:$0xf]
  %v129 = vld [vmem:[%s1 + $0x178] sm:$0xf]
  %v130 = vld [vmem:[%s1 + $0x17c] sm:$0xf]
  %v131 = vld [vmem:[%s1 + $0x180] sm:$0xf]
  %v132 = vld [vmem:[%s1 + $0x184] sm:$0xf]
  %v133 = vld [vmem:[%s1 + $0x188] sm:$0xf]
  %v134 = vld [vmem:[%s1 + $0x18c] sm:$0xf]
  %v135 = vld [vmem:[%s1 + $0x190] sm:$0xf]
  %v136 = vld [vmem:[%s1 + $0x194] sm:$0xf]
  %v137 = vld [vmem:[%s1 + $0x198] sm:$0xf]
  %v138 = vld [vmem:[%s1 + $0x19c] sm:$0xf]
  %v139 = vld [vmem:[%s1 + $0x1a0] sm:$0xf]
  %v140 = vld [vmem:[%s1 + $0x1a4] sm:$0xf]
  %v141 = vld [vmem:[%s1 + $0x1a8] sm:$0xf]
  %v142 = vld [vmem:[%s1 + $0x1ac] sm:$0xf]
  %v143 = vld [vmem:[%s1 + $0x1b0] sm:$0xf]
  %v144 = vld [vmem:[%s1 + $0x1b4] sm:$0xf]
  %v145 = vld [vmem:[%s1 + $0x1b8] sm:$0xf]
  %v146 = vld [vmem:[%s1 + $0x1bc] sm:$0xf]
  %v147 = vld [vmem:[%s1 + $0x1c0] sm:$0xf]
  %v148 = vld [vmem:[%s1 + $0x1c4] sm:$0xf]
  %v149 = vld [vmem:[%s1 + $0x1c8] sm:$0xf]
  %v150 = vld [vmem:[%s1 + $0x1cc] sm:$0xf]
  %v151 = vld [vmem:[%s1 + $0x1d0] sm:$0xf]
  %v152 = vld [vmem:[%s1 + $0x1d4] sm:$0xf]
  %v153 = vld [vmem:[%s1 + $0x1d8] sm:$0xf]
  %v154 = vld [vmem:[%s1 + $0x1dc] sm:$0xf]
  %v155 = vld [vmem:[%s1 + $0x1e0] sm:$0xf]
  %v156 = vld [vmem:[%s1 + $0x1e4] sm:$0xf]
  %v157 = vld [vmem:[%s1 + $0x1e8] sm:$0xf]
  %v158 = vld [vmem:[%s1 + $0x1ec] sm:$0xf]
  %v159 = vld [vmem:[%s1 + $0x1f0] sm:$0xf]
  %v160 = vld [vmem:[%s1 + $0x1f4] sm:$0xf]
  %v161 = vld [vmem:[%s1 + $0x1f8] sm:$0xf]
  %v162 = vld [vmem:[%s1 + $0x1fc] sm:$0xf]
  %v163 = vld [vmem:[%s1 + $0x200] sm:$0xf]
  %v164 = vld [vmem:[%s1 + $0x204] sm:$0xf]
  %v165 = vld [vmem:[%s1 + $0x208] sm:$0xf]
  %v166 = vld [vmem:[%s1 + $0x20c] sm:$0xf]
  %v167 = vld [vmem:[%s1 + $0x210] sm:$0xf]
  %v168 = vld [vmem:[%s1 + $0x214] sm:$0xf]
  %v169 = vld [vmem:[%s1 + $0x218] sm:$0xf]
  %v170 = vld [vmem:[%s1 + $0x21c] sm:$0xf]
  %v171 = vld [vmem:[%s1 + $0x220] sm:$0xf]
  %v172 = vld [vmem:[%s1 + $0x224] sm:$0xf]
  %v173 = vld [vmem:[%s1 + $0x228] sm:$0xf]
  %v174 = vld [vmem:[%s1 + $0x22c] sm:$0xf]
  %v175 = vld [vmem:[%s1 + $0x230] sm:$0xf]
  %v176 = vld [vmem:[%s1 + $0x234] sm:$0xf]
  %v177 = vld [vmem:[%s1 + $0x238] sm:$0xf]
  %v178 = vld [vmem:[%s1 + $0x23c] sm:$0xf]
  %v179 = vld [vmem:[%s2] sm:$0x1]
  %v181 = vlaneseq
  %v182 = vshrl.u32 %v181, 7
  %v183 = vsub.s32 0, %v182
  %v184 = vrot.slane %v179, %v183
  %v206 = vunpack.c.l.b16 %v15
  %v207 = vunpack.c.h.b16 %v15
  %v208 = vunpack.c.l.b16 %v16
  %v209 = vunpack.c.h.b16 %v16
  %v210 = vunpack.c.l.b16 %v17
  %v211 = vunpack.c.h.b16 %v17
  %v212 = vunpack.c.l.b16 %v18
  %v213 = vunpack.c.h.b16 %v18
  %v214 = vunpack.c.l.b16 %v19
  %v215 = vunpack.c.l.b16 %v20
  %v216 = vunpack.c.h.b16 %v20
  %v217 = vunpack.c.l.b16 %v21
  %v218 = vunpack.c.h.b16 %v21
  %v219 = vunpack.c.l.b16 %v22
  %v220 = vunpack.c.h.b16 %v22
  %v221 = vunpack.c.l.b16 %v23
  %v222 = vunpack.c.h.b16 %v23
  %v223 = vunpack.c.l.b16 %v24
  %v224 = vunpack.c.l.b16 %v25
  %v225 = vunpack.c.h.b16 %v25
  %v226 = vunpack.c.l.b16 %v26
  %v227 = vunpack.c.h.b16 %v26
  %v228 = vunpack.c.l.b16 %v27
  %v229 = vunpack.c.h.b16 %v27
  %v230 = vunpack.c.l.b16 %v28
  %v231 = vunpack.c.h.b16 %v28
  %v232 = vunpack.c.l.b16 %v29
  %v233 = vunpack.c.l.b16 %v30
  %v234 = vunpack.c.h.b16 %v30
  %v235 = vunpack.c.l.b16 %v31
  %v236 = vunpack.c.h.b16 %v31
  %v237 = vunpack.c.l.b16 %v32
  %v238 = vunpack.c.h.b16 %v32
  %v239 = vunpack.c.l.b16 %v33
  %v240 = vunpack.c.h.b16 %v33
  %v241 = vunpack.c.l.b16 %v34
  %v242 = vpack.c.b16 %v215, %v206
  %v243 = vpack.c.b16 %v216, %v207
  %v244 = vpack.c.b16 %v217, %v208
  %v245 = vpack.c.b16 %v218, %v209
  %v246 = vpack.c.b16 %v219, %v210
  %v247 = vpack.c.b16 %v220, %v211
  %v248 = vpack.c.b16 %v221, %v212
  %v249 = vpack.c.b16 %v222, %v213
  %v250 = vpack.c.b16 %v223, %v214
  %v251 = vpack.c.b16 %v233, %v224
  %v252 = vpack.c.b16 %v234, %v225
  %v253 = vpack.c.b16 %v235, %v226
  %v254 = vpack.c.b16 %v236, %v227
  %v255 = vpack.c.b16 %v237, %v228
  %v256 = vpack.c.b16 %v238, %v229
  %v257 = vpack.c.b16 %v239, %v230
  %v258 = vpack.c.b16 %v240, %v231
  %v259 = vpack.c.b16 %v241, %v232
  %v422 = vunpack.c.l.b16 %v35
  %v423 = vunpack.c.l.b16 %v36
  %v424 = vunpack.c.l.b16 %v37
  %v425 = vunpack.c.l.b16 %v38
  %v426 = vunpack.c.l.b16 %v39
  %v427 = vunpack.c.l.b16 %v40
  %v428 = vunpack.c.l.b16 %v41
  %v429 = vunpack.c.l.b16 %v42
  %v430 = vunpack.c.l.b16 %v43
  %v431 = vunpack.c.l.b16 %v44
  %v432 = vunpack.c.l.b16 %v45
  %v433 = vunpack.c.l.b16 %v46
  %v434 = vunpack.c.l.b16 %v47
  %v435 = vunpack.c.l.b16 %v48
  %v436 = vunpack.c.l.b16 %v49
  %v437 = vunpack.c.l.b16 %v50
  %v438 = vunpack.c.l.b16 %v51
  %v439 = vunpack.c.l.b16 %v52
  %v440 = vunpack.c.l.b16 %v53
  %v441 = vunpack.c.l.b16 %v54
  %v442 = vunpack.c.l.b16 %v55
  %v443 = vunpack.c.l.b16 %v56
  %v444 = vunpack.c.l.b16 %v57
  %v445 = vunpack.c.l.b16 %v58
  %v446 = vunpack.c.l.b16 %v59
  %v447 = vunpack.c.l.b16 %v60
  %v448 = vunpack.c.l.b16 %v61
  %v449 = vunpack.c.l.b16 %v62
  %v450 = vunpack.c.l.b16 %v63
  %v451 = vunpack.c.l.b16 %v64
  %v452 = vunpack.c.l.b16 %v65
  %v453 = vunpack.c.l.b16 %v66
  %v454 = vunpack.c.l.b16 %v67
  %v455 = vunpack.c.l.b16 %v68
  %v456 = vunpack.c.l.b16 %v69
  %v457 = vunpack.c.l.b16 %v70
  %v458 = vunpack.c.l.b16 %v71
  %v459 = vunpack.c.l.b16 %v72
  %v460 = vunpack.c.l.b16 %v73
  %v461 = vunpack.c.l.b16 %v74
  %v462 = vunpack.c.l.b16 %v75
  %v463 = vunpack.c.l.b16 %v76
  %v464 = vunpack.c.l.b16 %v77
  %v465 = vunpack.c.l.b16 %v78
  %v466 = vunpack.c.l.b16 %v79
  %v467 = vunpack.c.l.b16 %v80
  %v468 = vunpack.c.l.b16 %v81
  %v469 = vunpack.c.l.b16 %v82
  %v470 = vunpack.c.l.b16 %v83
  %v471 = vunpack.c.l.b16 %v84
  %v472 = vunpack.c.l.b16 %v85
  %v473 = vunpack.c.l.b16 %v86
  %v474 = vunpack.c.l.b16 %v87
  %v475 = vunpack.c.l.b16 %v88
  %v476 = vunpack.c.l.b16 %v89
  %v477 = vunpack.c.l.b16 %v90
  %v478 = vunpack.c.l.b16 %v91
  %v479 = vunpack.c.l.b16 %v92
  %v480 = vunpack.c.l.b16 %v93
  %v481 = vunpack.c.l.b16 %v94
  %v482 = vunpack.c.l.b16 %v95
  %v483 = vunpack.c.l.b16 %v96
  %v484 = vunpack.c.l.b16 %v97
  %v485 = vunpack.c.l.b16 %v98
  %v486 = vunpack.c.l.b16 %v99
  %v487 = vunpack.c.l.b16 %v100
  %v488 = vunpack.c.l.b16 %v101
  %v489 = vunpack.c.l.b16 %v102
  %v490 = vunpack.c.l.b16 %v103
  %v491 = vunpack.c.l.b16 %v104
  %v492 = vunpack.c.l.b16 %v105
  %v493 = vunpack.c.l.b16 %v106
  %v494 = vunpack.c.l.b16 %v107
  %v495 = vunpack.c.l.b16 %v108
  %v496 = vunpack.c.l.b16 %v109
  %v497 = vunpack.c.l.b16 %v110
  %v498 = vunpack.c.l.b16 %v111
  %v499 = vunpack.c.l.b16 %v112
  %v500 = vunpack.c.l.b16 %v113
  %v501 = vunpack.c.l.b16 %v114
  %v502 = vunpack.c.l.b16 %v115
  %v503 = vunpack.c.l.b16 %v116
  %v504 = vunpack.c.l.b16 %v117
  %v505 = vunpack.c.l.b16 %v118
  %v506 = vunpack.c.l.b16 %v119
  %v507 = vunpack.c.l.b16 %v120
  %v508 = vunpack.c.l.b16 %v121
  %v509 = vunpack.c.l.b16 %v122
  %v510 = vunpack.c.l.b16 %v123
  %v511 = vunpack.c.l.b16 %v124
  %v512 = vunpack.c.l.b16 %v125
  %v513 = vunpack.c.l.b16 %v126
  %v514 = vunpack.c.l.b16 %v127
  %v515 = vunpack.c.l.b16 %v128
  %v516 = vunpack.c.l.b16 %v129
  %v517 = vunpack.c.l.b16 %v130
  %v518 = vunpack.c.l.b16 %v131
  %v519 = vunpack.c.l.b16 %v132
  %v520 = vunpack.c.l.b16 %v133
  %v521 = vunpack.c.l.b16 %v134
  %v522 = vunpack.c.l.b16 %v135
  %v523 = vunpack.c.l.b16 %v136
  %v524 = vunpack.c.l.b16 %v137
  %v525 = vunpack.c.l.b16 %v138
  %v526 = vunpack.c.l.b16 %v139
  %v527 = vunpack.c.l.b16 %v140
  %v528 = vunpack.c.l.b16 %v141
  %v529 = vunpack.c.l.b16 %v142
  %v530 = vunpack.c.l.b16 %v143
  %v531 = vunpack.c.l.b16 %v144
  %v532 = vunpack.c.l.b16 %v145
  %v533 = vunpack.c.l.b16 %v146
  %v534 = vunpack.c.l.b16 %v147
  %v535 = vunpack.c.l.b16 %v148
  %v536 = vunpack.c.l.b16 %v149
  %v537 = vunpack.c.l.b16 %v150
  %v538 = vunpack.c.l.b16 %v151
  %v539 = vunpack.c.l.b16 %v152
  %v540 = vunpack.c.l.b16 %v153
  %v541 = vunpack.c.l.b16 %v154
  %v542 = vunpack.c.l.b16 %v155
  %v543 = vunpack.c.l.b16 %v156
  %v544 = vunpack.c.l.b16 %v157
  %v545 = vunpack.c.l.b16 %v158
  %v546 = vunpack.c.l.b16 %v159
  %v547 = vunpack.c.l.b16 %v160
  %v548 = vunpack.c.l.b16 %v161
  %v549 = vunpack.c.l.b16 %v162
  %v550 = vunpack.c.l.b16 %v163
  %v551 = vunpack.c.l.b16 %v164
  %v552 = vunpack.c.l.b16 %v165
  %v553 = vunpack.c.l.b16 %v166
  %v554 = vunpack.c.l.b16 %v167
  %v555 = vunpack.c.l.b16 %v168
  %v556 = vunpack.c.l.b16 %v169
  %v557 = vunpack.c.l.b16 %v170
  %v558 = vunpack.c.l.b16 %v171
  %v559 = vunpack.c.l.b16 %v172
  %v560 = vunpack.c.l.b16 %v173
  %v561 = vunpack.c.l.b16 %v174
  %v562 = vunpack.c.l.b16 %v175
  %v563 = vunpack.c.l.b16 %v176
  %v564 = vunpack.c.l.b16 %v177
  %v565 = vunpack.c.l.b16 %v178
  %v566 = vpack.c.b16 %v423, %v422
  %v567 = vpack.c.b16 %v425, %v424
  %v568 = vpack.c.b16 %v427, %v426
  %v569 = vpack.c.b16 %v429, %v428
  %v570 = vpack.c.b16 %v431, %v430
  %v571 = vpack.c.b16 %v433, %v432
  %v572 = vpack.c.b16 %v435, %v434
  %v573 = vpack.c.b16 %v437, %v436
  %v574 = vpack.c.b16 %v439, %v438
  %v575 = vpack.c.b16 %v441, %v440
  %v576 = vpack.c.b16 %v443, %v442
  %v577 = vpack.c.b16 %v445, %v444
  %v578 = vpack.c.b16 %v447, %v446
  %v579 = vpack.c.b16 %v449, %v448
  %v580 = vpack.c.b16 %v451, %v450
  %v581 = vpack.c.b16 %v453, %v452
  %v582 = vpack.c.b16 %v455, %v454
  %v583 = vpack.c.b16 %v457, %v456
  %v584 = vpack.c.b16 %v459, %v458
  %v585 = vpack.c.b16 %v461, %v460
  %v586 = vpack.c.b16 %v463, %v462
  %v587 = vpack.c.b16 %v465, %v464
  %v588 = vpack.c.b16 %v467, %v466
  %v589 = vpack.c.b16 %v469, %v468
  %v590 = vpack.c.b16 %v471, %v470
  %v591 = vpack.c.b16 %v473, %v472
  %v592 = vpack.c.b16 %v475, %v474
  %v593 = vpack.c.b16 %v477, %v476
  %v594 = vpack.c.b16 %v479, %v478
  %v595 = vpack.c.b16 %v481, %v480
  %v596 = vpack.c.b16 %v483, %v482
  %v597 = vpack.c.b16 %v485, %v484
  %v598 = vpack.c.b16 %v487, %v486
  %v599 = vpack.c.b16 %v489, %v488
  %v600 = vpack.c.b16 %v491, %v490
  %v601 = vpack.c.b16 %v493, %v492
  %v602 = vpack.c.b16 %v495, %v494
  %v603 = vpack.c.b16 %v497, %v496
  %v604 = vpack.c.b16 %v499, %v498
  %v605 = vpack.c.b16 %v501, %v500
  %v606 = vpack.c.b16 %v503, %v502
  %v607 = vpack.c.b16 %v505, %v504
  %v608 = vpack.c.b16 %v507, %v506
  %v609 = vpack.c.b16 %v509, %v508
  %v610 = vpack.c.b16 %v511, %v510
  %v611 = vpack.c.b16 %v513, %v512
  %v612 = vpack.c.b16 %v515, %v514
  %v613 = vpack.c.b16 %v517, %v516
  %v614 = vpack.c.b16 %v519, %v518
  %v615 = vpack.c.b16 %v521, %v520
  %v616 = vpack.c.b16 %v523, %v522
  %v617 = vpack.c.b16 %v525, %v524
  %v618 = vpack.c.b16 %v527, %v526
  %v619 = vpack.c.b16 %v529, %v528
  %v620 = vpack.c.b16 %v531, %v530
  %v621 = vpack.c.b16 %v533, %v532
  %v622 = vpack.c.b16 %v535, %v534
  %v623 = vpack.c.b16 %v537, %v536
  %v624 = vpack.c.b16 %v539, %v538
  %v625 = vpack.c.b16 %v541, %v540
  %v626 = vpack.c.b16 %v543, %v542
  %v627 = vpack.c.b16 %v545, %v544
  %v628 = vpack.c.b16 %v547, %v546
  %v629 = vpack.c.b16 %v549, %v548
  %v630 = vpack.c.b16 %v551, %v550
  %v631 = vpack.c.b16 %v553, %v552
  %v632 = vpack.c.b16 %v555, %v554
  %v633 = vpack.c.b16 %v557, %v556
  %v634 = vpack.c.b16 %v559, %v558
  %v635 = vpack.c.b16 %v561, %v560
  %v636 = vpack.c.b16 %v563, %v562
  %v637 = vpack.c.b16 %v565, %v564
  %710 = vmatprep.subr.bf16.mxu0 0
  %711 = vmatpush1.bf16.msra.mxu0 %v566
  %712 = vmatprep.subr.bf16.mxu0 0
  %713 = vmatpush1.bf16.msra.mxu0 %v567
  %714 = vmatprep.subr.bf16.mxu0 0
  %715 = vmatpush1.bf16.msra.mxu0 %v568
  %716 = vmatprep.subr.bf16.mxu0 0
  %717 = vmatpush1.bf16.msra.mxu0 %v569
  %718 = vmatprep.subr.bf16.mxu0 0
  %719 = vmatpush1.bf16.msra.mxu0 %v570
  %720 = vmatprep.subr.bf16.mxu0 0
  %721 = vmatpush1.bf16.msra.mxu0 %v571
  %722 = vmatprep.subr.bf16.mxu0 0
  %723 = vmatpush1.bf16.msra.mxu0 %v572
  %724 = vmatprep.subr.bf16.mxu0 0
  %725 = vmatpush1.bf16.msra.mxu0 %v573
  %726 = vmatprep.subr.bf16.mxu0 0
  %727 = vmatpush1.bf16.msra.mxu0 %v574
  %728 = vmatprep.subr.bf16.mxu0 0
  %729 = vmatpush1.bf16.msra.mxu0 %v575
  %730 = vmatprep.subr.bf16.mxu0 0
  %731 = vmatpush1.bf16.msra.mxu0 %v576
  %732 = vmatprep.subr.bf16.mxu0 0
  %733 = vmatpush1.bf16.msra.mxu0 %v577
  %734 = vmatprep.subr.bf16.mxu0 0
  %735 = vmatpush1.bf16.msra.mxu0 %v578
  %736 = vmatprep.subr.bf16.mxu0 0
  %737 = vmatpush1.bf16.msra.mxu0 %v579
  %738 = vmatprep.subr.bf16.mxu0 0
  %739 = vmatpush1.bf16.msra.mxu0 %v580
  %740 = vmatprep.subr.bf16.mxu0 0
  %741 = vmatpush1.bf16.msra.mxu0 %v581
  %742 = vmatprep.mubr.bf16.mxu0 %v243
  %743 = vmatmul.mubr.bf16.gmra.mrb[0].mxu0 %v242
  %v744 = vpop.f32.mrb[0].mxu0
  %v745 = vadd.f32 %v184, %v744
  %v746 = vpop.f32.mrb[0].mxu0
  %v747 = vpop.f32.mrb[0].mxu0
  %v748 = vadd.f32 %v184, %v747
  %v749 = vpop.f32.mrb[0].mxu0
  %750 = vmatprep.mubr.bf16.mxu0 %v252
  %751 = vmatmul.mubr.bf16.gmra.mrb[0].mxu0 %v251
  %v752 = vpop.f32.mrb[0].mxu0
  %v753 = vadd.f32 %v184, %v752
  %v754 = vpop.f32.mrb[0].mxu0
  %v755 = vpop.f32.mrb[0].mxu0
  %v756 = vadd.f32 %v184, %v755
  %v757 = vpop.f32.mrb[0].mxu0
  %758 = vdwg.mxu0
  %759 = vmatprep.subr.bf16.mxu0 0
  %760 = vmatpush1.bf16.msra.mxu0 %v582
  %761 = vmatprep.subr.bf16.mxu0 0
  %762 = vmatpush1.bf16.msra.mxu0 %v583
  %763 = vmatprep.subr.bf16.mxu0 0
  %764 = vmatpush1.bf16.msra.mxu0 %v584
  %765 = vmatprep.subr.bf16.mxu0 0
  %766 = vmatpush1.bf16.msra.mxu0 %v585
  %767 = vmatprep.subr.bf16.mxu0 0
  %768 = vmatpush1.bf16.msra.mxu0 %v586
  %769 = vmatprep.subr.bf16.mxu0 0
  %770 = vmatpush1.bf16.msra.mxu0 %v587
  %771 = vmatprep.subr.bf16.mxu0 0
  %772 = vmatpush1.bf16.msra.mxu0 %v588
  %773 = vmatprep.subr.bf16.mxu0 0
  %774 = vmatpush1.bf16.msra.mxu0 %v589
  %775 = vmatprep.subr.bf16.mxu0 0
  %776 = vmatpush1.bf16.msra.mxu0 %v590
  %777 = vmatprep.subr.bf16.mxu0 0
  %778 = vmatpush1.bf16.msra.mxu0 %v591
  %779 = vmatprep.subr.bf16.mxu0 0
  %780 = vmatpush1.bf16.msra.mxu0 %v592
  %781 = vmatprep.subr.bf16.mxu0 0
  %782 = vmatpush1.bf16.msra.mxu0 %v593
  %783 = vmatprep.subr.bf16.mxu0 0
  %784 = vmatpush1.bf16.msra.mxu0 %v594
  %785 = vmatprep.subr.bf16.mxu0 0
  %786 = vmatpush1.bf16.msra.mxu0 %v595
  %787 = vmatprep.subr.bf16.mxu0 0
  %788 = vmatpush1.bf16.msra.mxu0 %v596
  %789 = vmatprep.subr.bf16.mxu0 0
  %790 = vmatpush1.bf16.msra.mxu0 %v597
  %791 = vmatprep.mubr.bf16.mxu0 %v245
  %792 = vmatmul.mubr.bf16.gmra.mrb[0].mxu0 %v244
  %v793 = vpop.f32.mrb[0].mxu0
  %v794 = vadd.f32 %v745, %v793
  %v795 = vpop.f32.mrb[0].mxu0
  %v796 = vpop.f32.mrb[0].mxu0
  %v797 = vadd.f32 %v748, %v796
  %v798 = vpop.f32.mrb[0].mxu0
  %799 = vmatprep.mubr.bf16.mxu0 %v254
  %800 = vmatmul.mubr.bf16.gmra.mrb[0].mxu0 %v253
  %v801 = vpop.f32.mrb[0].mxu0
  %v802 = vadd.f32 %v753, %v801
  %v803 = vpop.f32.mrb[0].mxu0
  %v804 = vpop.f32.mrb[0].mxu0
  %v805 = vadd.f32 %v756, %v804
  %v806 = vpop.f32.mrb[0].mxu0
  %807 = vdwg.mxu0
  %808 = vmatprep.subr.bf16.mxu0 0
  %809 = vmatpush1.bf16.msra.mxu0 %v598
  %810 = vmatprep.subr.bf16.mxu0 0
  %811 = vmatpush1.bf16.msra.mxu0 %v599
  %812 = vmatprep.subr.bf16.mxu0 0
  %813 = vmatpush1.bf16.msra.mxu0 %v600
  %814 = vmatprep.subr.bf16.mxu0 0
  %815 = vmatpush1.bf16.msra.mxu0 %v601
  %816 = vmatprep.subr.bf16.mxu0 0
  %817 = vmatpush1.bf16.msra.mxu0 %v602
  %818 = vmatprep.subr.bf16.mxu0 0
  %819 = vmatpush1.bf16.msra.mxu0 %v603
  %820 = vmatprep.subr.bf16.mxu0 0
  %821 = vmatpush1.bf16.msra.mxu0 %v604
  %822 = vmatprep.subr.bf16.mxu0 0
  %823 = vmatpush1.bf16.msra.mxu0 %v605
  %824 = vmatprep.subr.bf16.mxu0 0
  %825 = vmatpush1.bf16.msra.mxu0 %v606
  %826 = vmatprep.subr.bf16.mxu0 0
  %827 = vmatpush1.bf16.msra.mxu0 %v607
  %828 = vmatprep.subr.bf16.mxu0 0
  %829 = vmatpush1.bf16.msra.mxu0 %v608
  %830 = vmatprep.subr.bf16.mxu0 0
  %831 = vmatpush1.bf16.msra.mxu0 %v609
  %832 = vmatprep.subr.bf16.mxu0 0
  %833 = vmatpush1.bf16.msra.mxu0 %v610
  %834 = vmatprep.subr.bf16.mxu0 0
  %835 = vmatpush1.bf16.msra.mxu0 %v611
  %836 = vmatprep.subr.bf16.mxu0 0
  %837 = vmatpush1.bf16.msra.mxu0 %v612
  %838 = vmatprep.subr.bf16.mxu0 0
  %839 = vmatpush1.bf16.msra.mxu0 %v613
  %840 = vmatprep.mubr.bf16.mxu0 %v247
  %841 = vmatmul.mubr.bf16.gmra.mrb[0].mxu0 %v246
  %v842 = vpop.f32.mrb[0].mxu0
  %v843 = vadd.f32 %v794, %v842
  %v844 = vpop.f32.mrb[0].mxu0
  %v845 = vpop.f32.mrb[0].mxu0
  %v846 = vadd.f32 %v797, %v845
  %v847 = vpop.f32.mrb[0].mxu0
  %848 = vmatprep.mubr.bf16.mxu0 %v256
  %849 = vmatmul.mubr.bf16.gmra.mrb[0].mxu0 %v255
  %v850 = vpop.f32.mrb[0].mxu0
  %v851 = vadd.f32 %v802, %v850
  %v852 = vpop.f32.mrb[0].mxu0
  %v853 = vpop.f32.mrb[0].mxu0
  %v854 = vadd.f32 %v805, %v853
  %v855 = vpop.f32.mrb[0].mxu0
  %856 = vdwg.mxu0
  %857 = vmatprep.subr.bf16.mxu0 0
  %858 = vmatpush1.bf16.msra.mxu0 %v614
  %859 = vmatprep.subr.bf16.mxu0 0
  %860 = vmatpush1.bf16.msra.mxu0 %v615
  %861 = vmatprep.subr.bf16.mxu0 0
  %862 = vmatpush1.bf16.msra.mxu0 %v616
  %863 = vmatprep.subr.bf16.mxu0 0
  %864 = vmatpush1.bf16.msra.mxu0 %v617
  %865 = vmatprep.subr.bf16.mxu0 0
  %866 = vmatpush1.bf16.msra.mxu0 %v618
  %867 = vmatprep.subr.bf16.mxu0 0
  %868 = vmatpush1.bf16.msra.mxu0 %v619
  %869 = vmatprep.subr.bf16.mxu0 0
  %870 = vmatpush1.bf16.msra.mxu0 %v620
  %871 = vmatprep.subr.bf16.mxu0 0
  %872 = vmatpush1.bf16.msra.mxu0 %v621
  %873 = vmatprep.subr.bf16.mxu0 0
  %874 = vmatpush1.bf16.msra.mxu0 %v622
  %875 = vmatprep.subr.bf16.mxu0 0
  %876 = vmatpush1.bf16.msra.mxu0 %v623
  %877 = vmatprep.subr.bf16.mxu0 0
  %878 = vmatpush1.bf16.msra.mxu0 %v624
  %879 = vmatprep.subr.bf16.mxu0 0
  %880 = vmatpush1.bf16.msra.mxu0 %v625
  %881 = vmatprep.subr.bf16.mxu0 0
  %882 = vmatpush1.bf16.msra.mxu0 %v626
  %883 = vmatprep.subr.bf16.mxu0 0
  %884 = vmatpush1.bf16.msra.mxu0 %v627
  %885 = vmatprep.subr.bf16.mxu0 0
  %886 = vmatpush1.bf16.msra.mxu0 %v628
  %887 = vmatprep.subr.bf16.mxu0 0
  %888 = vmatpush1.bf16.msra.mxu0 %v629
  %889 = vmatprep.mubr.bf16.mxu0 %v249
  %890 = vmatmul.mubr.bf16.gmra.mrb[0].mxu0 %v248
  %v891 = vpop.f32.mrb[0].mxu0
  %v892 = vadd.f32 %v843, %v891
  %v893 = vpop.f32.mrb[0].mxu0
  %v894 = vpop.f32.mrb[0].mxu0
  %v895 = vadd.f32 %v846, %v894
  %v896 = vpop.f32.mrb[0].mxu0
  %897 = vmatprep.mubr.bf16.mxu0 %v258
  %898 = vmatmul.mubr.bf16.gmra.mrb[0].mxu0 %v257
  %v899 = vpop.f32.mrb[0].mxu0
  %v900 = vadd.f32 %v851, %v899
  %v901 = vpop.f32.mrb[0].mxu0
  %v902 = vpop.f32.mrb[0].mxu0
  %v903 = vadd.f32 %v854, %v902
  %v904 = vpop.f32.mrb[0].mxu0
  %905 = vdwg.mxu0
  %906 = vmatprep.subr.bf16.mxu0 0
  %907 = vmatpush1.bf16.msra.mxu0 %v630
  %908 = vmatprep.subr.bf16.mxu0 0
  %909 = vmatpush1.bf16.msra.mxu0 %v631
  %910 = vmatprep.subr.bf16.mxu0 0
  %911 = vmatpush1.bf16.msra.mxu0 %v632
  %912 = vmatprep.subr.bf16.mxu0 0
  %913 = vmatpush1.bf16.msra.mxu0 %v633
  %914 = vmatprep.subr.bf16.mxu0 0
  %915 = vmatpush1.bf16.msra.mxu0 %v634
  %916 = vmatprep.subr.bf16.mxu0 0
  %917 = vmatpush1.bf16.msra.mxu0 %v635
  %918 = vmatprep.subr.bf16.mxu0 0
  %919 = vmatpush1.bf16.msra.mxu0 %v636
  %920 = vmatprep.subr.bf16.mxu0 0
  %921 = vmatpush1.bf16.msra.mxu0 %v637
  %922 = vmatprep.subr.bf16.mxu0 0
  %923 = vmatpush1.bf16.msra.mxu0 0
  %924 = vmatprep.subr.bf16.mxu0 0
  %925 = vmatpush1.bf16.msra.mxu0 0
  %926 = vmatprep.subr.bf16.mxu0 0
  %927 = vmatpush1.bf16.msra.mxu0 0
  %928 = vmatprep.subr.bf16.mxu0 0
  %929 = vmatpush1.bf16.msra.mxu0 0
  %930 = vmatprep.subr.bf16.mxu0 0
  %931 = vmatpush1.bf16.msra.mxu0 0
  %932 = vmatprep.subr.bf16.mxu0 0
  %933 = vmatpush1.bf16.msra.mxu0 0
  %934 = vmatprep.subr.bf16.mxu0 0
  %935 = vmatpush1.bf16.msra.mxu0 0
  %936 = vmatprep.subr.bf16.mxu0 0
  %937 = vmatpush1.bf16.msra.mxu0 0
  %938 = vmatprep.mubr.bf16.mxu0 0
  %939 = vmatmul.mubr.bf16.gmra.mrb[0].mxu0 %v250
  %v940 = vpop.f32.mrb[0].mxu0
  %v941 = vadd.f32 %v892, %v940
  %v942 = vpop.f32.mrb[0].mxu0
  %v943 = vpop.f32.mrb[0].mxu0
  %v944 = vadd.f32 %v895, %v943
  %v945 = vpop.f32.mrb[0].mxu0
  %946 = vmatprep.mubr.bf16.mxu0 0
  %947 = vmatmul.mubr.bf16.gmra.mrb[0].mxu0 %v259
  %v948 = vpop.f32.mrb[0].mxu0
  %v949 = vadd.f32 %v900, %v948
  %v950 = vpop.f32.mrb[0].mxu0
  %v951 = vpop.f32.mrb[0].mxu0
  %v952 = vadd.f32 %v903, %v951
  %v953 = vpop.f32.mrb[0].mxu0
  %954 = vdwg.mxu0
  %v955 = vmax.f32 %v941, 0.0
  %v956 = vmax.f32 %v944, 0.0
  %v957 = vmax.f32 %v949, 0.0
  %v958 = vmax.f32 %v952, 0.0
  %959 = vst [vmem:[%s3] sm:$0xff] %v955
  %960 = vst [vmem:[%s3 + $0x8] sm:$0xff] %v956
  %961 = vst [vmem:[%s3 + $0x10] sm:$0xff] %v957
  %962 = vst [vmem:[%s3 + $0x18] sm:$0xff] %v958
  // Predicated region
  $region14: #{resnet_encoder_forward.19} parent=0 // pred_check
    _
  $region15: #{resnet_encoder_forward.19} parent=0 // pred_check_branch
    %964 = sbr.rel (0) target = $region17
  $region16: #{resnet_encoder_forward.19} parent=0 // pred_region
    _
  $region17: #{resnet_encoder_forward.19} parent=0 // pred_fallthru
    _
  // Predicated region
  $region18: #{resnet_encoder_forward.19} parent=0 // pred_check
    _
  $region19: #{resnet_encoder_forward.19} parent=0 // pred_check_branch
    %966 = sbr.rel (0) target = $region21
  $region20: #{resnet_encoder_forward.19} parent=0 // pred_region
    _
  $region21: #{resnet_encoder_forward.19} parent=0 // pred_fallthru
    _

// kernel: resnet_encoder_forward.21
$region0: #{resnet_encoder_forward.21}
  #allocation0 [shape = 'u32[]', space=smem, size = 0x4, offset = 0x4, fixed_abs, tag = 'smem constant byte address 0x4 - core index']
  #allocation1 [shape = 'u32[144,128]{1,0:T(1,128)}', space=vmem, size = 0x12000, scoped, tag = 'internal scratch']
  %s0 = inlined_call_operand.vmem [shape: f32[2,16,128], index: 0, kind: input, shape index: {}]
  %s1 = inlined_call_operand.vmem [shape: f32[128,128], index: 1, kind: input, shape index: {}]
  %s2 = inlined_call_operand.vmem [shape: f32[1,128], index: 2, kind: input, shape index: {}]
  %s3 = inlined_call_operand.vmem [shape: f32[128,256], index: 3, kind: input, shape index: {}]
  %s4 = inlined_call_operand.vmem [shape: f32[1,256], index: 4, kind: input, shape index: {}]
  %s5 = inlined_call_operand.vmem [shape: f32[1,256], index: 5, kind: input, shape index: {}]
  %s6 = inlined_call_operand.vmem [shape: f32[1,256], index: 6, kind: input, shape index: {}]
  %s7 = inlined_call_operand.hbm [shape: f32[2,256], index: 7, kind: output, shape index: {}]
  %s8 = sld [smem:[#allocation0]]
  $region38: #{resnet_encoder_forward.21} parent=0
    _
  %s10 = ssub.s32 1, %s8
  %s11 = scalar_select 0, %s10, %s8
  $region1: #{resnet_encoder_forward.21} parent=0
    #allocation2 [shape = 'u8[2048]{0}', space=vmem, size = 0x800, scoped, tag = 'output window, operand 0, single buffered']
    #allocation3 [shape = 's32[1]{0}', space=sflag, size = 0x4, scoped, tag = 'scoped memory for resnet_encoder_forward.21']
    %12 = vsyncpa [#allocation3], 0
    // Predicated region
    $region2: #{resnet_encoder_forward.21} parent=1 // pred_check
      _
    $region3: #{resnet_encoder_forward.21} parent=1 // pred_check_branch
      %14 = sbr.rel (0) target = $region5
    $region4: #{resnet_encoder_forward.21} parent=1 // pred_region
      _
    $region5: #{resnet_encoder_forward.21} parent=1 // pred_fallthru
      _
    // Predicated region
    $region6: #{resnet_encoder_forward.21} parent=1 // pred_check
      _
    $region7: #{resnet_encoder_forward.21} parent=1 // pred_check_branch
      %16 = sbr.rel (0) target = $region9
    $region8: #{resnet_encoder_forward.21} parent=1 // pred_region
      _
    $region9: #{resnet_encoder_forward.21} parent=1 // pred_fallthru
      _
    // Predicated region
    $region10: #{resnet_encoder_forward.21} parent=1 // pred_check
      _
    $region11: #{resnet_encoder_forward.21} parent=1 // pred_check_branch
      %18 = sbr.rel (0) target = $region13
    $region12: #{resnet_encoder_forward.21} parent=1 // pred_region
      _
    $region13: #{resnet_encoder_forward.21} parent=1 // pred_fallthru
      _
    // Predicated region
    $region14: #{resnet_encoder_forward.21} parent=1 // pred_check
      _
    $region15: #{resnet_encoder_forward.21} parent=1 // pred_check_branch
      %20 = sbr.rel (0) target = $region17
    $region16: #{resnet_encoder_forward.21} parent=1 // pred_region
      _
    $region17: #{resnet_encoder_forward.21} parent=1 // pred_fallthru
      _
    // Predicated region
    $region18: #{resnet_encoder_forward.21} parent=1 // pred_check
      _
    $region19: #{resnet_encoder_forward.21} parent=1 // pred_check_branch
      %22 = sbr.rel (0) target = $region21
    $region20: #{resnet_encoder_forward.21} parent=1 // pred_region
      _
    $region21: #{resnet_encoder_forward.21} parent=1 // pred_fallthru
      _
    // Predicated region
    $region22: #{resnet_encoder_forward.21} parent=1 // pred_check
      _
    $region23: #{resnet_encoder_forward.21} parent=1 // pred_check_branch
      %24 = sbr.rel (0) target = $region25
    $region24: #{resnet_encoder_forward.21} parent=1 // pred_region
      _
    $region25: #{resnet_encoder_forward.21} parent=1 // pred_fallthru
      _
    // Predicated region
    $region26: #{resnet_encoder_forward.21} parent=1 // pred_check
      _
    $region27: #{resnet_encoder_forward.21} parent=1 // pred_check_branch
      %26 = sbr.rel (0) target = $region29
    $region28: #{resnet_encoder_forward.21} parent=1 // pred_region
      _
    $region29: #{resnet_encoder_forward.21} parent=1 // pred_fallthru
      _
    %v27 = vld [vmem:[%s0] sm:$0xff]
    %v28 = vld [vmem:[%s0 + $0x8] sm:$0xff]
    %v29 = vld [vmem:[%s0 + $0x10] sm:$0xff]
    %v30 = vld [vmem:[%s0 + $0x18] sm:$0xff]
    %v31 = vadd.f32 %v27, %v28
    %v32 = vrot.slane %v31, 4
    %v33 = vadd.f32 %v31, %v32
    %v34 = vrot.slane %v33, 2
    %v35 = vadd.f32 %v33, %v34
    %v36 = vrot.slane %v35, 1
    %v37 = vadd.f32 %v35, %v36
    %v38 = vadd.f32 %v29, %v30
    %v39 = vrot.slane %v38, 4
    %v40 = vadd.f32 %v38, %v39
    %v41 = vrot.slane %v40, 2
    %v42 = vadd.f32 %v40, %v41
    %v43 = vrot.slane %v42, 1
    %v44 = vadd.f32 %v42, %v43
    %v45 = vrcp.pop 16.0
    %v46 = vmul.f32 %v37, %v45
    %v47 = vmul.f32 %v44, %v45
    %v48 = vld [vmem:[%s1] sm:$0xff]
    %v49 = vld [vmem:[%s1 + $0x8] sm:$0xff]
    %v50 = vld [vmem:[%s1 + $0x10] sm:$0xff]
    %v51 = vld [vmem:[%s1 + $0x18] sm:$0xff]
    %v52 = vld [vmem:[%s1 + $0x20] sm:$0xff]
    %v53 = vld [vmem:[%s1 + $0x28] sm:$0xff]
    %v54 = vld [vmem:[%s1 + $0x30] sm:$0xff]
    %v55 = vld [vmem:[%s1 + $0x38] sm:$0xff]
    %v56 = vld [vmem:[%s1 + $0x40] sm:$0xff]
    %v57 = vld [vmem:[%s1 + $0x48] sm:$0xff]
    %v58 = vld [vmem:[%s1 + $0x50] sm:$0xff]
    %v59 = vld [vmem:[%s1 + $0x58] sm:$0xff]
    %v60 = vld [vmem:[%s1 + $0x60] sm:$0xff]
    %v61 = vld [vmem:[%s1 + $0x68] sm:$0xff]
    %v62 = vld [vmem:[%s1 + $0x70] sm:$0xff]
    %v63 = vld [vmem:[%s1 + $0x78] sm:$0xff]
    %v64 = vld [vmem:[%s2] sm:$0x1]
    %v66 = vlaneseq
    %v67 = vshrl.u32 %v66, 7
    %v68 = vsub.s32 0, %v67
    %v69 = vrot.slane %v64, %v68
    %vm73 = vcmask 1041409
    %v74 = vsel %vm73, %v47, %v46
    %76 = vmatprep.subr.mxu0 0.0
    %77 = vmatpush1.msra.mxu0 %v48
    %78 = vmatprep.subr.mxu0 0.0
    %79 = vmatpush1.msra.mxu0 %v49
    %80 = vmatprep.subr.mxu0 0.0
    %81 = vmatpush1.msra.mxu0 %v50
    %82 = vmatprep.subr.mxu0 0.0
    %83 = vmatpush1.msra.mxu0 %v51
    %84 = vmatprep.subr.mxu0 0.0
    %85 = vmatpush1.msra.mxu0 %v52
    %86 = vmatprep.subr.mxu0 0.0
    %87 = vmatpush1.msra.mxu0 %v53
    %88 = vmatprep.subr.mxu0 0.0
    %89 = vmatpush1.msra.mxu0 %v54
    %90 = vmatprep.subr.mxu0 0.0
    %91 = vmatpush1.msra.mxu0 %v55
    %92 = vmatprep.subr.mxu0 0.0
    %93 = vmatpush1.msra.mxu0 %v56
    %94 = vmatprep.subr.mxu0 0.0
    %95 = vmatpush1.msra.mxu0 %v57
    %96 = vmatprep.subr.mxu0 0.0
    %97 = vmatpush1.msra.mxu0 %v58
    %98 = vmatprep.subr.mxu0 0.0
    %99 = vmatpush1.msra.mxu0 %v59
    %100 = vmatprep.subr.mxu0 0.0
    %101 = vmatpush1.msra.mxu0 %v60
    %102 = vmatprep.subr.mxu0 0.0
    %103 = vmatpush1.msra.mxu0 %v61
    %104 = vmatprep.subr.mxu0 0.0
    %105 = vmatpush1.msra.mxu0 %v62
    %106 = vmatprep.subr.mxu0 0.0
    %107 = vmatpush1.msra.mxu0 %v63
    %108 = vmatprep.subr.mxu0 0.0
    %109 = vmatpush1.msra.mxu0 0.0
    %110 = vmatprep.subr.mxu0 0.0
    %111 = vmatpush1.msra.mxu0 0.0
    %112 = vmatprep.subr.mxu0 0.0
    %113 = vmatpush1.msra.mxu0 0.0
    %114 = vmatprep.subr.mxu0 0.0
    %115 = vmatpush1.msra.mxu0 0.0
    %116 = vmatprep.subr.mxu0 0.0
    %117 = vmatpush1.msra.mxu0 0.0
    %118 = vmatprep.subr.mxu0 0.0
    %119 = vmatpush1.msra.mxu0 0.0
    %120 = vmatprep.subr.mxu0 0.0
    %121 = vmatpush1.msra.mxu0 0.0
    %122 = vmatprep.subr.mxu0 0.0
    %123 = vmatpush1.msra.mxu0 0.0
    %124 = vmatprep.subr.mxu0 0.0
    %125 = vmatpush1.msra.mxu0 0.0
    %126 = vmatprep.subr.mxu0 0.0
    %127 = vmatpush1.msra.mxu0 0.0
    %128 = vmatprep.subr.mxu0 0.0
    %129 = vmatpush1.msra.mxu0 0.0
    %130 = vmatprep.subr.mxu0 0.0
    %131 = vmatpush1.msra.mxu0 0.0
    %132 = vmatprep.subr.mxu0 0.0
    %133 = vmatpush1.msra.mxu0 0.0
    %134 = vmatprep.subr.mxu0 0.0
    %135 = vmatpush1.msra.mxu0 0.0
    %136 = vmatprep.subr.mxu0 0.0
    %137 = vmatpush1.msra.mxu0 0.0
    %138 = vmatprep.subr.mxu0 0.0
    %139 = vmatpush1.msra.mxu0 0.0
    %140 = vmatprep.mubr.f32.mxu0 0.0
    %141 = vmatmul.mubr.f32.gmra.mrb[0].mxu0 %v74
    %v142 = vpop.f32.mrb[0].mxu0
    %v143 = vadd.f32 %v69, %v142
    %v144 = vpop.f32.mrb[0].mxu0
    %145 = vdwg.mxu0
    %v146 = vld [vmem:[%s3] sm:$0xff]
    %v147 = vld [vmem:[%s3 + $0x8] sm:$0xff]
    %v148 = vld [vmem:[%s3 + $0x10] sm:$0xff]
    %v149 = vld [vmem:[%s3 + $0x18] sm:$0xff]
    %v150 = vld [vmem:[%s3 + $0x20] sm:$0xff]
    %v151 = vld [vmem:[%s3 + $0x28] sm:$0xff]
    %v152 = vld [vmem:[%s3 + $0x30] sm:$0xff]
    %v153 = vld [vmem:[%s3 + $0x38] sm:$0xff]
    %v154 = vld [vmem:[%s3 + $0x40] sm:$0xff]
    %v155 = vld [vmem:[%s3 + $0x48] sm:$0xff]
    %v156 = vld [vmem:[%s3 + $0x50] sm:$0xff]
    %v157 = vld [vmem:[%s3 + $0x58] sm:$0xff]
    %v158 = vld [vmem:[%s3 + $0x60] sm:$0xff]
    %v159 = vld [vmem:[%s3 + $0x68] sm:$0xff]
    %v160 = vld [vmem:[%s3 + $0x70] sm:$0xff]
    %v161 = vld [vmem:[%s3 + $0x78] sm:$0xff]
    %v162 = vld [vmem:[%s3 + $0x80] sm:$0xff]
    %v163 = vld [vmem:[%s3 + $0x88] sm:$0xff]
    %v164 = vld [vmem:[%s3 + $0x90] sm:$0xff]
    %v165 = vld [vmem:[%s3 + $0x98] sm:$0xff]
    %v166 = vld [vmem:[%s3 + $0xa0] sm:$0xff]
    %v167 = vld [vmem:[%s3 + $0xa8] sm:$0xff]
    %v168 = vld [vmem:[%s3 + $0xb0] sm:$0xff]
    %v169 = vld [vmem:[%s3 + $0xb8] sm:$0xff]
    %v170 = vld [vmem:[%s3 + $0xc0] sm:$0xff]
    %v171 = vld [vmem:[%s3 + $0xc8] sm:$0xff]
    %v172 = vld [vmem:[%s3 + $0xd0] sm:$0xff]
    %v173 = vld [vmem:[%s3 + $0xd8] sm:$0xff]
    %v174 = vld [vmem:[%s3 + $0xe0] sm:$0xff]
    %v175 = vld [vmem:[%s3 + $0xe8] sm:$0xff]
    %v176 = vld [vmem:[%s3 + $0xf0] sm:$0xff]
    %v177 = vld [vmem:[%s3 + $0xf8] sm:$0xff]
    %v178 = vld [vmem:[%s4] sm:$0x3]
    %v180 = vlaneseq
    %v181 = vshrl.u32 %v180, 7
    %v182 = vsub.s32 0, %v181
    %v183 = vrot.slane %v178, %v182
    %v184 = vlaneseq
    %v185 = vshrl.u32 %v184, 7
    %v186 = vsub.s32 1, %v185
    %v187 = vrot.slane %v178, %v186
    %190 = vmatprep.subr.mxu0 %v147
    %191 = vmatpush1.msra.mxu0 %v146
    %192 = vmatprep.subr.mxu0 %v149
    %193 = vmatpush1.msra.mxu0 %v148
    %194 = vmatprep.subr.mxu0 %v151
    %195 = vmatpush1.msra.mxu0 %v150
    %196 = vmatprep.subr.mxu0 %v153
    %197 = vmatpush1.msra.mxu0 %v152
    %198 = vmatprep.subr.mxu0 %v155
    %199 = vmatpush1.msra.mxu0 %v154
    %200 = vmatprep.subr.mxu0 %v157
    %201 = vmatpush1.msra.mxu0 %v156
    %202 = vmatprep.subr.mxu0 %v159
    %203 = vmatpush1.msra.mxu0 %v158
    %204 = vmatprep.subr.mxu0 %v161
    %205 = vmatpush1.msra.mxu0 %v160
    %206 = vmatprep.subr.mxu0 %v163
    %207 = vmatpush1.msra.mxu0 %v162
    %208 = vmatprep.subr.mxu0 %v165
    %209 = vmatpush1.msra.mxu0 %v164
    %210 = vmatprep.subr.mxu0 %v167
    %211 = vmatpush1.msra.mxu0 %v166
    %212 = vmatprep.subr.mxu0 %v169
    %213 = vmatpush1.msra.mxu0 %v168
    %214 = vmatprep.subr.mxu0 %v171
    %215 = vmatpush1.msra.mxu0 %v170
    %216 = vmatprep.subr.mxu0 %v173
    %217 = vmatpush1.msra.mxu0 %v172
    %218 = vmatprep.subr.mxu0 %v175
    %219 = vmatpush1.msra.mxu0 %v174
    %220 = vmatprep.subr.mxu0 %v177
    %221 = vmatpush1.msra.mxu0 %v176
    %222 = vmatprep.subr.mxu0 0.0
    %223 = vmatpush1.msra.mxu0 0.0
    %224 = vmatprep.subr.mxu0 0.0
    %225 = vmatpush1.msra.mxu0 0.0
    %226 = vmatprep.subr.mxu0 0.0
    %227 = vmatpush1.msra.mxu0 0.0
    %228 = vmatprep.subr.mxu0 0.0
    %229 = vmatpush1.msra.mxu0 0.0
    %230 = vmatprep.subr.mxu0 0.0
    %231 = vmatpush1.msra.mxu0 0.0
    %232 = vmatprep.subr.mxu0 0.0
    %233 = vmatpush1.msra.mxu0 0.0
    %234 = vmatprep.subr.mxu0 0.0
    %235 = vmatpush1.msra.mxu0 0.0
    %236 = vmatprep.subr.mxu0 0.0
    %237 = vmatpush1.msra.mxu0 0.0
    %238 = vmatprep.subr.mxu0 0.0
    %239 = vmatpush1.msra.mxu0 0.0
    %240 = vmatprep.subr.mxu0 0.0
    %241 = vmatpush1.msra.mxu0 0.0
    %242 = vmatprep.subr.mxu0 0.0
    %243 = vmatpush1.msra.mxu0 0.0
    %244 = vmatprep.subr.mxu0 0.0
    %245 = vmatpush1.msra.mxu0 0.0
    %246 = vmatprep.subr.mxu0 0.0
    %247 = vmatpush1.msra.mxu0 0.0
    %248 = vmatprep.subr.mxu0 0.0
    %249 = vmatpush1.msra.mxu0 0.0
    %250 = vmatprep.subr.mxu0 0.0
    %251 = vmatpush1.msra.mxu0 0.0
    %252 = vmatprep.subr.mxu0 0.0
    %253 = vmatpush1.msra.mxu0 0.0
    %254 = vmatprep.mubr.f32.mxu0 0.0
    %255 = vmatmul.mubr.f32.gmra.mrb[0].mxu0 %v143
    %v256 = vpop.f32.mrb[0].mxu0
    %v257 = vadd.f32 %v183, %v256
    %v258 = vpop.f32.mrb[0].mxu0
    %v259 = vadd.f32 %v187, %v258
    %260 = vdwg.mxu0
    %vm261 = vcmask 1041408
    %v262 = vsel %vm261, %v257, 0.0
    %v263 = vsel %vm261, %v259, 0.0
    %v264 = vadd.f32 %v262, %v263
    %265 = vadd.xlane.f32.xlu0 %v264
    %v266 = vpop.xlane.xlu0 %265
    %v267 = vrcp.pop 256.0
    %v268 = vmul.f32 %v266, %v267
    %v269 = vsub.f32 %v257, %v268
    %v270 = vsub.f32 %v259, %v268
    %v271 = vmul.f32 %v269, %v269
    %v272 = vmul.f32 %v270, %v270
    %v273 = vsel %vm261, %v271, 0.0
    %v274 = vsel %vm261, %v272, 0.0
    %v275 = vadd.f32 %v273, %v274
    %276 = vadd.xlane.f32.xlu0 %v275
    %v277 = vpop.xlane.xlu0 %276
    %v278 = vmul.f32 %v277, %v267
    %v279 = vadd.f32 %v278, 1e-05
    %v280 = vrsqrt.pop %v279
    %v281 = vmul.f32 %v269, %v280
    %v282 = vmul.f32 %v270, %v280
    %v283 = vld [vmem:[%s5] sm:$0x3]
    %v285 = vlaneseq
    %v286 = vshrl.u32 %v285, 7
    %v287 = vsub.s32 0, %v286
    %v288 = vrot.slane %v283, %v287
    %v289 = vlaneseq
    %v290 = vshrl.u32 %v289, 7
    %v291 = vsub.s32 1, %v290
    %v292 = vrot.slane %v283, %v291
    %v295 = vmul.f32 %v281, %v288
    %v296 = vmul.f32 %v282, %v292
    %v297 = vld [vmem:[%s6] sm:$0x3]
    %v299 = vlaneseq
    %v300 = vshrl.u32 %v299, 7
    %v301 = vsub.s32 0, %v300
    %v302 = vrot.slane %v297, %v301
    %v303 = vlaneseq
    %v304 = vshrl.u32 %v303, 7
    %v305 = vsub.s32 1, %v304
    %v306 = vrot.slane %v297, %v305
    %v309 = vadd.f32 %v295, %v302
    %v310 = vadd.f32 %v296, %v306
    %v311 = vtanh.pop %v309
    %v312 = vtanh.pop %v310
    %v315 = vcombine.low %v311, %v312
    %v317 = vunpack.c.l.s4 1983009808
    %v318 = vunpack.c.0.s8 %v317
    %v319 = vlaneseq
    %v320 = vshrl.u32 %v319, 7
    %v321 = vsub.s32 %v318, %v320
    %v322 = vrot.slane %v315, %v321
    %324 = vst [vmem:[#allocation2] sm:$0xf] %v322
    // Predicated region
    $region30: #{resnet_encoder_forward.21} parent=1 // pred_check
      _
    $region31: #{resnet_encoder_forward.21} parent=1 // pred_check_branch
      %326 = sbr.rel (0) target = $region33
    $region32: #{resnet_encoder_forward.21} parent=1 // pred_region
      %s328 = ssub.s32 64, 64
      %329 = vsyncadd [#allocation3], %s328
      %s331 = sshll.u32 [#allocation2], 4
      %s332 = int_to_ptr.vmem [resolvable:$true] %s331
      %334 = dma.vmem_to_hbm [thread:$0]  %s332, 64, %s7, [#allocation3]
    $region33: #{resnet_encoder_forward.21} parent=1 // pred_fallthru
      _
    // Predicated region
    $region34: #{resnet_encoder_forward.21} parent=1 // pred_check
      _
    $region35: #{resnet_encoder_forward.21} parent=1 // pred_check_branch
      %336 = sbr.rel (0) target = $region37
    $region36: #{resnet_encoder_forward.21} parent=1 // pred_region
      %337 = dma.done [#allocation3], 64
    $region37: #{resnet_encoder_forward.21} parent=1 // pred_fallthru
      _
    %338 = vsyncpa [#allocation3], 1

// kernel: resnet_encoder_forward.18
$region0: #{resnet_encoder_forward.18}
  #allocation0 [shape = 'u32[]', space=smem, size = 0x4, offset = 0x4, fixed_abs, tag = 'smem constant byte address 0x4 - core index']
  #allocation1 [shape = 'u32[144,128]{1,0:T(1,128)}', space=vmem, size = 0x12000, scoped, tag = 'internal scratch']
  %s0 = inlined_call_operand.vmem [shape: bf16[32,1152], index: 0, kind: input, shape index: {}]
  %s1 = inlined_call_operand.vmem [shape: bf16[1152,128], index: 1, kind: input, shape index: {}]
  %s2 = inlined_call_operand.vmem [shape: f32[1,128], index: 2, kind: input, shape index: {}]
  %s3 = inlined_call_operand.vmem [shape: f32[32,128], index: 3, kind: input, shape index: {}]
  %s4 = inlined_call_operand.vmem [shape: f32[32,128], index: 4, kind: output, shape index: {}]
  %s5 = sld [smem:[#allocation0]]
  $region26: #{resnet_encoder_forward.18} parent=0
    _
  %s7 = ssub.s32 1, %s5
  %s8 = scalar_select 0, %s7, %s5
  // Predicated region
  $region2: #{resnet_encoder_forward.18} parent=0 // pred_check
    _
  $region3: #{resnet_encoder_forward.18} parent=0 // pred_check_branch
    %10 = sbr.rel (0) target = $region5
  $region4: #{resnet_encoder_forward.18} parent=0 // pred_region
    _
  $region5: #{resnet_encoder_forward.18} parent=0 // pred_fallthru
    _
  // Predicated region
  $region6: #{resnet_encoder_forward.18} parent=0 // pred_check
    _
  $region7: #{resnet_encoder_forward.18} parent=0 // pred_check_branch
    %12 = sbr.rel (0) target = $region9
  $region8: #{resnet_encoder_forward.18} parent=0 // pred_region
    _
  $region9: #{resnet_encoder_forward.18} parent=0 // pred_fallthru
    _
  // Predicated region
  $region10: #{resnet_encoder_forward.18} parent=0 // pred_check
    _
  $region11: #{resnet_encoder_forward.18} parent=0 // pred_check_branch
    %14 = sbr.rel (0) target = $region13
  $region12: #{resnet_encoder_forward.18} parent=0 // pred_region
    _
  $region13: #{resnet_encoder_forward.18} parent=0 // pred_fallthru
    _
  // Predicated region
  $region14: #{resnet_encoder_forward.18} parent=0 // pred_check
    _
  $region15: #{resnet_encoder_forward.18} parent=0 // pred_check_branch
    %16 = sbr.rel (0) target = $region17
  $region16: #{resnet_encoder_forward.18} parent=0 // pred_region
    _
  $region17: #{resnet_encoder_forward.18} parent=0 // pred_fallthru
    _
  %v18 = vld [vmem:[%s0] sm:$0xff]
  %v19 = vld [vmem:[%s0 + $0x8] sm:$0xff]
  %v20 = vld [vmem:[%s0 + $0x10] sm:$0xff]
  %v21 = vld [vmem:[%s0 + $0x18] sm:$0xff]
  %v22 = vld [vmem:[%s0 + $0x20] sm:$0xf]
  %v23 = vld [vmem:[%s0 + $0x24] sm:$0xff]
  %v24 = vld [vmem:[%s0 + $0x2c] sm:$0xff]
  %v25 = vld [vmem:[%s0 + $0x34] sm:$0xff]
  %v26 = vld [vmem:[%s0 + $0x3c] sm:$0xff]
  %v27 = vld [vmem:[%s0 + $0x44] sm:$0xf]
  %v28 = vld [vmem:[%s0 + $0x48] sm:$0xff]
  %v29 = vld [vmem:[%s0 + $0x50] sm:$0xff]
  %v30 = vld [vmem:[%s0 + $0x58] sm:$0xff]
  %v31 = vld [vmem:[%s0 + $0x60] sm:$0xff]
  %v32 = vld [vmem:[%s0 + $0x68] sm:$0xf]
  %v33 = vld [vmem:[%s0 + $0x6c] sm:$0xff]
  %v34 = vld [vmem:[%s0 + $0x74] sm:$0xff]
  %v35 = vld [vmem:[%s0 + $0x7c] sm:$0xff]
  %v36 = vld [vmem:[%s0 + $0x84] sm:$0xff]
  %v37 = vld [vmem:[%s0 + $0x8c] sm:$0xf]
  %v38 = vld [vmem:[%s1] sm:$0xf]
  %v39 = vld [vmem:[%s1 + $0x4] sm:$0xf]
  %v40 = vld [vmem:[%s1 + $0x8] sm:$0xf]
  %v41 = vld [vmem:[%s1 + $0xc] sm:$0xf]
  %v42 = vld [vmem:[%s1 + $0x10] sm:$0xf]
  %v43 = vld [vmem:[%s1 + $0x14] sm:$0xf]
  %v44 = vld [vmem:[%s1 + $0x18] sm:$0xf]
  %v45 = vld [vmem:[%s1 + $0x1c] sm:$0xf]
  %v46 = vld [vmem:[%s1 + $0x20] sm:$0xf]
  %v47 = vld [vmem:[%s1 + $0x24] sm:$0xf]
  %v48 = vld [vmem:[%s1 + $0x28] sm:$0xf]
  %v49 = vld [vmem:[%s1 + $0x2c] sm:$0xf]
  %v50 = vld [vmem:[%s1 + $0x30] sm:$0xf]
  %v51 = vld [vmem:[%s1 + $0x34] sm:$0xf]
  %v52 = vld [vmem:[%s1 + $0x38] sm:$0xf]
  %v53 = vld [vmem:[%s1 + $0x3c] sm:$0xf]
  %v54 = vld [vmem:[%s1 + $0x40] sm:$0xf]
  %v55 = vld [vmem:[%s1 + $0x44] sm:$0xf]
  %v56 = vld [vmem:[%s1 + $0x48] sm:$0xf]
  %v57 = vld [vmem:[%s1 + $0x4c] sm:$0xf]
  %v58 = vld [vmem:[%s1 + $0x50] sm:$0xf]
  %v59 = vld [vmem:[%s1 + $0x54] sm:$0xf]
  %v60 = vld [vmem:[%s1 + $0x58] sm:$0xf]
  %v61 = vld [vmem:[%s1 + $0x5c] sm:$0xf]
  %v62 = vld [vmem:[%s1 + $0x60] sm:$0xf]
  %v63 = vld [vmem:[%s1 + $0x64] sm:$0xf]
  %v64 = vld [vmem:[%s1 + $0x68] sm:$0xf]
  %v65 = vld [vmem:[%s1 + $0x6c] sm:$0xf]
  %v66 = vld [vmem:[%s1 + $0x70] sm:$0xf]
  %v67 = vld [vmem:[%s1 + $0x74] sm:$0xf]
  %v68 = vld [vmem:[%s1 + $0x78] sm:$0xf]
  %v69 = vld [vmem:[%s1 + $0x7c] sm:$0xf]
  %v70 = vld [vmem:[%s1 + $0x80] sm:$0xf]
  %v71 = vld [vmem:[%s1 + $0x84] sm:$0xf]
  %v72 = vld [vmem:[%s1 + $0x88] sm:$0xf]
  %v73 = vld [vmem:[%s1 + $0x8c] sm:$0xf]
  %v74 = vld [vmem:[%s1 + $0x90] sm:$0xf]
  %v75 = vld [vmem:[%s1 + $0x94] sm:$0xf]
  %v76 = vld [vmem:[%s1 + $0x98] sm:$0xf]
  %v77 = vld [vmem:[%s1 + $0x9c] sm:$0xf]
  %v78 = vld [vmem:[%s1 + $0xa0] sm:$0xf]
  %v79 = vld [vmem:[%s1 + $0xa4] sm:$0xf]
  %v80 = vld [vmem:[%s1 + $0xa8] sm:$0xf]
  %v81 = vld [vmem:[%s1 + $0xac] sm:$0xf]
  %v82 = vld [vmem:[%s1 + $0xb0] sm:$0xf]
  %v83 = vld [vmem:[%s1 + $0xb4] sm:$0xf]
  %v84 = vld [vmem:[%s1 + $0xb8] sm:$0xf]
  %v85 = vld [vmem:[%s1 + $0xbc] sm:$0xf]
  %v86 = vld [vmem:[%s1 + $0xc0] sm:$0xf]
  %v87 = vld [vmem:[%s1 + $0xc4] sm:$0xf]
  %v88 = vld [vmem:[%s1 + $0xc8] sm:$0xf]
  %v89 = vld [vmem:[%s1 + $0xcc] sm:$0xf]
  %v90 = vld [vmem:[%s1 + $0xd0] sm:$0xf]
  %v91 = vld [vmem:[%s1 + $0xd4] sm:$0xf]
  %v92 = vld [vmem:[%s1 + $0xd8] sm:$0xf]
  %v93 = vld [vmem:[%s1 + $0xdc] sm:$0xf]
  %v94 = vld [vmem:[%s1 + $0xe0] sm:$0xf]
  %v95 = vld [vmem:[%s1 + $0xe4] sm:$0xf]
  %v96 = vld [vmem:[%s1 + $0xe8] sm:$0xf]
  %v97 = vld [vmem:[%s1 + $0xec] sm:$0xf]
  %v98 = vld [vmem:[%s1 + $0xf0] sm:$0xf]
  %v99 = vld [vmem:[%s1 + $0xf4] sm:$0xf]
  %v100 = vld [vmem:[%s1 + $0xf8] sm:$0xf]
  %v101 = vld [vmem:[%s1 + $0xfc] sm:$0xf]
  %v102 = vld [vmem:[%s1 + $0x100] sm:$0xf]
  %v103 = vld [vmem:[%s1 + $0x104] sm:$0xf]
  %v104 = vld [vmem:[%s1 + $0x108] sm:$0xf]
  %v105 = vld [vmem:[%s1 + $0x10c] sm:$0xf]
  %v106 = vld [vmem:[%s1 + $0x110] sm:$0xf]
  %v107 = vld [vmem:[%s1 + $0x114] sm:$0xf]
  %v108 = vld [vmem:[%s1 + $0x118] sm:$0xf]
  %v109 = vld [vmem:[%s1 + $0x11c] sm:$0xf]
  %v110 = vld [vmem:[%s1 + $0x120] sm:$0xf]
  %v111 = vld [vmem:[%s1 + $0x124] sm:$0xf]
  %v112 = vld [vmem:[%s1 + $0x128] sm:$0xf]
  %v113 = vld [vmem:[%s1 + $0x12c] sm:$0xf]
  %v114 = vld [vmem:[%s1 + $0x130] sm:$0xf]
  %v115 = vld [vmem:[%s1 + $0x134] sm:$0xf]
  %v116 = vld [vmem:[%s1 + $0x138] sm:$0xf]
  %v117 = vld [vmem:[%s1 + $0x13c] sm:$0xf]
  %v118 = vld [vmem:[%s1 + $0x140] sm:$0xf]
  %v119 = vld [vmem:[%s1 + $0x144] sm:$0xf]
  %v120 = vld [vmem:[%s1 + $0x148] sm:$0xf]
  %v121 = vld [vmem:[%s1 + $0x14c] sm:$0xf]
  %v122 = vld [vmem:[%s1 + $0x150] sm:$0xf]
  %v123 = vld [vmem:[%s1 + $0x154] sm:$0xf]
  %v124 = vld [vmem:[%s1 + $0x158] sm:$0xf]
  %v125 = vld [vmem:[%s1 + $0x15c] sm:$0xf]
  %v126 = vld [vmem:[%s1 + $0x160] sm:$0xf]
  %v127 = vld [vmem:[%s1 + $0x164] sm:$0xf]
  %v128 = vld [vmem:[%s1 + $0x168] sm:$0xf]
  %v129 = vld [vmem:[%s1 + $0x16c] sm:$0xf]
  %v130 = vld [vmem:[%s1 + $0x170] sm:$0xf]
  %v131 = vld [vmem:[%s1 + $0x174] sm:$0xf]
  %v132 = vld [vmem:[%s1 + $0x178] sm:$0xf]
  %v133 = vld [vmem:[%s1 + $0x17c] sm:$0xf]
  %v134 = vld [vmem:[%s1 + $0x180] sm:$0xf]
  %v135 = vld [vmem:[%s1 + $0x184] sm:$0xf]
  %v136 = vld [vmem:[%s1 + $0x188] sm:$0xf]
  %v137 = vld [vmem:[%s1 + $0x18c] sm:$0xf]
  %v138 = vld [vmem:[%s1 + $0x190] sm:$0xf]
  %v139 = vld [vmem:[%s1 + $0x194] sm:$0xf]
  %v140 = vld [vmem:[%s1 + $0x198] sm:$0xf]
  %v141 = vld [vmem:[%s1 + $0x19c] sm:$0xf]
  %v142 = vld [vmem:[%s1 + $0x1a0] sm:$0xf]
  %v143 = vld [vmem:[%s1 + $0x1a4] sm:$0xf]
  %v144 = vld [vmem:[%s1 + $0x1a8] sm:$0xf]
  %v145 = vld [vmem:[%s1 + $0x1ac] sm:$0xf]
  %v146 = vld [vmem:[%s1 + $0x1b0] sm:$0xf]
  %v147 = vld [vmem:[%s1 + $0x1b4] sm:$0xf]
  %v148 = vld [vmem:[%s1 + $0x1b8] sm:$0xf]
  %v149 = vld [vmem:[%s1 + $0x1bc] sm:$0xf]
  %v150 = vld [vmem:[%s1 + $0x1c0] sm:$0xf]
  %v151 = vld [vmem:[%s1 + $0x1c4] sm:$0xf]
  %v152 = vld [vmem:[%s1 + $0x1c8] sm:$0xf]
  %v153 = vld [vmem:[%s1 + $0x1cc] sm:$0xf]
  %v154 = vld [vmem:[%s1 + $0x1d0] sm:$0xf]
  %v155 = vld [vmem:[%s1 + $0x1d4] sm:$0xf]
  %v156 = vld [vmem:[%s1 + $0x1d8] sm:$0xf]
  %v157 = vld [vmem:[%s1 + $0x1dc] sm:$0xf]
  %v158 = vld [vmem:[%s1 + $0x1e0] sm:$0xf]
  %v159 = vld [vmem:[%s1 + $0x1e4] sm:$0xf]
  %v160 = vld [vmem:[%s1 + $0x1e8] sm:$0xf]
  %v161 = vld [vmem:[%s1 + $0x1ec] sm:$0xf]
  %v162 = vld [vmem:[%s1 + $0x1f0] sm:$0xf]
  %v163 = vld [vmem:[%s1 + $0x1f4] sm:$0xf]
  %v164 = vld [vmem:[%s1 + $0x1f8] sm:$0xf]
  %v165 = vld [vmem:[%s1 + $0x1fc] sm:$0xf]
  %v166 = vld [vmem:[%s1 + $0x200] sm:$0xf]
  %v167 = vld [vmem:[%s1 + $0x204] sm:$0xf]
  %v168 = vld [vmem:[%s1 + $0x208] sm:$0xf]
  %v169 = vld [vmem:[%s1 + $0x20c] sm:$0xf]
  %v170 = vld [vmem:[%s1 + $0x210] sm:$0xf]
  %v171 = vld [vmem:[%s1 + $0x214] sm:$0xf]
  %v172 = vld [vmem:[%s1 + $0x218] sm:$0xf]
  %v173 = vld [vmem:[%s1 + $0x21c] sm:$0xf]
  %v174 = vld [vmem:[%s1 + $0x220] sm:$0xf]
  %v175 = vld [vmem:[%s1 + $0x224] sm:$0xf]
  %v176 = vld [vmem:[%s1 + $0x228] sm:$0xf]
  %v177 = vld [vmem:[%s1 + $0x22c] sm:$0xf]
  %v178 = vld [vmem:[%s1 + $0x230] sm:$0xf]
  %v179 = vld [vmem:[%s1 + $0x234] sm:$0xf]
  %v180 = vld [vmem:[%s1 + $0x238] sm:$0xf]
  %v181 = vld [vmem:[%s1 + $0x23c] sm:$0xf]
  %v182 = vld [vmem:[%s2] sm:$0x1]
  %v184 = vlaneseq
  %v185 = vshrl.u32 %v184, 7
  %v186 = vsub.s32 0, %v185
  %v187 = vrot.slane %v182, %v186
  %v209 = vunpack.c.l.b16 %v18
  %v210 = vunpack.c.h.b16 %v18
  %v211 = vunpack.c.l.b16 %v19
  %v212 = vunpack.c.h.b16 %v19
  %v213 = vunpack.c.l.b16 %v20
  %v214 = vunpack.c.h.b16 %v20
  %v215 = vunpack.c.l.b16 %v21
  %v216 = vunpack.c.h.b16 %v21
  %v217 = vunpack.c.l.b16 %v22
  %v218 = vunpack.c.l.b16 %v23
  %v219 = vunpack.c.h.b16 %v23
  %v220 = vunpack.c.l.b16 %v24
  %v221 = vunpack.c.h.b16 %v24
  %v222 = vunpack.c.l.b16 %v25
  %v223 = vunpack.c.h.b16 %v25
  %v224 = vunpack.c.l.b16 %v26
  %v225 = vunpack.c.h.b16 %v26
  %v226 = vunpack.c.l.b16 %v27
  %v227 = vunpack.c.l.b16 %v28
  %v228 = vunpack.c.h.b16 %v28
  %v229 = vunpack.c.l.b16 %v29
  %v230 = vunpack.c.h.b16 %v29
  %v231 = vunpack.c.l.b16 %v30
  %v232 = vunpack.c.h.b16 %v30
  %v233 = vunpack.c.l.b16 %v31
  %v234 = vunpack.c.h.b16 %v31
  %v235 = vunpack.c.l.b16 %v32
  %v236 = vunpack.c.l.b16 %v33
  %v237 = vunpack.c.h.b16 %v33
  %v238 = vunpack.c.l.b16 %v34
  %v239 = vunpack.c.h.b16 %v34
  %v240 = vunpack.c.l.b16 %v35
  %v241 = vunpack.c.h.b16 %v35
  %v242 = vunpack.c.l.b16 %v36
  %v243 = vunpack.c.h.b16 %v36
  %v244 = vunpack.c.l.b16 %v37
  %v245 = vpack.c.b16 %v218, %v209
  %v246 = vpack.c.b16 %v219, %v210
  %v247 = vpack.c.b16 %v220, %v211
  %v248 = vpack.c.b16 %v221, %v212
  %v249 = vpack.c.b16 %v222, %v213
  %v250 = vpack.c.b16 %v223, %v214
  %v251 = vpack.c.b16 %v224, %v215
  %v252 = vpack.c.b16 %v225, %v216
  %v253 = vpack.c.b16 %v226, %v217
  %v254 = vpack.c.b16 %v236, %v227
  %v255 = vpack.c.b16 %v237, %v228
  %v256 = vpack.c.b16 %v238, %v229
  %v257 = vpack.c.b16 %v239, %v230
  %v258 = vpack.c.b16 %v240, %v231
  %v259 = vpack.c.b16 %v241, %v232
  %v260 = vpack.c.b16 %v242, %v233
  %v261 = vpack.c.b16 %v243, %v234
  %v262 = vpack.c.b16 %v244, %v235
  %v425 = vunpack.c.l.b16 %v38
  %v426 = vunpack.c.l.b16 %v39
  %v427 = vunpack.c.l.b16 %v40
  %v428 = vunpack.c.l.b16 %v41
  %v429 = vunpack.c.l.b16 %v42
  %v430 = vunpack.c.l.b16 %v43
  %v431 = vunpack.c.l.b16 %v44
  %v432 = vunpack.c.l.b16 %v45
  %v433 = vunpack.c.l.b16 %v46
  %v434 = vunpack.c.l.b16 %v47
  %v435 = vunpack.c.l.b16 %v48
  %v436 = vunpack.c.l.b16 %v49
  %v437 = vunpack.c.l.b16 %v50
  %v438 = vunpack.c.l.b16 %v51
  %v439 = vunpack.c.l.b16 %v52
  %v440 = vunpack.c.l.b16 %v53
  %v441 = vunpack.c.l.b16 %v54
  %v442 = vunpack.c.l.b16 %v55
  %v443 = vunpack.c.l.b16 %v56
  %v444 = vunpack.c.l.b16 %v57
  %v445 = vunpack.c.l.b16 %v58
  %v446 = vunpack.c.l.b16 %v59
  %v447 = vunpack.c.l.b16 %v60
  %v448 = vunpack.c.l.b16 %v61
  %v449 = vunpack.c.l.b16 %v62
  %v450 = vunpack.c.l.b16 %v63
  %v451 = vunpack.c.l.b16 %v64
  %v452 = vunpack.c.l.b16 %v65
  %v453 = vunpack.c.l.b16 %v66
  %v454 = vunpack.c.l.b16 %v67
  %v455 = vunpack.c.l.b16 %v68
  %v456 = vunpack.c.l.b16 %v69
  %v457 = vunpack.c.l.b16 %v70
  %v458 = vunpack.c.l.b16 %v71
  %v459 = vunpack.c.l.b16 %v72
  %v460 = vunpack.c.l.b16 %v73
  %v461 = vunpack.c.l.b16 %v74
  %v462 = vunpack.c.l.b16 %v75
  %v463 = vunpack.c.l.b16 %v76
  %v464 = vunpack.c.l.b16 %v77
  %v465 = vunpack.c.l.b16 %v78
  %v466 = vunpack.c.l.b16 %v79
  %v467 = vunpack.c.l.b16 %v80
  %v468 = vunpack.c.l.b16 %v81
  %v469 = vunpack.c.l.b16 %v82
  %v470 = vunpack.c.l.b16 %v83
  %v471 = vunpack.c.l.b16 %v84
  %v472 = vunpack.c.l.b16 %v85
  %v473 = vunpack.c.l.b16 %v86
  %v474 = vunpack.c.l.b16 %v87
  %v475 = vunpack.c.l.b16 %v88
  %v476 = vunpack.c.l.b16 %v89
  %v477 = vunpack.c.l.b16 %v90
  %v478 = vunpack.c.l.b16 %v91
  %v479 = vunpack.c.l.b16 %v92
  %v480 = vunpack.c.l.b16 %v93
  %v481 = vunpack.c.l.b16 %v94
  %v482 = vunpack.c.l.b16 %v95
  %v483 = vunpack.c.l.b16 %v96
  %v484 = vunpack.c.l.b16 %v97
  %v485 = vunpack.c.l.b16 %v98
  %v486 = vunpack.c.l.b16 %v99
  %v487 = vunpack.c.l.b16 %v100
  %v488 = vunpack.c.l.b16 %v101
  %v489 = vunpack.c.l.b16 %v102
  %v490 = vunpack.c.l.b16 %v103
  %v491 = vunpack.c.l.b16 %v104
  %v492 = vunpack.c.l.b16 %v105
  %v493 = vunpack.c.l.b16 %v106
  %v494 = vunpack.c.l.b16 %v107
  %v495 = vunpack.c.l.b16 %v108
  %v496 = vunpack.c.l.b16 %v109
  %v497 = vunpack.c.l.b16 %v110
  %v498 = vunpack.c.l.b16 %v111
  %v499 = vunpack.c.l.b16 %v112
  %v500 = vunpack.c.l.b16 %v113
  %v501 = vunpack.c.l.b16 %v114
  %v502 = vunpack.c.l.b16 %v115
  %v503 = vunpack.c.l.b16 %v116
  %v504 = vunpack.c.l.b16 %v117
  %v505 = vunpack.c.l.b16 %v118
  %v506 = vunpack.c.l.b16 %v119
  %v507 = vunpack.c.l.b16 %v120
  %v508 = vunpack.c.l.b16 %v121
  %v509 = vunpack.c.l.b16 %v122
  %v510 = vunpack.c.l.b16 %v123
  %v511 = vunpack.c.l.b16 %v124
  %v512 = vunpack.c.l.b16 %v125
  %v513 = vunpack.c.l.b16 %v126
  %v514 = vunpack.c.l.b16 %v127
  %v515 = vunpack.c.l.b16 %v128
  %v516 = vunpack.c.l.b16 %v129
  %v517 = vunpack.c.l.b16 %v130
  %v518 = vunpack.c.l.b16 %v131
  %v519 = vunpack.c.l.b16 %v132
  %v520 = vunpack.c.l.b16 %v133
  %v521 = vunpack.c.l.b16 %v134
  %v522 = vunpack.c.l.b16 %v135
  %v523 = vunpack.c.l.b16 %v136
  %v524 = vunpack.c.l.b16 %v137
  %v525 = vunpack.c.l.b16 %v138
  %v526 = vunpack.c.l.b16 %v139
  %v527 = vunpack.c.l.b16 %v140
  %v528 = vunpack.c.l.b16 %v141
  %v529 = vunpack.c.l.b16 %v142
  %v530 = vunpack.c.l.b16 %v143
  %v531 = vunpack.c.l.b16 %v144
  %v532 = vunpack.c.l.b16 %v145
  %v533 = vunpack.c.l.b16 %v146
  %v534 = vunpack.c.l.b16 %v147
  %v535 = vunpack.c.l.b16 %v148
  %v536 = vunpack.c.l.b16 %v149
  %v537 = vunpack.c.l.b16 %v150
  %v538 = vunpack.c.l.b16 %v151
  %v539 = vunpack.c.l.b16 %v152
  %v540 = vunpack.c.l.b16 %v153
  %v541 = vunpack.c.l.b16 %v154
  %v542 = vunpack.c.l.b16 %v155
  %v543 = vunpack.c.l.b16 %v156
  %v544 = vunpack.c.l.b16 %v157
  %v545 = vunpack.c.l.b16 %v158
  %v546 = vunpack.c.l.b16 %v159
  %v547 = vunpack.c.l.b16 %v160
  %v548 = vunpack.c.l.b16 %v161
  %v549 = vunpack.c.l.b16 %v162
  %v550 = vunpack.c.l.b16 %v163
  %v551 = vunpack.c.l.b16 %v164
  %v552 = vunpack.c.l.b16 %v165
  %v553 = vunpack.c.l.b16 %v166
  %v554 = vunpack.c.l.b16 %v167
  %v555 = vunpack.c.l.b16 %v168
  %v556 = vunpack.c.l.b16 %v169
  %v557 = vunpack.c.l.b16 %v170
  %v558 = vunpack.c.l.b16 %v171
  %v559 = vunpack.c.l.b16 %v172
  %v560 = vunpack.c.l.b16 %v173
  %v561 = vunpack.c.l.b16 %v174
  %v562 = vunpack.c.l.b16 %v175
  %v563 = vunpack.c.l.b16 %v176
  %v564 = vunpack.c.l.b16 %v177
  %v565 = vunpack.c.l.b16 %v178
  %v566 = vunpack.c.l.b16 %v179
  %v567 = vunpack.c.l.b16 %v180
  %v568 = vunpack.c.l.b16 %v181
  %v569 = vpack.c.b16 %v426, %v425
  %v570 = vpack.c.b16 %v428, %v427
  %v571 = vpack.c.b16 %v430, %v429
  %v572 = vpack.c.b16 %v432, %v431
  %v573 = vpack.c.b16 %v434, %v433
  %v574 = vpack.c.b16 %v436, %v435
  %v575 = vpack.c.b16 %v438, %v437
  %v576 = vpack.c.b16 %v440, %v439
  %v577 = vpack.c.b16 %v442, %v441
  %v578 = vpack.c.b16 %v444, %v443
  %v579 = vpack.c.b16 %v446, %v445
  %v580 = vpack.c.b16 %v448, %v447
  %v581 = vpack.c.b16 %v450, %v449
  %v582 = vpack.c.b16 %v452, %v451
  %v583 = vpack.c.b16 %v454, %v453
  %v584 = vpack.c.b16 %v456, %v455
  %v585 = vpack.c.b16 %v458, %v457
  %v586 = vpack.c.b16 %v460, %v459
  %v587 = vpack.c.b16 %v462, %v461
  %v588 = vpack.c.b16 %v464, %v463
  %v589 = vpack.c.b16 %v466, %v465
  %v590 = vpack.c.b16 %v468, %v467
  %v591 = vpack.c.b16 %v470, %v469
  %v592 = vpack.c.b16 %v472, %v471
  %v593 = vpack.c.b16 %v474, %v473
  %v594 = vpack.c.b16 %v476, %v475
  %v595 = vpack.c.b16 %v478, %v477
  %v596 = vpack.c.b16 %v480, %v479
  %v597 = vpack.c.b16 %v482, %v481
  %v598 = vpack.c.b16 %v484, %v483
  %v599 = vpack.c.b16 %v486, %v485
  %v600 = vpack.c.b16 %v488, %v487
  %v601 = vpack.c.b16 %v490, %v489
  %v602 = vpack.c.b16 %v492, %v491
  %v603 = vpack.c.b16 %v494, %v493
  %v604 = vpack.c.b16 %v496, %v495
  %v605 = vpack.c.b16 %v498, %v497
  %v606 = vpack.c.b16 %v500, %v499
  %v607 = vpack.c.b16 %v502, %v501
  %v608 = vpack.c.b16 %v504, %v503
  %v609 = vpack.c.b16 %v506, %v505
  %v610 = vpack.c.b16 %v508, %v507
  %v611 = vpack.c.b16 %v510, %v509
  %v612 = vpack.c.b16 %v512, %v511
  %v613 = vpack.c.b16 %v514, %v513
  %v614 = vpack.c.b16 %v516, %v515
  %v615 = vpack.c.b16 %v518, %v517
  %v616 = vpack.c.b16 %v520, %v519
  %v617 = vpack.c.b16 %v522, %v521
  %v618 = vpack.c.b16 %v524, %v523
  %v619 = vpack.c.b16 %v526, %v525
  %v620 = vpack.c.b16 %v528, %v527
  %v621 = vpack.c.b16 %v530, %v529
  %v622 = vpack.c.b16 %v532, %v531
  %v623 = vpack.c.b16 %v534, %v533
  %v624 = vpack.c.b16 %v536, %v535
  %v625 = vpack.c.b16 %v538, %v537
  %v626 = vpack.c.b16 %v540, %v539
  %v627 = vpack.c.b16 %v542, %v541
  %v628 = vpack.c.b16 %v544, %v543
  %v629 = vpack.c.b16 %v546, %v545
  %v630 = vpack.c.b16 %v548, %v547
  %v631 = vpack.c.b16 %v550, %v549
  %v632 = vpack.c.b16 %v552, %v551
  %v633 = vpack.c.b16 %v554, %v553
  %v634 = vpack.c.b16 %v556, %v555
  %v635 = vpack.c.b16 %v558, %v557
  %v636 = vpack.c.b16 %v560, %v559
  %v637 = vpack.c.b16 %v562, %v561
  %v638 = vpack.c.b16 %v564, %v563
  %v639 = vpack.c.b16 %v566, %v565
  %v640 = vpack.c.b16 %v568, %v567
  %713 = vmatprep.subr.bf16.mxu0 0
  %714 = vmatpush1.bf16.msra.mxu0 %v569
  %715 = vmatprep.subr.bf16.mxu0 0
  %716 = vmatpush1.bf16.msra.mxu0 %v570
  %717 = vmatprep.subr.bf16.mxu0 0
  %718 = vmatpush1.bf16.msra.mxu0 %v571
  %719 = vmatprep.subr.bf16.mxu0 0
  %720 = vmatpush1.bf16.msra.mxu0 %v572
  %721 = vmatprep.subr.bf16.mxu0 0
  %722 = vmatpush1.bf16.msra.mxu0 %v573
  %723 = vmatprep.subr.bf16.mxu0 0
  %724 = vmatpush1.bf16.msra.mxu0 %v574
  %725 = vmatprep.subr.bf16.mxu0 0
  %726 = vmatpush1.bf16.msra.mxu0 %v575
  %727 = vmatprep.subr.bf16.mxu0 0
  %728 = vmatpush1.bf16.msra.mxu0 %v576
  %729 = vmatprep.subr.bf16.mxu0 0
  %730 = vmatpush1.bf16.msra.mxu0 %v577
  %731 = vmatprep.subr.bf16.mxu0 0
  %732 = vmatpush1.bf16.msra.mxu0 %v578
  %733 = vmatprep.subr.bf16.mxu0 0
  %734 = vmatpush1.bf16.msra.mxu0 %v579
  %735 = vmatprep.subr.bf16.mxu0 0
  %736 = vmatpush1.bf16.msra.mxu0 %v580
  %737 = vmatprep.subr.bf16.mxu0 0
  %738 = vmatpush1.bf16.msra.mxu0 %v581
  %739 = vmatprep.subr.bf16.mxu0 0
  %740 = vmatpush1.bf16.msra.mxu0 %v582
  %741 = vmatprep.subr.bf16.mxu0 0
  %742 = vmatpush1.bf16.msra.mxu0 %v583
  %743 = vmatprep.subr.bf16.mxu0 0
  %744 = vmatpush1.bf16.msra.mxu0 %v584
  %745 = vmatprep.mubr.bf16.mxu0 %v246
  %746 = vmatmul.mubr.bf16.gmra.mrb[0].mxu0 %v245
  %v747 = vpop.f32.mrb[0].mxu0
  %v748 = vadd.f32 %v187, %v747
  %v749 = vpop.f32.mrb[0].mxu0
  %v750 = vpop.f32.mrb[0].mxu0
  %v751 = vadd.f32 %v187, %v750
  %v752 = vpop.f32.mrb[0].mxu0
  %753 = vmatprep.mubr.bf16.mxu0 %v255
  %754 = vmatmul.mubr.bf16.gmra.mrb[0].mxu0 %v254
  %v755 = vpop.f32.mrb[0].mxu0
  %v756 = vadd.f32 %v187, %v755
  %v757 = vpop.f32.mrb[0].mxu0
  %v758 = vpop.f32.mrb[0].mxu0
  %v759 = vadd.f32 %v187, %v758
  %v760 = vpop.f32.mrb[0].mxu0
  %761 = vdwg.mxu0
  %762 = vmatprep.subr.bf16.mxu0 0
  %763 = vmatpush1.bf16.msra.mxu0 %v585
  %764 = vmatprep.subr.bf16.mxu0 0
  %765 = vmatpush1.bf16.msra.mxu0 %v586
  %766 = vmatprep.subr.bf16.mxu0 0
  %767 = vmatpush1.bf16.msra.mxu0 %v587
  %768 = vmatprep.subr.bf16.mxu0 0
  %769 = vmatpush1.bf16.msra.mxu0 %v588
  %770 = vmatprep.subr.bf16.mxu0 0
  %771 = vmatpush1.bf16.msra.mxu0 %v589
  %772 = vmatprep.subr.bf16.mxu0 0
  %773 = vmatpush1.bf16.msra.mxu0 %v590
  %774 = vmatprep.subr.bf16.mxu0 0
  %775 = vmatpush1.bf16.msra.mxu0 %v591
  %776 = vmatprep.subr.bf16.mxu0 0
  %777 = vmatpush1.bf16.msra.mxu0 %v592
  %778 = vmatprep.subr.bf16.mxu0 0
  %779 = vmatpush1.bf16.msra.mxu0 %v593
  %780 = vmatprep.subr.bf16.mxu0 0
  %781 = vmatpush1.bf16.msra.mxu0 %v594
  %782 = vmatprep.subr.bf16.mxu0 0
  %783 = vmatpush1.bf16.msra.mxu0 %v595
  %784 = vmatprep.subr.bf16.mxu0 0
  %785 = vmatpush1.bf16.msra.mxu0 %v596
  %786 = vmatprep.subr.bf16.mxu0 0
  %787 = vmatpush1.bf16.msra.mxu0 %v597
  %788 = vmatprep.subr.bf16.mxu0 0
  %789 = vmatpush1.bf16.msra.mxu0 %v598
  %790 = vmatprep.subr.bf16.mxu0 0
  %791 = vmatpush1.bf16.msra.mxu0 %v599
  %792 = vmatprep.subr.bf16.mxu0 0
  %793 = vmatpush1.bf16.msra.mxu0 %v600
  %794 = vmatprep.mubr.bf16.mxu0 %v248
  %795 = vmatmul.mubr.bf16.gmra.mrb[0].mxu0 %v247
  %v796 = vpop.f32.mrb[0].mxu0
  %v797 = vadd.f32 %v748, %v796
  %v798 = vpop.f32.mrb[0].mxu0
  %v799 = vpop.f32.mrb[0].mxu0
  %v800 = vadd.f32 %v751, %v799
  %v801 = vpop.f32.mrb[0].mxu0
  %802 = vmatprep.mubr.bf16.mxu0 %v257
  %803 = vmatmul.mubr.bf16.gmra.mrb[0].mxu0 %v256
  %v804 = vpop.f32.mrb[0].mxu0
  %v805 = vadd.f32 %v756, %v804
  %v806 = vpop.f32.mrb[0].mxu0
  %v807 = vpop.f32.mrb[0].mxu0
  %v808 = vadd.f32 %v759, %v807
  %v809 = vpop.f32.mrb[0].mxu0
  %810 = vdwg.mxu0
  %811 = vmatprep.subr.bf16.mxu0 0
  %812 = vmatpush1.bf16.msra.mxu0 %v601
  %813 = vmatprep.subr.bf16.mxu0 0
  %814 = vmatpush1.bf16.msra.mxu0 %v602
  %815 = vmatprep.subr.bf16.mxu0 0
  %816 = vmatpush1.bf16.msra.mxu0 %v603
  %817 = vmatprep.subr.bf16.mxu0 0
  %818 = vmatpush1.bf16.msra.mxu0 %v604
  %819 = vmatprep.subr.bf16.mxu0 0
  %820 = vmatpush1.bf16.msra.mxu0 %v605
  %821 = vmatprep.subr.bf16.mxu0 0
  %822 = vmatpush1.bf16.msra.mxu0 %v606
  %823 = vmatprep.subr.bf16.mxu0 0
  %824 = vmatpush1.bf16.msra.mxu0 %v607
  %825 = vmatprep.subr.bf16.mxu0 0
  %826 = vmatpush1.bf16.msra.mxu0 %v608
  %827 = vmatprep.subr.bf16.mxu0 0
  %828 = vmatpush1.bf16.msra.mxu0 %v609
  %829 = vmatprep.subr.bf16.mxu0 0
  %830 = vmatpush1.bf16.msra.mxu0 %v610
  %831 = vmatprep.subr.bf16.mxu0 0
  %832 = vmatpush1.bf16.msra.mxu0 %v611
  %833 = vmatprep.subr.bf16.mxu0 0
  %834 = vmatpush1.bf16.msra.mxu0 %v612
  %835 = vmatprep.subr.bf16.mxu0 0
  %836 = vmatpush1.bf16.msra.mxu0 %v613
  %837 = vmatprep.subr.bf16.mxu0 0
  %838 = vmatpush1.bf16.msra.mxu0 %v614
  %839 = vmatprep.subr.bf16.mxu0 0
  %840 = vmatpush1.bf16.msra.mxu0 %v615
  %841 = vmatprep.subr.bf16.mxu0 0
  %842 = vmatpush1.bf16.msra.mxu0 %v616
  %843 = vmatprep.mubr.bf16.mxu0 %v250
  %844 = vmatmul.mubr.bf16.gmra.mrb[0].mxu0 %v249
  %v845 = vpop.f32.mrb[0].mxu0
  %v846 = vadd.f32 %v797, %v845
  %v847 = vpop.f32.mrb[0].mxu0
  %v848 = vpop.f32.mrb[0].mxu0
  %v849 = vadd.f32 %v800, %v848
  %v850 = vpop.f32.mrb[0].mxu0
  %851 = vmatprep.mubr.bf16.mxu0 %v259
  %852 = vmatmul.mubr.bf16.gmra.mrb[0].mxu0 %v258
  %v853 = vpop.f32.mrb[0].mxu0
  %v854 = vadd.f32 %v805, %v853
  %v855 = vpop.f32.mrb[0].mxu0
  %v856 = vpop.f32.mrb[0].mxu0
  %v857 = vadd.f32 %v808, %v856
  %v858 = vpop.f32.mrb[0].mxu0
  %859 = vdwg.mxu0
  %860 = vmatprep.subr.bf16.mxu0 0
  %861 = vmatpush1.bf16.msra.mxu0 %v617
  %862 = vmatprep.subr.bf16.mxu0 0
  %863 = vmatpush1.bf16.msra.mxu0 %v618
  %864 = vmatprep.subr.bf16.mxu0 0
  %865 = vmatpush1.bf16.msra.mxu0 %v619
  %866 = vmatprep.subr.bf16.mxu0 0
  %867 = vmatpush1.bf16.msra.mxu0 %v620
  %868 = vmatprep.subr.bf16.mxu0 0
  %869 = vmatpush1.bf16.msra.mxu0 %v621
  %870 = vmatprep.subr.bf16.mxu0 0
  %871 = vmatpush1.bf16.msra.mxu0 %v622
  %872 = vmatprep.subr.bf16.mxu0 0
  %873 = vmatpush1.bf16.msra.mxu0 %v623
  %874 = vmatprep.subr.bf16.mxu0 0
  %875 = vmatpush1.bf16.msra.mxu0 %v624
  %876 = vmatprep.subr.bf16.mxu0 0
  %877 = vmatpush1.bf16.msra.mxu0 %v625
  %878 = vmatprep.subr.bf16.mxu0 0
  %879 = vmatpush1.bf16.msra.mxu0 %v626
  %880 = vmatprep.subr.bf16.mxu0 0
  %881 = vmatpush1.bf16.msra.mxu0 %v627
  %882 = vmatprep.subr.bf16.mxu0 0
  %883 = vmatpush1.bf16.msra.mxu0 %v628
  %884 = vmatprep.subr.bf16.mxu0 0
  %885 = vmatpush1.bf16.msra.mxu0 %v629
  %886 = vmatprep.subr.bf16.mxu0 0
  %887 = vmatpush1.bf16.msra.mxu0 %v630
  %888 = vmatprep.subr.bf16.mxu0 0
  %889 = vmatpush1.bf16.msra.mxu0 %v631
  %890 = vmatprep.subr.bf16.mxu0 0
  %891 = vmatpush1.bf16.msra.mxu0 %v632
  %892 = vmatprep.mubr.bf16.mxu0 %v252
  %893 = vmatmul.mubr.bf16.gmra.mrb[0].mxu0 %v251
  %v894 = vpop.f32.mrb[0].mxu0
  %v895 = vadd.f32 %v846, %v894
  %v896 = vpop.f32.mrb[0].mxu0
  %v897 = vpop.f32.mrb[0].mxu0
  %v898 = vadd.f32 %v849, %v897
  %v899 = vpop.f32.mrb[0].mxu0
  %900 = vmatprep.mubr.bf16.mxu0 %v261
  %901 = vmatmul.mubr.bf16.gmra.mrb[0].mxu0 %v260
  %v902 = vpop.f32.mrb[0].mxu0
  %v903 = vadd.f32 %v854, %v902
  %v904 = vpop.f32.mrb[0].mxu0
  %v905 = vpop.f32.mrb[0].mxu0
  %v906 = vadd.f32 %v857, %v905
  %v907 = vpop.f32.mrb[0].mxu0
  %908 = vdwg.mxu0
  %909 = vmatprep.subr.bf16.mxu0 0
  %910 = vmatpush1.bf16.msra.mxu0 %v633
  %911 = vmatprep.subr.bf16.mxu0 0
  %912 = vmatpush1.bf16.msra.mxu0 %v634
  %913 = vmatprep.subr.bf16.mxu0 0
  %914 = vmatpush1.bf16.msra.mxu0 %v635
  %915 = vmatprep.subr.bf16.mxu0 0
  %916 = vmatpush1.bf16.msra.mxu0 %v636
  %917 = vmatprep.subr.bf16.mxu0 0
  %918 = vmatpush1.bf16.msra.mxu0 %v637
  %919 = vmatprep.subr.bf16.mxu0 0
  %920 = vmatpush1.bf16.msra.mxu0 %v638
  %921 = vmatprep.subr.bf16.mxu0 0
  %922 = vmatpush1.bf16.msra.mxu0 %v639
  %923 = vmatprep.subr.bf16.mxu0 0
  %924 = vmatpush1.bf16.msra.mxu0 %v640
  %925 = vmatprep.subr.bf16.mxu0 0
  %926 = vmatpush1.bf16.msra.mxu0 0
  %927 = vmatprep.subr.bf16.mxu0 0
  %928 = vmatpush1.bf16.msra.mxu0 0
  %929 = vmatprep.subr.bf16.mxu0 0
  %930 = vmatpush1.bf16.msra.mxu0 0
  %931 = vmatprep.subr.bf16.mxu0 0
  %932 = vmatpush1.bf16.msra.mxu0 0
  %933 = vmatprep.subr.bf16.mxu0 0
  %934 = vmatpush1.bf16.msra.mxu0 0
  %935 = vmatprep.subr.bf16.mxu0 0
  %936 = vmatpush1.bf16.msra.mxu0 0
  %937 = vmatprep.subr.bf16.mxu0 0
  %938 = vmatpush1.bf16.msra.mxu0 0
  %939 = vmatprep.subr.bf16.mxu0 0
  %940 = vmatpush1.bf16.msra.mxu0 0
  %941 = vmatprep.mubr.bf16.mxu0 0
  %942 = vmatmul.mubr.bf16.gmra.mrb[0].mxu0 %v253
  %v943 = vpop.f32.mrb[0].mxu0
  %v944 = vadd.f32 %v895, %v943
  %v945 = vpop.f32.mrb[0].mxu0
  %v946 = vpop.f32.mrb[0].mxu0
  %v947 = vadd.f32 %v898, %v946
  %v948 = vpop.f32.mrb[0].mxu0
  %949 = vmatprep.mubr.bf16.mxu0 0
  %950 = vmatmul.mubr.bf16.gmra.mrb[0].mxu0 %v262
  %v951 = vpop.f32.mrb[0].mxu0
  %v952 = vadd.f32 %v903, %v951
  %v953 = vpop.f32.mrb[0].mxu0
  %v954 = vpop.f32.mrb[0].mxu0
  %v955 = vadd.f32 %v906, %v954
  %v956 = vpop.f32.mrb[0].mxu0
  %957 = vdwg.mxu0
  %v958 = vld [vmem:[%s3] sm:$0xff]
  %v959 = vld [vmem:[%s3 + $0x8] sm:$0xff]
  %v960 = vld [vmem:[%s3 + $0x10] sm:$0xff]
  %v961 = vld [vmem:[%s3 + $0x18] sm:$0xff]
  %v962 = vadd.f32 %v944, %v958
  %v963 = vadd.f32 %v947, %v959
  %v964 = vadd.f32 %v952, %v960
  %v965 = vadd.f32 %v955, %v961
  %v966 = vmax.f32 %v962, 0.0
  %v967 = vmax.f32 %v963, 0.0
  %v968 = vmax.f32 %v964, 0.0
  %v969 = vmax.f32 %v965, 0.0
  %970 = vst [vmem:[%s4] sm:$0xff] %v966
  %971 = vst [vmem:[%s4 + $0x8] sm:$0xff] %v967
  %972 = vst [vmem:[%s4 + $0x10] sm:$0xff] %v968
  %973 = vst [vmem:[%s4 + $0x18] sm:$0xff] %v969
  // Predicated region
  $region18: #{resnet_encoder_forward.18} parent=0 // pred_check
    _
  $region19: #{resnet_encoder_forward.18} parent=0 // pred_check_branch
    %975 = sbr.rel (0) target = $region21
  $region20: #{resnet_encoder_forward.18} parent=0 // pred_region
    _
  $region21: #{resnet_encoder_forward.18} parent=0 // pred_fallthru
    _
  // Predicated region
  $region22: #{resnet_encoder_forward.18} parent=0 // pred_check
    _
  $region23: #{resnet_encoder_forward.18} parent=0 // pred_check_branch
    %977 = sbr.rel (0) target = $region25
  $region24: #{resnet_encoder_forward.18} parent=0 // pred_region
    _
  $region25: #{resnet_encoder_forward.18} parent=0 // pred_fallthru
    _

</llo_original>
